<compile_context>
chip_gen: v6e
topology: v6e:2x2x1
jax: 0.10.0
libtpu: 0.0.40
codegen_flags: <defaults>
</compile_context>

<pallas_src>
import math
import functools

import jax
import jax.numpy as jnp
from jax import lax
from jax.experimental import pallas as pl
from jax.experimental.pallas import tpu as pltpu


def _self_attention_kernel(
    x_ref,      # (TB, S, H)   input slab (f32)
    mask_ref,   # (TB, 1, S)   compact additive mask (f32)
    wqkv_ref,   # (H, 3H)      fused QKV weight (scale folded into the Q block)
    bqkv_ref,   # (1, 3H)      fused QKV bias   (scale folded into the Q block)
    wd_ref, bd_ref,
    gamma_ref, beta_ref,
    out_ref,    # (TB, S, H)
    ctx_ref,    # (TB*S, H) f32 VMEM scratch: per-head context accumulator
    *, num_heads, head_dim, eps, mm_dtype,
):
    TB, S, H = x_ref.shape

    x_f32 = x_ref[...].reshape(TB * S, H).astype(jnp.float32)   # (TB*S, H)
    x_mm = x_f32.astype(mm_dtype)

    # --- fused QKV projection: one wide MXU matmul, f32 accumulation ---
    qkv = jnp.dot(x_mm, wqkv_ref[...],
                  preferred_element_type=jnp.float32) + bqkv_ref[0]   # (TB*S, 3H)

    # --- per-row, per-head attention; accumulate context into VMEM scratch ---
    for b in range(TB):
        r0 = b * S
        # hoisted (1, S) -> (S, S) mask broadcast: once per row, not per head
        mask_b = jnp.broadcast_to(mask_ref[b], (S, S))
        for h in range(num_heads):
            lo = h * head_dim
            hi = lo + head_dim
            q_h = qkv[r0:r0 + S, lo:hi].astype(mm_dtype)             # (S, dh), pre-scaled
            k_h = qkv[r0:r0 + S, H + lo:H + hi].astype(mm_dtype)     # (S, dh)
            v_h = qkv[r0:r0 + S, 2 * H + lo:2 * H + hi].astype(mm_dtype)

            # contract the dh axis of both operands (no explicit transpose)
            scores = lax.dot_general(
                q_h, k_h,
                dimension_numbers=(((1,), (1,)), ((), ())),
                preferred_element_type=jnp.float32,
            )                                                        # (S, S)
            scores = scores + mask_b

            m = jnp.max(scores, axis=-1, keepdims=True)
            p = jnp.exp(scores - m)                                  # unnormalized, <= 1
            denom = jnp.sum(p, axis=-1, keepdims=True)

            # PV matmul on unnormalized p; normalize the (S, dh) result instead
            ctx_h = jnp.dot(p.astype(mm_dtype), v_h,
                            preferred_element_type=jnp.float32)      # (S, dh)
            ctx_ref[r0:r0 + S, lo:hi] = ctx_h * pl.reciprocal(denom, approx=True)

    # --- output dense + residual + LayerNorm (all f32) ---
    ctx = ctx_ref[...]                                               # (TB*S, H) f32
    hidden = jnp.dot(ctx.astype(mm_dtype), wd_ref[...],
                     preferred_element_type=jnp.float32) + bd_ref[0]
    res = hidden + x_f32

    u = jnp.mean(res, axis=-1, keepdims=True)
    d = res - u
    s = jnp.mean(d * d, axis=-1, keepdims=True)
    normed = d * lax.rsqrt(s + eps)
    y = gamma_ref[0] * normed + beta_ref[0]

    out_ref[...] = y.reshape(TB, S, H).astype(out_ref.dtype)


def _resident_spec(block_shape):
    """BlockSpec for weights with a constant index_map: single-buffer them."""
    try:
        return pl.BlockSpec(block_shape, lambda i: (0, 0),
                            pipeline_mode=pl.Buffered(1))
    except (TypeError, AttributeError):   # older jax without pipeline_mode
        return pl.BlockSpec(block_shape, lambda i: (0, 0))


def _pick_rows_per_step(BN, S, H, num_heads):
    """Amortize per-grid-step overhead when slabs are small; keep code size and
    double-buffered I/O VMEM bounded."""
    io_budget = 4 << 20   # bytes for double-buffered x + out slabs
    for tb in (8, 4, 2, 1):
        if BN % tb != 0:
            continue
        if tb * num_heads > 32:
            continue
        if 2 * 2 * tb * S * H * 4 <= io_budget:
            return tb
    return 1


def self_attention_pallas(x, attention_mask, params, *, num_heads,
                          matmul_dtype=jnp.bfloat16, rows_per_step=None):
    """
    x:              (B, N, S, H) float32
    attention_mask: additive mask, broadcastable to (B, N, 1, 1, S)  (BERT-style:
                    constant over heads and query positions)
    params:         dict with wq, bq, wk, bk, wv, bv, wd, bd, gamma, beta;
                    weights stored pre-transposed as (H_in, H_out); biases (H,)
    matmul_dtype:   dtype fed to the MXU (default bf16 on ALL generations —
                    v5e/v6e/v7x MXUs are bf16-native); accumulation / softmax /
                    LayerNorm are always f32.
    """
    B, N, S, H = x.shape
    assert H % num_heads == 0
    head_dim = H // num_heads
    BN = B * N

    # Mask must be constant over heads and query positions (compact-mask path).
    bshape = jnp.broadcast_shapes(jnp.shape(attention_mask), (B, N, 1, 1, S))
    if bshape != (B, N, 1, 1, S):
        raise ValueError(
            "attention_mask must be broadcastable to (B, N, 1, 1, S); "
            f"got shape {jnp.shape(attention_mask)}")

    TB = rows_per_step or _pick_rows_per_step(BN, S, H, num_heads)
    assert BN % TB == 0

    x_flat = x.reshape(BN, S, H)

    # Compact mask: (BN, 1, S) instead of the broadcast (BN, heads, S, S) slab.
    mask_flat = (
        jnp.broadcast_to(attention_mask, (B, N, 1, 1, S))
        .reshape(BN, 1, S)
        .astype(jnp.float32)
    )

    # Fold 1/sqrt(dh) into the query weight & bias; fuse Q/K/V into one matmul.
    scale = 1.0 / math.sqrt(head_dim)
    wqkv = jnp.concatenate(
        [params["wq"] * scale, params["wk"], params["wv"]], axis=1
    ).astype(matmul_dtype)                                   # (H, 3H)
    bqkv = jnp.concatenate(
        [params["bq"] * scale, params["bk"], params["bv"]]
    ).reshape(1, 3 * H).astype(jnp.float32)                  # (1, 3H)

    wd = params["wd"].astype(matmul_dtype)
    bd = params["bd"].reshape(1, H).astype(jnp.float32)
    gamma = params["gamma"].reshape(1, H).astype(jnp.float32)
    beta = params["beta"].reshape(1, H).astype(jnp.float32)

    kernel = functools.partial(
        _self_attention_kernel,
        num_heads=num_heads,
        head_dim=head_dim,
        eps=1e-12,
        mm_dtype=matmul_dtype,
    )

    # Explicit VMEM budget: resident weights + double-buffered I/O + temporaries.
    f32b = 4
    wbytes = jnp.dtype(matmul_dtype).itemsize
    weight_bytes = (H * 3 * H + H * H) * wbytes + (3 * H + 3 * H) * f32b
    io_bytes = 2 * (2 * TB * S * H * f32b) + 2 * TB * S * f32b
    scratch_bytes = TB * S * H * f32b
    tmp_bytes = TB * S * 3 * H * f32b + 3 * S * S * f32b + 2 * TB * S * H * f32b
    est = weight_bytes + io_bytes + scratch_bytes + tmp_bytes
    vmem_limit = min(max(int(1.5 * est) + (8 << 20), 32 << 20), 64 << 20)

    out_flat = pl.pallas_call(
        kernel,
        out_shape=jax.ShapeDtypeStruct((BN, S, H), x.dtype),
        grid_spec=pltpu.PrefetchScalarGridSpec(
            num_scalar_prefetch=0,
            grid=(BN // TB,),
            in_specs=[
                pl.BlockSpec((TB, S, H), lambda i: (i, 0, 0)),   # x slab
                pl.BlockSpec((TB, 1, S), lambda i: (i, 0, 0)),   # compact mask
                _resident_spec((H, 3 * H)),                      # fused QKV weight
                _resident_spec((1, 3 * H)),                      # fused QKV bias
                _resident_spec((H, H)),                          # dense weight
                _resident_spec((1, H)),                          # dense bias
                _resident_spec((1, H)),                          # LN gamma
                _resident_spec((1, H)),                          # LN beta
            ],
            out_specs=pl.BlockSpec((TB, S, H), lambda i: (i, 0, 0)),
            scratch_shapes=[pltpu.VMEM((TB * S, H), jnp.float32)],   # ctx accumulator
        ),
        compiler_params=pltpu.CompilerParams(
            dimension_semantics=("parallel",),
            vmem_limit_bytes=vmem_limit,
        ),
    )(
        x_flat, mask_flat,
        wqkv, bqkv,
        wd, bd,
        gamma, beta,
    )
    return out_flat.reshape(B, N, S, H)


def _reference(x, attention_mask, params, *, num_heads):
    """Pure-JAX f32 reference mirroring the PyTorch forward (eval mode)."""
    B, N, S, H = x.shape
    dh = H // num_heads

    def lin(a, w, b):
        return jnp.einsum("bnsh,hd->bnsd", a, w) + b

    q = lin(x, params["wq"], params["bq"])
    k = lin(x, params["wk"], params["bk"])
    v = lin(x, params["wv"], params["bv"])

    def split(a):  # (B,N,S,H) -> (B,N,heads,S,dh)
        return a.reshape(B, N, S, num_heads, dh).transpose(0, 1, 3, 2, 4)

    q, k, v = split(q), split(k), split(v)
    scores = jnp.einsum("bnhsd,bnhtd->bnhst", q, k) / math.sqrt(dh)
    scores = scores + attention_mask
    probs = jax.nn.softmax(scores, axis=-1)
    ctx = jnp.einsum("bnhst,bnhtd->bnhsd", probs, v)
    ctx = ctx.transpose(0, 1, 3, 2, 4).reshape(B, N, S, H)
    hidden = jnp.einsum("bnsh,hd->bnsd", ctx, params["wd"]) + params["bd"]
    res = hidden + x
    u = res.mean(-1, keepdims=True)
    s = ((res - u) ** 2).mean(-1, keepdims=True)
    normed = (res - u) / jnp.sqrt(s + 1e-12)
    return params["gamma"] * normed + params["beta"]


if __name__ == "__main__":
    # Small shapes consistent with the module's 5-D view in transpose_for_scores:
    # input_tensor: (B, N, S, hidden)
    B, N, S, H = 2, 2, 8, 32
    num_heads = 4

    key = jax.random.PRNGKey(0)
    k_x, k_m, k_q, k_k, k_v, k_d, kb_q, kb_k, kb_v, kb_d = jax.random.split(key, 10)

    x = jax.random.normal(k_x, (B, N, S, H), dtype=jnp.float32)

    # additive attention mask: 0 where attended, -10000 where masked
    mask_bits = jax.random.bernoulli(k_m, p=0.8, shape=(B, N, 1, 1, S))
    attention_mask = jnp.where(mask_bits, 0.0, -10000.0).astype(jnp.float32)

    def init_w(k):
        return jax.random.normal(k, (H, H), dtype=jnp.float32) * 0.05

    def init_b(k):
        return jax.random.normal(k, (H,), dtype=jnp.float32) * 0.05

    params = {
        "wq": init_w(k_q), "bq": init_b(kb_q),
        "wk": init_w(k_k), "bk": init_b(kb_k),
        "wv": init_w(k_v), "bv": init_b(kb_v),
        "wd": init_w(k_d), "bd": init_b(kb_d),
        "gamma": jnp.ones((H,), dtype=jnp.float32),
        "beta": jnp.zeros((H,), dtype=jnp.float32),
    }

    ref = _reference(x, attention_mask, params, num_heads=num_heads)

    # Default path: bf16 MXU inputs (recommended on v5e/v6e/v7x), f32 accumulation.
    out_bf16 = self_attention_pallas(x, attention_mask, params, num_heads=num_heads)
    out_bf16 = jax.block_until_ready(out_bf16)
    assert out_bf16.shape == (B, N, S, H)
    assert jnp.allclose(out_bf16, ref, atol=5e-2, rtol=5e-2), "bf16 path mismatch vs reference"

    # f32 MXU path: tight check (approx reciprocal slightly loosens softmax).
    out_f32 = self_attention_pallas(
        x, attention_mask, params, num_heads=num_heads, matmul_dtype=jnp.float32
    )
    out_f32 = jax.block_until_ready(out_f32)
    assert jnp.allclose(out_f32, ref, atol=2e-3, rtol=2e-3), "f32 path mismatch vs reference"

    print("KERNEL_OK")
</pallas_src>

<mosaic_0001>
module attributes {stable_mosaic.version = 11 : i64} {
  func.func @_self_attention_kernel(%arg0: i32, %arg1: memref<4x8x32xf32, #tpu.memory_space<vmem>>, %arg2: memref<4x1x8xf32, #tpu.memory_space<vmem>>, %arg3: memref<32x96xbf16, #tpu.memory_space<vmem>>, %arg4: memref<1x96xf32, #tpu.memory_space<vmem>>, %arg5: memref<32x32xbf16, #tpu.memory_space<vmem>>, %arg6: memref<1x32xf32, #tpu.memory_space<vmem>>, %arg7: memref<1x32xf32, #tpu.memory_space<vmem>>, %arg8: memref<1x32xf32, #tpu.memory_space<vmem>>, %arg9: memref<4x8x32xf32, #tpu.memory_space<vmem>>, %arg10: memref<32x32xf32, #tpu.memory_space<vmem>>) attributes {dimension_semantics = [#tpu.dimension_semantics<parallel>], iteration_bounds = array<i64: 1>, scalar_prefetch = 0 : i64, scratch_operands = 1 : i64, tpu.core_type = #tpu.core_type<tc>, window_params = [{transform_indices = @transform_0, window_bounds = array<i64: 4, 8, 32>}, {transform_indices = @transform_1, window_bounds = array<i64: 4, 1, 8>}, {pipeline_mode = #tpu.pipeline_mode<synchronous>, transform_indices = @transform_2, window_bounds = array<i64: 32, 96>}, {pipeline_mode = #tpu.pipeline_mode<synchronous>, transform_indices = @transform_3, window_bounds = array<i64: 1, 96>}, {pipeline_mode = #tpu.pipeline_mode<synchronous>, transform_indices = @transform_4, window_bounds = array<i64: 32, 32>}, {pipeline_mode = #tpu.pipeline_mode<synchronous>, transform_indices = @transform_5, window_bounds = array<i64: 1, 32>}, {pipeline_mode = #tpu.pipeline_mode<synchronous>, transform_indices = @transform_6, window_bounds = array<i64: 1, 32>}, {pipeline_mode = #tpu.pipeline_mode<synchronous>, transform_indices = @transform_7, window_bounds = array<i64: 1, 32>}, {transform_indices = @transform_8, window_bounds = array<i64: 4, 8, 32>}]} {
    %c0 = arith.constant 0 : index
    %c0_0 = arith.constant 0 : index
    %c0_1 = arith.constant 0 : index
    %0 = vector.load %arg1[%c0, %c0_0, %c0_1] : memref<4x8x32xf32, #tpu.memory_space<vmem>>, vector<4x8x32xf32>
    %1 = vector.shape_cast %0 : vector<4x8x32xf32> to vector<32x32xf32>
    %2 = arith.truncf %1 : vector<32x32xf32> to vector<32x32xbf16>
    %c0_2 = arith.constant 0 : index
    %c0_3 = arith.constant 0 : index
    %3 = vector.load %arg3[%c0_2, %c0_3] : memref<32x96xbf16, #tpu.memory_space<vmem>>, vector<32x96xbf16>
    %cst = arith.constant dense<0.000000e+00> : vector<32x96xf32>
    %4 = tpu.matmul %2, %3, %cst {dimension_numbers = #tpu.dot_dimension_numbers<[1], [0], [0], [1], [0, 0, 1, 1], [], []>} : vector<32x32xbf16>, vector<32x96xbf16>, vector<32x96xf32> -> vector<32x96xf32>
    %c0_4 = arith.constant 0 : index
    %c0_5 = arith.constant 0 : index
    %5 = vector.load %arg4[%c0_4, %c0_5] : memref<1x96xf32, #tpu.memory_space<vmem>>, vector<1x96xf32>
    %6 = vector.shape_cast %5 : vector<1x96xf32> to vector<96xf32>
    %7 = vector.shape_cast %6 : vector<96xf32> to vector<1x96xf32>
    %8 = vector.broadcast %7 : vector<1x96xf32> to vector<32x96xf32>
    %9 = arith.addf %4, %8 : vector<32x96xf32>
    %c0_6 = arith.constant 0 : index
    %c0_7 = arith.constant 0 : index
    %c0_8 = arith.constant 0 : index
    %10 = vector.load %arg2[%c0_6, %c0_7, %c0_8] : memref<4x1x8xf32, #tpu.memory_space<vmem>>, vector<1x1x8xf32>
    %11 = vector.shape_cast %10 : vector<1x1x8xf32> to vector<1x8xf32>
    %12 = vector.shape_cast %11 : vector<1x8xf32> to vector<1x8xf32>
    %13 = vector.broadcast %12 : vector<1x8xf32> to vector<8x8xf32>
    %14 = vector.extract_strided_slice %9 {offsets = [0, 0], sizes = [8, 8], strides = [1, 1]} : vector<32x96xf32> to vector<8x8xf32>
    %15 = arith.truncf %14 : vector<8x8xf32> to vector<8x8xbf16>
    %16 = vector.extract_strided_slice %9 {offsets = [0, 32], sizes = [8, 8], strides = [1, 1]} : vector<32x96xf32> to vector<8x8xf32>
    %17 = arith.truncf %16 : vector<8x8xf32> to vector<8x8xbf16>
    %18 = vector.extract_strided_slice %9 {offsets = [0, 64], sizes = [8, 8], strides = [1, 1]} : vector<32x96xf32> to vector<8x8xf32>
    %19 = arith.truncf %18 : vector<8x8xf32> to vector<8x8xbf16>
    %cst_9 = arith.constant dense<0.000000e+00> : vector<8x8xf32>
    %20 = tpu.matmul %15, %17, %cst_9 {dimension_numbers = #tpu.dot_dimension_numbers<[1], [1], [0], [0], [0, 0, 1, 0], [], []>} : vector<8x8xbf16>, vector<8x8xbf16>, vector<8x8xf32> -> vector<8x8xf32>
    %21 = arith.addf %20, %13 : vector<8x8xf32>
    %cst_10 = arith.constant dense<0xFF800000> : vector<8xf32>
    %22 = vector.multi_reduction <maximumf>, %21, %cst_10 [1] : vector<8x8xf32> to vector<8xf32>
    %23 = vector.shape_cast %22 : vector<8xf32> to vector<8x1xf32>
    %24 = vector.broadcast %23 : vector<8x1xf32> to vector<8x8xf32>
    %25 = arith.subf %21, %24 : vector<8x8xf32>
    %26 = math.exp %25 : vector<8x8xf32>
    %cst_11 = arith.constant dense<0.000000e+00> : vector<8xf32>
    %27 = vector.multi_reduction <add>, %26, %cst_11 [1] : vector<8x8xf32> to vector<8xf32>
    %28 = vector.shape_cast %27 : vector<8xf32> to vector<8x1xf32>
    %29 = arith.truncf %26 : vector<8x8xf32> to vector<8x8xbf16>
    %cst_12 = arith.constant dense<0.000000e+00> : vector<8x8xf32>
    %30 = tpu.matmul %29, %19, %cst_12 {dimension_numbers = #tpu.dot_dimension_numbers<[1], [0], [0], [1], [0, 0, 1, 1], [], []>} : vector<8x8xbf16>, vector<8x8xbf16>, vector<8x8xf32> -> vector<8x8xf32>
    %31 = tpu.reciprocal %28 {approx = true} : vector<8x1xf32> -> vector<8x1xf32>
    %32 = vector.broadcast %31 : vector<8x1xf32> to vector<8x8xf32>
    %33 = arith.mulf %30, %32 : vector<8x8xf32>
    %c0_13 = arith.constant 0 : index
    %c0_14 = arith.constant 0 : index
    %34 = vector.load %arg10[%c0_13, %c0_14] : memref<32x32xf32, #tpu.memory_space<vmem>>, vector<8x8xf32>
    tpu.vector_store %arg10[%c0_13, %c0_14], %33 {strides = array<i32>} : memref<32x32xf32, #tpu.memory_space<vmem>>, vector<8x8xf32>,
    %35 = vector.extract_strided_slice %9 {offsets = [0, 8], sizes = [8, 8], strides = [1, 1]} : vector<32x96xf32> to vector<8x8xf32>
    %36 = arith.truncf %35 : vector<8x8xf32> to vector<8x8xbf16>
    %37 = vector.extract_strided_slice %9 {offsets = [0, 40], sizes = [8, 8], strides = [1, 1]} : vector<32x96xf32> to vector<8x8xf32>
    %38 = arith.truncf %37 : vector<8x8xf32> to vector<8x8xbf16>
    %39 = vector.extract_strided_slice %9 {offsets = [0, 72], sizes = [8, 8], strides = [1, 1]} : vector<32x96xf32> to vector<8x8xf32>
    %40 = arith.truncf %39 : vector<8x8xf32> to vector<8x8xbf16>
    %cst_15 = arith.constant dense<0.000000e+00> : vector<8x8xf32>
    %41 = tpu.matmul %36, %38, %cst_15 {dimension_numbers = #tpu.dot_dimension_numbers<[1], [1], [0], [0], [0, 0, 1, 0], [], []>} : vector<8x8xbf16>, vector<8x8xbf16>, vector<8x8xf32> -> vector<8x8xf32>
    %42 = arith.addf %41, %13 : vector<8x8xf32>
    %cst_16 = arith.constant dense<0xFF800000> : vector<8xf32>
    %43 = vector.multi_reduction <maximumf>, %42, %cst_16 [1] : vector<8x8xf32> to vector<8xf32>
    %44 = vector.shape_cast %43 : vector<8xf32> to vector<8x1xf32>
    %45 = vector.broadcast %44 : vector<8x1xf32> to vector<8x8xf32>
    %46 = arith.subf %42, %45 : vector<8x8xf32>
    %47 = math.exp %46 : vector<8x8xf32>
    %cst_17 = arith.constant dense<0.000000e+00> : vector<8xf32>
    %48 = vector.multi_reduction <add>, %47, %cst_17 [1] : vector<8x8xf32> to vector<8xf32>
    %49 = vector.shape_cast %48 : vector<8xf32> to vector<8x1xf32>
    %50 = arith.truncf %47 : vector<8x8xf32> to vector<8x8xbf16>
    %cst_18 = arith.constant dense<0.000000e+00> : vector<8x8xf32>
    %51 = tpu.matmul %50, %40, %cst_18 {dimension_numbers = #tpu.dot_dimension_numbers<[1], [0], [0], [1], [0, 0, 1, 1], [], []>} : vector<8x8xbf16>, vector<8x8xbf16>, vector<8x8xf32> -> vector<8x8xf32>
    %52 = tpu.reciprocal %49 {approx = true} : vector<8x1xf32> -> vector<8x1xf32>
    %53 = vector.broadcast %52 : vector<8x1xf32> to vector<8x8xf32>
    %54 = arith.mulf %51, %53 : vector<8x8xf32>
    %c0_19 = arith.constant 0 : index
    %c8 = arith.constant 8 : index
    %55 = vector.load %arg10[%c0_19, %c8] : memref<32x32xf32, #tpu.memory_space<vmem>>, vector<8x8xf32>
    tpu.vector_store %arg10[%c0_19, %c8], %54 {strides = array<i32>} : memref<32x32xf32, #tpu.memory_space<vmem>>, vector<8x8xf32>,
    %56 = vector.extract_strided_slice %9 {offsets = [0, 16], sizes = [8, 8], strides = [1, 1]} : vector<32x96xf32> to vector<8x8xf32>
    %57 = arith.truncf %56 : vector<8x8xf32> to vector<8x8xbf16>
    %58 = vector.extract_strided_slice %9 {offsets = [0, 48], sizes = [8, 8], strides = [1, 1]} : vector<32x96xf32> to vector<8x8xf32>
    %59 = arith.truncf %58 : vector<8x8xf32> to vector<8x8xbf16>
    %60 = vector.extract_strided_slice %9 {offsets = [0, 80], sizes = [8, 8], strides = [1, 1]} : vector<32x96xf32> to vector<8x8xf32>
    %61 = arith.truncf %60 : vector<8x8xf32> to vector<8x8xbf16>
    %cst_20 = arith.constant dense<0.000000e+00> : vector<8x8xf32>
    %62 = tpu.matmul %57, %59, %cst_20 {dimension_numbers = #tpu.dot_dimension_numbers<[1], [1], [0], [0], [0, 0, 1, 0], [], []>} : vector<8x8xbf16>, vector<8x8xbf16>, vector<8x8xf32> -> vector<8x8xf32>
    %63 = arith.addf %62, %13 : vector<8x8xf32>
    %cst_21 = arith.constant dense<0xFF800000> : vector<8xf32>
    %64 = vector.multi_reduction <maximumf>, %63, %cst_21 [1] : vector<8x8xf32> to vector<8xf32>
    %65 = vector.shape_cast %64 : vector<8xf32> to vector<8x1xf32>
    %66 = vector.broadcast %65 : vector<8x1xf32> to vector<8x8xf32>
    %67 = arith.subf %63, %66 : vector<8x8xf32>
    %68 = math.exp %67 : vector<8x8xf32>
    %cst_22 = arith.constant dense<0.000000e+00> : vector<8xf32>
    %69 = vector.multi_reduction <add>, %68, %cst_22 [1] : vector<8x8xf32> to vector<8xf32>
    %70 = vector.shape_cast %69 : vector<8xf32> to vector<8x1xf32>
    %71 = arith.truncf %68 : vector<8x8xf32> to vector<8x8xbf16>
    %cst_23 = arith.constant dense<0.000000e+00> : vector<8x8xf32>
    %72 = tpu.matmul %71, %61, %cst_23 {dimension_numbers = #tpu.dot_dimension_numbers<[1], [0], [0], [1], [0, 0, 1, 1], [], []>} : vector<8x8xbf16>, vector<8x8xbf16>, vector<8x8xf32> -> vector<8x8xf32>
    %73 = tpu.reciprocal %70 {approx = true} : vector<8x1xf32> -> vector<8x1xf32>
    %74 = vector.broadcast %73 : vector<8x1xf32> to vector<8x8xf32>
    %75 = arith.mulf %72, %74 : vector<8x8xf32>
    %c0_24 = arith.constant 0 : index
    %c16 = arith.constant 16 : index
    %76 = vector.load %arg10[%c0_24, %c16] : memref<32x32xf32, #tpu.memory_space<vmem>>, vector<8x8xf32>
    tpu.vector_store %arg10[%c0_24, %c16], %75 {strides = array<i32>} : memref<32x32xf32, #tpu.memory_space<vmem>>, vector<8x8xf32>,
    %77 = vector.extract_strided_slice %9 {offsets = [0, 24], sizes = [8, 8], strides = [1, 1]} : vector<32x96xf32> to vector<8x8xf32>
    %78 = arith.truncf %77 : vector<8x8xf32> to vector<8x8xbf16>
    %79 = vector.extract_strided_slice %9 {offsets = [0, 56], sizes = [8, 8], strides = [1, 1]} : vector<32x96xf32> to vector<8x8xf32>
    %80 = arith.truncf %79 : vector<8x8xf32> to vector<8x8xbf16>
    %81 = vector.extract_strided_slice %9 {offsets = [0, 88], sizes = [8, 8], strides = [1, 1]} : vector<32x96xf32> to vector<8x8xf32>
    %82 = arith.truncf %81 : vector<8x8xf32> to vector<8x8xbf16>
    %cst_25 = arith.constant dense<0.000000e+00> : vector<8x8xf32>
    %83 = tpu.matmul %78, %80, %cst_25 {dimension_numbers = #tpu.dot_dimension_numbers<[1], [1], [0], [0], [0, 0, 1, 0], [], []>} : vector<8x8xbf16>, vector<8x8xbf16>, vector<8x8xf32> -> vector<8x8xf32>
    %84 = arith.addf %83, %13 : vector<8x8xf32>
    %cst_26 = arith.constant dense<0xFF800000> : vector<8xf32>
    %85 = vector.multi_reduction <maximumf>, %84, %cst_26 [1] : vector<8x8xf32> to vector<8xf32>
    %86 = vector.shape_cast %85 : vector<8xf32> to vector<8x1xf32>
    %87 = vector.broadcast %86 : vector<8x1xf32> to vector<8x8xf32>
    %88 = arith.subf %84, %87 : vector<8x8xf32>
    %89 = math.exp %88 : vector<8x8xf32>
    %cst_27 = arith.constant dense<0.000000e+00> : vector<8xf32>
    %90 = vector.multi_reduction <add>, %89, %cst_27 [1] : vector<8x8xf32> to vector<8xf32>
    %91 = vector.shape_cast %90 : vector<8xf32> to vector<8x1xf32>
    %92 = arith.truncf %89 : vector<8x8xf32> to vector<8x8xbf16>
    %cst_28 = arith.constant dense<0.000000e+00> : vector<8x8xf32>
    %93 = tpu.matmul %92, %82, %cst_28 {dimension_numbers = #tpu.dot_dimension_numbers<[1], [0], [0], [1], [0, 0, 1, 1], [], []>} : vector<8x8xbf16>, vector<8x8xbf16>, vector<8x8xf32> -> vector<8x8xf32>
    %94 = tpu.reciprocal %91 {approx = true} : vector<8x1xf32> -> vector<8x1xf32>
    %95 = vector.broadcast %94 : vector<8x1xf32> to vector<8x8xf32>
    %96 = arith.mulf %93, %95 : vector<8x8xf32>
    %c0_29 = arith.constant 0 : index
    %c24 = arith.constant 24 : index
    %97 = vector.load %arg10[%c0_29, %c24] : memref<32x32xf32, #tpu.memory_space<vmem>>, vector<8x8xf32>
    tpu.vector_store %arg10[%c0_29, %c24], %96 {strides = array<i32>} : memref<32x32xf32, #tpu.memory_space<vmem>>, vector<8x8xf32>,
    %c1 = arith.constant 1 : index
    %c0_30 = arith.constant 0 : index
    %c0_31 = arith.constant 0 : index
    %98 = vector.load %arg2[%c1, %c0_30, %c0_31] : memref<4x1x8xf32, #tpu.memory_space<vmem>>, vector<1x1x8xf32>
    %99 = vector.shape_cast %98 : vector<1x1x8xf32> to vector<1x8xf32>
    %100 = vector.shape_cast %99 : vector<1x8xf32> to vector<1x8xf32>
    %101 = vector.broadcast %100 : vector<1x8xf32> to vector<8x8xf32>
    %102 = vector.extract_strided_slice %9 {offsets = [8, 0], sizes = [8, 8], strides = [1, 1]} : vector<32x96xf32> to vector<8x8xf32>
    %103 = arith.truncf %102 : vector<8x8xf32> to vector<8x8xbf16>
    %104 = vector.extract_strided_slice %9 {offsets = [8, 32], sizes = [8, 8], strides = [1, 1]} : vector<32x96xf32> to vector<8x8xf32>
    %105 = arith.truncf %104 : vector<8x8xf32> to vector<8x8xbf16>
    %106 = vector.extract_strided_slice %9 {offsets = [8, 64], sizes = [8, 8], strides = [1, 1]} : vector<32x96xf32> to vector<8x8xf32>
    %107 = arith.truncf %106 : vector<8x8xf32> to vector<8x8xbf16>
    %cst_32 = arith.constant dense<0.000000e+00> : vector<8x8xf32>
    %108 = tpu.matmul %103, %105, %cst_32 {dimension_numbers = #tpu.dot_dimension_numbers<[1], [1], [0], [0], [0, 0, 1, 0], [], []>} : vector<8x8xbf16>, vector<8x8xbf16>, vector<8x8xf32> -> vector<8x8xf32>
    %109 = arith.addf %108, %101 : vector<8x8xf32>
    %cst_33 = arith.constant dense<0xFF800000> : vector<8xf32>
    %110 = vector.multi_reduction <maximumf>, %109, %cst_33 [1] : vector<8x8xf32> to vector<8xf32>
    %111 = vector.shape_cast %110 : vector<8xf32> to vector<8x1xf32>
    %112 = vector.broadcast %111 : vector<8x1xf32> to vector<8x8xf32>
    %113 = arith.subf %109, %112 : vector<8x8xf32>
    %114 = math.exp %113 : vector<8x8xf32>
    %cst_34 = arith.constant dense<0.000000e+00> : vector<8xf32>
    %115 = vector.multi_reduction <add>, %114, %cst_34 [1] : vector<8x8xf32> to vector<8xf32>
    %116 = vector.shape_cast %115 : vector<8xf32> to vector<8x1xf32>
    %117 = arith.truncf %114 : vector<8x8xf32> to vector<8x8xbf16>
    %cst_35 = arith.constant dense<0.000000e+00> : vector<8x8xf32>
    %118 = tpu.matmul %117, %107, %cst_35 {dimension_numbers = #tpu.dot_dimension_numbers<[1], [0], [0], [1], [0, 0, 1, 1], [], []>} : vector<8x8xbf16>, vector<8x8xbf16>, vector<8x8xf32> -> vector<8x8xf32>
    %119 = tpu.reciprocal %116 {approx = true} : vector<8x1xf32> -> vector<8x1xf32>
    %120 = vector.broadcast %119 : vector<8x1xf32> to vector<8x8xf32>
    %121 = arith.mulf %118, %120 : vector<8x8xf32>
    %c8_36 = arith.constant 8 : index
    %c0_37 = arith.constant 0 : index
    %122 = vector.load %arg10[%c8_36, %c0_37] : memref<32x32xf32, #tpu.memory_space<vmem>>, vector<8x8xf32>
    tpu.vector_store %arg10[%c8_36, %c0_37], %121 {strides = array<i32>} : memref<32x32xf32, #tpu.memory_space<vmem>>, vector<8x8xf32>,
    %123 = vector.extract_strided_slice %9 {offsets = [8, 8], sizes = [8, 8], strides = [1, 1]} : vector<32x96xf32> to vector<8x8xf32>
    %124 = arith.truncf %123 : vector<8x8xf32> to vector<8x8xbf16>
    %125 = vector.extract_strided_slice %9 {offsets = [8, 40], sizes = [8, 8], strides = [1, 1]} : vector<32x96xf32> to vector<8x8xf32>
    %126 = arith.truncf %125 : vector<8x8xf32> to vector<8x8xbf16>
    %127 = vector.extract_strided_slice %9 {offsets = [8, 72], sizes = [8, 8], strides = [1, 1]} : vector<32x96xf32> to vector<8x8xf32>
    %128 = arith.truncf %127 : vector<8x8xf32> to vector<8x8xbf16>
    %cst_38 = arith.constant dense<0.000000e+00> : vector<8x8xf32>
    %129 = tpu.matmul %124, %126, %cst_38 {dimension_numbers = #tpu.dot_dimension_numbers<[1], [1], [0], [0], [0, 0, 1, 0], [], []>} : vector<8x8xbf16>, vector<8x8xbf16>, vector<8x8xf32> -> vector<8x8xf32>
    %130 = arith.addf %129, %101 : vector<8x8xf32>
    %cst_39 = arith.constant dense<0xFF800000> : vector<8xf32>
    %131 = vector.multi_reduction <maximumf>, %130, %cst_39 [1] : vector<8x8xf32> to vector<8xf32>
    %132 = vector.shape_cast %131 : vector<8xf32> to vector<8x1xf32>
    %133 = vector.broadcast %132 : vector<8x1xf32> to vector<8x8xf32>
    %134 = arith.subf %130, %133 : vector<8x8xf32>
    %135 = math.exp %134 : vector<8x8xf32>
    %cst_40 = arith.constant dense<0.000000e+00> : vector<8xf32>
    %136 = vector.multi_reduction <add>, %135, %cst_40 [1] : vector<8x8xf32> to vector<8xf32>
    %137 = vector.shape_cast %136 : vector<8xf32> to vector<8x1xf32>
    %138 = arith.truncf %135 : vector<8x8xf32> to vector<8x8xbf16>
    %cst_41 = arith.constant dense<0.000000e+00> : vector<8x8xf32>
    %139 = tpu.matmul %138, %128, %cst_41 {dimension_numbers = #tpu.dot_dimension_numbers<[1], [0], [0], [1], [0, 0, 1, 1], [], []>} : vector<8x8xbf16>, vector<8x8xbf16>, vector<8x8xf32> -> vector<8x8xf32>
    %140 = tpu.reciprocal %137 {approx = true} : vector<8x1xf32> -> vector<8x1xf32>
    %141 = vector.broadcast %140 : vector<8x1xf32> to vector<8x8xf32>
    %142 = arith.mulf %139, %141 : vector<8x8xf32>
    %c8_42 = arith.constant 8 : index
    %c8_43 = arith.constant 8 : index
    %143 = vector.load %arg10[%c8_42, %c8_43] : memref<32x32xf32, #tpu.memory_space<vmem>>, vector<8x8xf32>
    tpu.vector_store %arg10[%c8_42, %c8_43], %142 {strides = array<i32>} : memref<32x32xf32, #tpu.memory_space<vmem>>, vector<8x8xf32>,
    %144 = vector.extract_strided_slice %9 {offsets = [8, 16], sizes = [8, 8], strides = [1, 1]} : vector<32x96xf32> to vector<8x8xf32>
    %145 = arith.truncf %144 : vector<8x8xf32> to vector<8x8xbf16>
    %146 = vector.extract_strided_slice %9 {offsets = [8, 48], sizes = [8, 8], strides = [1, 1]} : vector<32x96xf32> to vector<8x8xf32>
    %147 = arith.truncf %146 : vector<8x8xf32> to vector<8x8xbf16>
    %148 = vector.extract_strided_slice %9 {offsets = [8, 80], sizes = [8, 8], strides = [1, 1]} : vector<32x96xf32> to vector<8x8xf32>
    %149 = arith.truncf %148 : vector<8x8xf32> to vector<8x8xbf16>
    %cst_44 = arith.constant dense<0.000000e+00> : vector<8x8xf32>
    %150 = tpu.matmul %145, %147, %cst_44 {dimension_numbers = #tpu.dot_dimension_numbers<[1], [1], [0], [0], [0, 0, 1, 0], [], []>} : vector<8x8xbf16>, vector<8x8xbf16>, vector<8x8xf32> -> vector<8x8xf32>
    %151 = arith.addf %150, %101 : vector<8x8xf32>
    %cst_45 = arith.constant dense<0xFF800000> : vector<8xf32>
    %152 = vector.multi_reduction <maximumf>, %151, %cst_45 [1] : vector<8x8xf32> to vector<8xf32>
    %153 = vector.shape_cast %152 : vector<8xf32> to vector<8x1xf32>
    %154 = vector.broadcast %153 : vector<8x1xf32> to vector<8x8xf32>
    %155 = arith.subf %151, %154 : vector<8x8xf32>
    %156 = math.exp %155 : vector<8x8xf32>
    %cst_46 = arith.constant dense<0.000000e+00> : vector<8xf32>
    %157 = vector.multi_reduction <add>, %156, %cst_46 [1] : vector<8x8xf32> to vector<8xf32>
    %158 = vector.shape_cast %157 : vector<8xf32> to vector<8x1xf32>
    %159 = arith.truncf %156 : vector<8x8xf32> to vector<8x8xbf16>
    %cst_47 = arith.constant dense<0.000000e+00> : vector<8x8xf32>
    %160 = tpu.matmul %159, %149, %cst_47 {dimension_numbers = #tpu.dot_dimension_numbers<[1], [0], [0], [1], [0, 0, 1, 1], [], []>} : vector<8x8xbf16>, vector<8x8xbf16>, vector<8x8xf32> -> vector<8x8xf32>
    %161 = tpu.reciprocal %158 {approx = true} : vector<8x1xf32> -> vector<8x1xf32>
    %162 = vector.broadcast %161 : vector<8x1xf32> to vector<8x8xf32>
    %163 = arith.mulf %160, %162 : vector<8x8xf32>
    %c8_48 = arith.constant 8 : index
    %c16_49 = arith.constant 16 : index
    %164 = vector.load %arg10[%c8_48, %c16_49] : memref<32x32xf32, #tpu.memory_space<vmem>>, vector<8x8xf32>
    tpu.vector_store %arg10[%c8_48, %c16_49], %163 {strides = array<i32>} : memref<32x32xf32, #tpu.memory_space<vmem>>, vector<8x8xf32>,
    %165 = vector.extract_strided_slice %9 {offsets = [8, 24], sizes = [8, 8], strides = [1, 1]} : vector<32x96xf32> to vector<8x8xf32>
    %166 = arith.truncf %165 : vector<8x8xf32> to vector<8x8xbf16>
    %167 = vector.extract_strided_slice %9 {offsets = [8, 56], sizes = [8, 8], strides = [1, 1]} : vector<32x96xf32> to vector<8x8xf32>
    %168 = arith.truncf %167 : vector<8x8xf32> to vector<8x8xbf16>
    %169 = vector.extract_strided_slice %9 {offsets = [8, 88], sizes = [8, 8], strides = [1, 1]} : vector<32x96xf32> to vector<8x8xf32>
    %170 = arith.truncf %169 : vector<8x8xf32> to vector<8x8xbf16>
    %cst_50 = arith.constant dense<0.000000e+00> : vector<8x8xf32>
    %171 = tpu.matmul %166, %168, %cst_50 {dimension_numbers = #tpu.dot_dimension_numbers<[1], [1], [0], [0], [0, 0, 1, 0], [], []>} : vector<8x8xbf16>, vector<8x8xbf16>, vector<8x8xf32> -> vector<8x8xf32>
    %172 = arith.addf %171, %101 : vector<8x8xf32>
    %cst_51 = arith.constant dense<0xFF800000> : vector<8xf32>
    %173 = vector.multi_reduction <maximumf>, %172, %cst_51 [1] : vector<8x8xf32> to vector<8xf32>
    %174 = vector.shape_cast %173 : vector<8xf32> to vector<8x1xf32>
    %175 = vector.broadcast %174 : vector<8x1xf32> to vector<8x8xf32>
    %176 = arith.subf %172, %175 : vector<8x8xf32>
    %177 = math.exp %176 : vector<8x8xf32>
    %cst_52 = arith.constant dense<0.000000e+00> : vector<8xf32>
    %178 = vector.multi_reduction <add>, %177, %cst_52 [1] : vector<8x8xf32> to vector<8xf32>
    %179 = vector.shape_cast %178 : vector<8xf32> to vector<8x1xf32>
    %180 = arith.truncf %177 : vector<8x8xf32> to vector<8x8xbf16>
    %cst_53 = arith.constant dense<0.000000e+00> : vector<8x8xf32>
    %181 = tpu.matmul %180, %170, %cst_53 {dimension_numbers = #tpu.dot_dimension_numbers<[1], [0], [0], [1], [0, 0, 1, 1], [], []>} : vector<8x8xbf16>, vector<8x8xbf16>, vector<8x8xf32> -> vector<8x8xf32>
    %182 = tpu.reciprocal %179 {approx = true} : vector<8x1xf32> -> vector<8x1xf32>
    %183 = vector.broadcast %182 : vector<8x1xf32> to vector<8x8xf32>
    %184 = arith.mulf %181, %183 : vector<8x8xf32>
    %c8_54 = arith.constant 8 : index
    %c24_55 = arith.constant 24 : index
    %185 = vector.load %arg10[%c8_54, %c24_55] : memref<32x32xf32, #tpu.memory_space<vmem>>, vector<8x8xf32>
    tpu.vector_store %arg10[%c8_54, %c24_55], %184 {strides = array<i32>} : memref<32x32xf32, #tpu.memory_space<vmem>>, vector<8x8xf32>,
    %c2 = arith.constant 2 : index
    %c0_56 = arith.constant 0 : index
    %c0_57 = arith.constant 0 : index
    %186 = vector.load %arg2[%c2, %c0_56, %c0_57] : memref<4x1x8xf32, #tpu.memory_space<vmem>>, vector<1x1x8xf32>
    %187 = vector.shape_cast %186 : vector<1x1x8xf32> to vector<1x8xf32>
    %188 = vector.shape_cast %187 : vector<1x8xf32> to vector<1x8xf32>
    %189 = vector.broadcast %188 : vector<1x8xf32> to vector<8x8xf32>
    %190 = vector.extract_strided_slice %9 {offsets = [16, 0], sizes = [8, 8], strides = [1, 1]} : vector<32x96xf32> to vector<8x8xf32>
    %191 = arith.truncf %190 : vector<8x8xf32> to vector<8x8xbf16>
    %192 = vector.extract_strided_slice %9 {offsets = [16, 32], sizes = [8, 8], strides = [1, 1]} : vector<32x96xf32> to vector<8x8xf32>
    %193 = arith.truncf %192 : vector<8x8xf32> to vector<8x8xbf16>
    %194 = vector.extract_strided_slice %9 {offsets = [16, 64], sizes = [8, 8], strides = [1, 1]} : vector<32x96xf32> to vector<8x8xf32>
    %195 = arith.truncf %194 : vector<8x8xf32> to vector<8x8xbf16>
    %cst_58 = arith.constant dense<0.000000e+00> : vector<8x8xf32>
    %196 = tpu.matmul %191, %193, %cst_58 {dimension_numbers = #tpu.dot_dimension_numbers<[1], [1], [0], [0], [0, 0, 1, 0], [], []>} : vector<8x8xbf16>, vector<8x8xbf16>, vector<8x8xf32> -> vector<8x8xf32>
    %197 = arith.addf %196, %189 : vector<8x8xf32>
    %cst_59 = arith.constant dense<0xFF800000> : vector<8xf32>
    %198 = vector.multi_reduction <maximumf>, %197, %cst_59 [1] : vector<8x8xf32> to vector<8xf32>
    %199 = vector.shape_cast %198 : vector<8xf32> to vector<8x1xf32>
    %200 = vector.broadcast %199 : vector<8x1xf32> to vector<8x8xf32>
    %201 = arith.subf %197, %200 : vector<8x8xf32>
    %202 = math.exp %201 : vector<8x8xf32>
    %cst_60 = arith.constant dense<0.000000e+00> : vector<8xf32>
    %203 = vector.multi_reduction <add>, %202, %cst_60 [1] : vector<8x8xf32> to vector<8xf32>
    %204 = vector.shape_cast %203 : vector<8xf32> to vector<8x1xf32>
    %205 = arith.truncf %202 : vector<8x8xf32> to vector<8x8xbf16>
    %cst_61 = arith.constant dense<0.000000e+00> : vector<8x8xf32>
    %206 = tpu.matmul %205, %195, %cst_61 {dimension_numbers = #tpu.dot_dimension_numbers<[1], [0], [0], [1], [0, 0, 1, 1], [], []>} : vector<8x8xbf16>, vector<8x8xbf16>, vector<8x8xf32> -> vector<8x8xf32>
    %207 = tpu.reciprocal %204 {approx = true} : vector<8x1xf32> -> vector<8x1xf32>
    %208 = vector.broadcast %207 : vector<8x1xf32> to vector<8x8xf32>
    %209 = arith.mulf %206, %208 : vector<8x8xf32>
    %c16_62 = arith.constant 16 : index
    %c0_63 = arith.constant 0 : index
    %210 = vector.load %arg10[%c16_62, %c0_63] : memref<32x32xf32, #tpu.memory_space<vmem>>, vector<8x8xf32>
    tpu.vector_store %arg10[%c16_62, %c0_63], %209 {strides = array<i32>} : memref<32x32xf32, #tpu.memory_space<vmem>>, vector<8x8xf32>,
    %211 = vector.extract_strided_slice %9 {offsets = [16, 8], sizes = [8, 8], strides = [1, 1]} : vector<32x96xf32> to vector<8x8xf32>
    %212 = arith.truncf %211 : vector<8x8xf32> to vector<8x8xbf16>
    %213 = vector.extract_strided_slice %9 {offsets = [16, 40], sizes = [8, 8], strides = [1, 1]} : vector<32x96xf32> to vector<8x8xf32>
    %214 = arith.truncf %213 : vector<8x8xf32> to vector<8x8xbf16>
    %215 = vector.extract_strided_slice %9 {offsets = [16, 72], sizes = [8, 8], strides = [1, 1]} : vector<32x96xf32> to vector<8x8xf32>
    %216 = arith.truncf %215 : vector<8x8xf32> to vector<8x8xbf16>
    %cst_64 = arith.constant dense<0.000000e+00> : vector<8x8xf32>
    %217 = tpu.matmul %212, %214, %cst_64 {dimension_numbers = #tpu.dot_dimension_numbers<[1], [1], [0], [0], [0, 0, 1, 0], [], []>} : vector<8x8xbf16>, vector<8x8xbf16>, vector<8x8xf32> -> vector<8x8xf32>
    %218 = arith.addf %217, %189 : vector<8x8xf32>
    %cst_65 = arith.constant dense<0xFF800000> : vector<8xf32>
    %219 = vector.multi_reduction <maximumf>, %218, %cst_65 [1] : vector<8x8xf32> to vector<8xf32>
    %220 = vector.shape_cast %219 : vector<8xf32> to vector<8x1xf32>
    %221 = vector.broadcast %220 : vector<8x1xf32> to vector<8x8xf32>
    %222 = arith.subf %218, %221 : vector<8x8xf32>
    %223 = math.exp %222 : vector<8x8xf32>
    %cst_66 = arith.constant dense<0.000000e+00> : vector<8xf32>
    %224 = vector.multi_reduction <add>, %223, %cst_66 [1] : vector<8x8xf32> to vector<8xf32>
    %225 = vector.shape_cast %224 : vector<8xf32> to vector<8x1xf32>
    %226 = arith.truncf %223 : vector<8x8xf32> to vector<8x8xbf16>
    %cst_67 = arith.constant dense<0.000000e+00> : vector<8x8xf32>
    %227 = tpu.matmul %226, %216, %cst_67 {dimension_numbers = #tpu.dot_dimension_numbers<[1], [0], [0], [1], [0, 0, 1, 1], [], []>} : vector<8x8xbf16>, vector<8x8xbf16>, vector<8x8xf32> -> vector<8x8xf32>
    %228 = tpu.reciprocal %225 {approx = true} : vector<8x1xf32> -> vector<8x1xf32>
    %229 = vector.broadcast %228 : vector<8x1xf32> to vector<8x8xf32>
    %230 = arith.mulf %227, %229 : vector<8x8xf32>
    %c16_68 = arith.constant 16 : index
    %c8_69 = arith.constant 8 : index
    %231 = vector.load %arg10[%c16_68, %c8_69] : memref<32x32xf32, #tpu.memory_space<vmem>>, vector<8x8xf32>
    tpu.vector_store %arg10[%c16_68, %c8_69], %230 {strides = array<i32>} : memref<32x32xf32, #tpu.memory_space<vmem>>, vector<8x8xf32>,
    %232 = vector.extract_strided_slice %9 {offsets = [16, 16], sizes = [8, 8], strides = [1, 1]} : vector<32x96xf32> to vector<8x8xf32>
    %233 = arith.truncf %232 : vector<8x8xf32> to vector<8x8xbf16>
    %234 = vector.extract_strided_slice %9 {offsets = [16, 48], sizes = [8, 8], strides = [1, 1]} : vector<32x96xf32> to vector<8x8xf32>
    %235 = arith.truncf %234 : vector<8x8xf32> to vector<8x8xbf16>
    %236 = vector.extract_strided_slice %9 {offsets = [16, 80], sizes = [8, 8], strides = [1, 1]} : vector<32x96xf32> to vector<8x8xf32>
    %237 = arith.truncf %236 : vector<8x8xf32> to vector<8x8xbf16>
    %cst_70 = arith.constant dense<0.000000e+00> : vector<8x8xf32>
    %238 = tpu.matmul %233, %235, %cst_70 {dimension_numbers = #tpu.dot_dimension_numbers<[1], [1], [0], [0], [0, 0, 1, 0], [], []>} : vector<8x8xbf16>, vector<8x8xbf16>, vector<8x8xf32> -> vector<8x8xf32>
    %239 = arith.addf %238, %189 : vector<8x8xf32>
    %cst_71 = arith.constant dense<0xFF800000> : vector<8xf32>
    %240 = vector.multi_reduction <maximumf>, %239, %cst_71 [1] : vector<8x8xf32> to vector<8xf32>
    %241 = vector.shape_cast %240 : vector<8xf32> to vector<8x1xf32>
    %242 = vector.broadcast %241 : vector<8x1xf32> to vector<8x8xf32>
    %243 = arith.subf %239, %242 : vector<8x8xf32>
    %244 = math.exp %243 : vector<8x8xf32>
    %cst_72 = arith.constant dense<0.000000e+00> : vector<8xf32>
    %245 = vector.multi_reduction <add>, %244, %cst_72 [1] : vector<8x8xf32> to vector<8xf32>
    %246 = vector.shape_cast %245 : vector<8xf32> to vector<8x1xf32>
    %247 = arith.truncf %244 : vector<8x8xf32> to vector<8x8xbf16>
    %cst_73 = arith.constant dense<0.000000e+00> : vector<8x8xf32>
    %248 = tpu.matmul %247, %237, %cst_73 {dimension_numbers = #tpu.dot_dimension_numbers<[1], [0], [0], [1], [0, 0, 1, 1], [], []>} : vector<8x8xbf16>, vector<8x8xbf16>, vector<8x8xf32> -> vector<8x8xf32>
    %249 = tpu.reciprocal %246 {approx = true} : vector<8x1xf32> -> vector<8x1xf32>
    %250 = vector.broadcast %249 : vector<8x1xf32> to vector<8x8xf32>
    %251 = arith.mulf %248, %250 : vector<8x8xf32>
    %c16_74 = arith.constant 16 : index
    %c16_75 = arith.constant 16 : index
    %252 = vector.load %arg10[%c16_74, %c16_75] : memref<32x32xf32, #tpu.memory_space<vmem>>, vector<8x8xf32>
    tpu.vector_store %arg10[%c16_74, %c16_75], %251 {strides = array<i32>} : memref<32x32xf32, #tpu.memory_space<vmem>>, vector<8x8xf32>,
    %253 = vector.extract_strided_slice %9 {offsets = [16, 24], sizes = [8, 8], strides = [1, 1]} : vector<32x96xf32> to vector<8x8xf32>
    %254 = arith.truncf %253 : vector<8x8xf32> to vector<8x8xbf16>
    %255 = vector.extract_strided_slice %9 {offsets = [16, 56], sizes = [8, 8], strides = [1, 1]} : vector<32x96xf32> to vector<8x8xf32>
    %256 = arith.truncf %255 : vector<8x8xf32> to vector<8x8xbf16>
    %257 = vector.extract_strided_slice %9 {offsets = [16, 88], sizes = [8, 8], strides = [1, 1]} : vector<32x96xf32> to vector<8x8xf32>
    %258 = arith.truncf %257 : vector<8x8xf32> to vector<8x8xbf16>
    %cst_76 = arith.constant dense<0.000000e+00> : vector<8x8xf32>
    %259 = tpu.matmul %254, %256, %cst_76 {dimension_numbers = #tpu.dot_dimension_numbers<[1], [1], [0], [0], [0, 0, 1, 0], [], []>} : vector<8x8xbf16>, vector<8x8xbf16>, vector<8x8xf32> -> vector<8x8xf32>
    %260 = arith.addf %259, %189 : vector<8x8xf32>
    %cst_77 = arith.constant dense<0xFF800000> : vector<8xf32>
    %261 = vector.multi_reduction <maximumf>, %260, %cst_77 [1] : vector<8x8xf32> to vector<8xf32>
    %262 = vector.shape_cast %261 : vector<8xf32> to vector<8x1xf32>
    %263 = vector.broadcast %262 : vector<8x1xf32> to vector<8x8xf32>
    %264 = arith.subf %260, %263 : vector<8x8xf32>
    %265 = math.exp %264 : vector<8x8xf32>
    %cst_78 = arith.constant dense<0.000000e+00> : vector<8xf32>
    %266 = vector.multi_reduction <add>, %265, %cst_78 [1] : vector<8x8xf32> to vector<8xf32>
    %267 = vector.shape_cast %266 : vector<8xf32> to vector<8x1xf32>
    %268 = arith.truncf %265 : vector<8x8xf32> to vector<8x8xbf16>
    %cst_79 = arith.constant dense<0.000000e+00> : vector<8x8xf32>
    %269 = tpu.matmul %268, %258, %cst_79 {dimension_numbers = #tpu.dot_dimension_numbers<[1], [0], [0], [1], [0, 0, 1, 1], [], []>} : vector<8x8xbf16>, vector<8x8xbf16>, vector<8x8xf32> -> vector<8x8xf32>
    %270 = tpu.reciprocal %267 {approx = true} : vector<8x1xf32> -> vector<8x1xf32>
    %271 = vector.broadcast %270 : vector<8x1xf32> to vector<8x8xf32>
    %272 = arith.mulf %269, %271 : vector<8x8xf32>
    %c16_80 = arith.constant 16 : index
    %c24_81 = arith.constant 24 : index
    %273 = vector.load %arg10[%c16_80, %c24_81] : memref<32x32xf32, #tpu.memory_space<vmem>>, vector<8x8xf32>
    tpu.vector_store %arg10[%c16_80, %c24_81], %272 {strides = array<i32>} : memref<32x32xf32, #tpu.memory_space<vmem>>, vector<8x8xf32>,
    %c3 = arith.constant 3 : index
    %c0_82 = arith.constant 0 : index
    %c0_83 = arith.constant 0 : index
    %274 = vector.load %arg2[%c3, %c0_82, %c0_83] : memref<4x1x8xf32, #tpu.memory_space<vmem>>, vector<1x1x8xf32>
    %275 = vector.shape_cast %274 : vector<1x1x8xf32> to vector<1x8xf32>
    %276 = vector.shape_cast %275 : vector<1x8xf32> to vector<1x8xf32>
    %277 = vector.broadcast %276 : vector<1x8xf32> to vector<8x8xf32>
    %278 = vector.extract_strided_slice %9 {offsets = [24, 0], sizes = [8, 8], strides = [1, 1]} : vector<32x96xf32> to vector<8x8xf32>
    %279 = arith.truncf %278 : vector<8x8xf32> to vector<8x8xbf16>
    %280 = vector.extract_strided_slice %9 {offsets = [24, 32], sizes = [8, 8], strides = [1, 1]} : vector<32x96xf32> to vector<8x8xf32>
    %281 = arith.truncf %280 : vector<8x8xf32> to vector<8x8xbf16>
    %282 = vector.extract_strided_slice %9 {offsets = [24, 64], sizes = [8, 8], strides = [1, 1]} : vector<32x96xf32> to vector<8x8xf32>
    %283 = arith.truncf %282 : vector<8x8xf32> to vector<8x8xbf16>
    %cst_84 = arith.constant dense<0.000000e+00> : vector<8x8xf32>
    %284 = tpu.matmul %279, %281, %cst_84 {dimension_numbers = #tpu.dot_dimension_numbers<[1], [1], [0], [0], [0, 0, 1, 0], [], []>} : vector<8x8xbf16>, vector<8x8xbf16>, vector<8x8xf32> -> vector<8x8xf32>
    %285 = arith.addf %284, %277 : vector<8x8xf32>
    %cst_85 = arith.constant dense<0xFF800000> : vector<8xf32>
    %286 = vector.multi_reduction <maximumf>, %285, %cst_85 [1] : vector<8x8xf32> to vector<8xf32>
    %287 = vector.shape_cast %286 : vector<8xf32> to vector<8x1xf32>
    %288 = vector.broadcast %287 : vector<8x1xf32> to vector<8x8xf32>
    %289 = arith.subf %285, %288 : vector<8x8xf32>
    %290 = math.exp %289 : vector<8x8xf32>
    %cst_86 = arith.constant dense<0.000000e+00> : vector<8xf32>
    %291 = vector.multi_reduction <add>, %290, %cst_86 [1] : vector<8x8xf32> to vector<8xf32>
    %292 = vector.shape_cast %291 : vector<8xf32> to vector<8x1xf32>
    %293 = arith.truncf %290 : vector<8x8xf32> to vector<8x8xbf16>
    %cst_87 = arith.constant dense<0.000000e+00> : vector<8x8xf32>
    %294 = tpu.matmul %293, %283, %cst_87 {dimension_numbers = #tpu.dot_dimension_numbers<[1], [0], [0], [1], [0, 0, 1, 1], [], []>} : vector<8x8xbf16>, vector<8x8xbf16>, vector<8x8xf32> -> vector<8x8xf32>
    %295 = tpu.reciprocal %292 {approx = true} : vector<8x1xf32> -> vector<8x1xf32>
    %296 = vector.broadcast %295 : vector<8x1xf32> to vector<8x8xf32>
    %297 = arith.mulf %294, %296 : vector<8x8xf32>
    %c24_88 = arith.constant 24 : index
    %c0_89 = arith.constant 0 : index
    %298 = vector.load %arg10[%c24_88, %c0_89] : memref<32x32xf32, #tpu.memory_space<vmem>>, vector<8x8xf32>
    tpu.vector_store %arg10[%c24_88, %c0_89], %297 {strides = array<i32>} : memref<32x32xf32, #tpu.memory_space<vmem>>, vector<8x8xf32>,
    %299 = vector.extract_strided_slice %9 {offsets = [24, 8], sizes = [8, 8], strides = [1, 1]} : vector<32x96xf32> to vector<8x8xf32>
    %300 = arith.truncf %299 : vector<8x8xf32> to vector<8x8xbf16>
    %301 = vector.extract_strided_slice %9 {offsets = [24, 40], sizes = [8, 8], strides = [1, 1]} : vector<32x96xf32> to vector<8x8xf32>
    %302 = arith.truncf %301 : vector<8x8xf32> to vector<8x8xbf16>
    %303 = vector.extract_strided_slice %9 {offsets = [24, 72], sizes = [8, 8], strides = [1, 1]} : vector<32x96xf32> to vector<8x8xf32>
    %304 = arith.truncf %303 : vector<8x8xf32> to vector<8x8xbf16>
    %cst_90 = arith.constant dense<0.000000e+00> : vector<8x8xf32>
    %305 = tpu.matmul %300, %302, %cst_90 {dimension_numbers = #tpu.dot_dimension_numbers<[1], [1], [0], [0], [0, 0, 1, 0], [], []>} : vector<8x8xbf16>, vector<8x8xbf16>, vector<8x8xf32> -> vector<8x8xf32>
    %306 = arith.addf %305, %277 : vector<8x8xf32>
    %cst_91 = arith.constant dense<0xFF800000> : vector<8xf32>
    %307 = vector.multi_reduction <maximumf>, %306, %cst_91 [1] : vector<8x8xf32> to vector<8xf32>
    %308 = vector.shape_cast %307 : vector<8xf32> to vector<8x1xf32>
    %309 = vector.broadcast %308 : vector<8x1xf32> to vector<8x8xf32>
    %310 = arith.subf %306, %309 : vector<8x8xf32>
    %311 = math.exp %310 : vector<8x8xf32>
    %cst_92 = arith.constant dense<0.000000e+00> : vector<8xf32>
    %312 = vector.multi_reduction <add>, %311, %cst_92 [1] : vector<8x8xf32> to vector<8xf32>
    %313 = vector.shape_cast %312 : vector<8xf32> to vector<8x1xf32>
    %314 = arith.truncf %311 : vector<8x8xf32> to vector<8x8xbf16>
    %cst_93 = arith.constant dense<0.000000e+00> : vector<8x8xf32>
    %315 = tpu.matmul %314, %304, %cst_93 {dimension_numbers = #tpu.dot_dimension_numbers<[1], [0], [0], [1], [0, 0, 1, 1], [], []>} : vector<8x8xbf16>, vector<8x8xbf16>, vector<8x8xf32> -> vector<8x8xf32>
    %316 = tpu.reciprocal %313 {approx = true} : vector<8x1xf32> -> vector<8x1xf32>
    %317 = vector.broadcast %316 : vector<8x1xf32> to vector<8x8xf32>
    %318 = arith.mulf %315, %317 : vector<8x8xf32>
    %c24_94 = arith.constant 24 : index
    %c8_95 = arith.constant 8 : index
    %319 = vector.load %arg10[%c24_94, %c8_95] : memref<32x32xf32, #tpu.memory_space<vmem>>, vector<8x8xf32>
    tpu.vector_store %arg10[%c24_94, %c8_95], %318 {strides = array<i32>} : memref<32x32xf32, #tpu.memory_space<vmem>>, vector<8x8xf32>,
    %320 = vector.extract_strided_slice %9 {offsets = [24, 16], sizes = [8, 8], strides = [1, 1]} : vector<32x96xf32> to vector<8x8xf32>
    %321 = arith.truncf %320 : vector<8x8xf32> to vector<8x8xbf16>
    %322 = vector.extract_strided_slice %9 {offsets = [24, 48], sizes = [8, 8], strides = [1, 1]} : vector<32x96xf32> to vector<8x8xf32>
    %323 = arith.truncf %322 : vector<8x8xf32> to vector<8x8xbf16>
    %324 = vector.extract_strided_slice %9 {offsets = [24, 80], sizes = [8, 8], strides = [1, 1]} : vector<32x96xf32> to vector<8x8xf32>
    %325 = arith.truncf %324 : vector<8x8xf32> to vector<8x8xbf16>
    %cst_96 = arith.constant dense<0.000000e+00> : vector<8x8xf32>
    %326 = tpu.matmul %321, %323, %cst_96 {dimension_numbers = #tpu.dot_dimension_numbers<[1], [1], [0], [0], [0, 0, 1, 0], [], []>} : vector<8x8xbf16>, vector<8x8xbf16>, vector<8x8xf32> -> vector<8x8xf32>
    %327 = arith.addf %326, %277 : vector<8x8xf32>
    %cst_97 = arith.constant dense<0xFF800000> : vector<8xf32>
    %328 = vector.multi_reduction <maximumf>, %327, %cst_97 [1] : vector<8x8xf32> to vector<8xf32>
    %329 = vector.shape_cast %328 : vector<8xf32> to vector<8x1xf32>
    %330 = vector.broadcast %329 : vector<8x1xf32> to vector<8x8xf32>
    %331 = arith.subf %327, %330 : vector<8x8xf32>
    %332 = math.exp %331 : vector<8x8xf32>
    %cst_98 = arith.constant dense<0.000000e+00> : vector<8xf32>
    %333 = vector.multi_reduction <add>, %332, %cst_98 [1] : vector<8x8xf32> to vector<8xf32>
    %334 = vector.shape_cast %333 : vector<8xf32> to vector<8x1xf32>
    %335 = arith.truncf %332 : vector<8x8xf32> to vector<8x8xbf16>
    %cst_99 = arith.constant dense<0.000000e+00> : vector<8x8xf32>
    %336 = tpu.matmul %335, %325, %cst_99 {dimension_numbers = #tpu.dot_dimension_numbers<[1], [0], [0], [1], [0, 0, 1, 1], [], []>} : vector<8x8xbf16>, vector<8x8xbf16>, vector<8x8xf32> -> vector<8x8xf32>
    %337 = tpu.reciprocal %334 {approx = true} : vector<8x1xf32> -> vector<8x1xf32>
    %338 = vector.broadcast %337 : vector<8x1xf32> to vector<8x8xf32>
    %339 = arith.mulf %336, %338 : vector<8x8xf32>
    %c24_100 = arith.constant 24 : index
    %c16_101 = arith.constant 16 : index
    %340 = vector.load %arg10[%c24_100, %c16_101] : memref<32x32xf32, #tpu.memory_space<vmem>>, vector<8x8xf32>
    tpu.vector_store %arg10[%c24_100, %c16_101], %339 {strides = array<i32>} : memref<32x32xf32, #tpu.memory_space<vmem>>, vector<8x8xf32>,
    %341 = vector.extract_strided_slice %9 {offsets = [24, 24], sizes = [8, 8], strides = [1, 1]} : vector<32x96xf32> to vector<8x8xf32>
    %342 = arith.truncf %341 : vector<8x8xf32> to vector<8x8xbf16>
    %343 = vector.extract_strided_slice %9 {offsets = [24, 56], sizes = [8, 8], strides = [1, 1]} : vector<32x96xf32> to vector<8x8xf32>
    %344 = arith.truncf %343 : vector<8x8xf32> to vector<8x8xbf16>
    %345 = vector.extract_strided_slice %9 {offsets = [24, 88], sizes = [8, 8], strides = [1, 1]} : vector<32x96xf32> to vector<8x8xf32>
    %346 = arith.truncf %345 : vector<8x8xf32> to vector<8x8xbf16>
    %cst_102 = arith.constant dense<0.000000e+00> : vector<8x8xf32>
    %347 = tpu.matmul %342, %344, %cst_102 {dimension_numbers = #tpu.dot_dimension_numbers<[1], [1], [0], [0], [0, 0, 1, 0], [], []>} : vector<8x8xbf16>, vector<8x8xbf16>, vector<8x8xf32> -> vector<8x8xf32>
    %348 = arith.addf %347, %277 : vector<8x8xf32>
    %cst_103 = arith.constant dense<0xFF800000> : vector<8xf32>
    %349 = vector.multi_reduction <maximumf>, %348, %cst_103 [1] : vector<8x8xf32> to vector<8xf32>
    %350 = vector.shape_cast %349 : vector<8xf32> to vector<8x1xf32>
    %351 = vector.broadcast %350 : vector<8x1xf32> to vector<8x8xf32>
    %352 = arith.subf %348, %351 : vector<8x8xf32>
    %353 = math.exp %352 : vector<8x8xf32>
    %cst_104 = arith.constant dense<0.000000e+00> : vector<8xf32>
    %354 = vector.multi_reduction <add>, %353, %cst_104 [1] : vector<8x8xf32> to vector<8xf32>
    %355 = vector.shape_cast %354 : vector<8xf32> to vector<8x1xf32>
    %356 = arith.truncf %353 : vector<8x8xf32> to vector<8x8xbf16>
    %cst_105 = arith.constant dense<0.000000e+00> : vector<8x8xf32>
    %357 = tpu.matmul %356, %346, %cst_105 {dimension_numbers = #tpu.dot_dimension_numbers<[1], [0], [0], [1], [0, 0, 1, 1], [], []>} : vector<8x8xbf16>, vector<8x8xbf16>, vector<8x8xf32> -> vector<8x8xf32>
    %358 = tpu.reciprocal %355 {approx = true} : vector<8x1xf32> -> vector<8x1xf32>
    %359 = vector.broadcast %358 : vector<8x1xf32> to vector<8x8xf32>
    %360 = arith.mulf %357, %359 : vector<8x8xf32>
    %c24_106 = arith.constant 24 : index
    %c24_107 = arith.constant 24 : index
    %361 = vector.load %arg10[%c24_106, %c24_107] : memref<32x32xf32, #tpu.memory_space<vmem>>, vector<8x8xf32>
    tpu.vector_store %arg10[%c24_106, %c24_107], %360 {strides = array<i32>} : memref<32x32xf32, #tpu.memory_space<vmem>>, vector<8x8xf32>,
    %c0_108 = arith.constant 0 : index
    %c0_109 = arith.constant 0 : index
    %362 = vector.load %arg10[%c0_108, %c0_109] : memref<32x32xf32, #tpu.memory_space<vmem>>, vector<32x32xf32>
    %363 = arith.truncf %362 : vector<32x32xf32> to vector<32x32xbf16>
    %c0_110 = arith.constant 0 : index
    %c0_111 = arith.constant 0 : index
    %364 = vector.load %arg5[%c0_110, %c0_111] : memref<32x32xbf16, #tpu.memory_space<vmem>>, vector<32x32xbf16>
    %cst_112 = arith.constant dense<0.000000e+00> : vector<32x32xf32>
    %365 = tpu.matmul %363, %364, %cst_112 {dimension_numbers = #tpu.dot_dimension_numbers<[1], [0], [0], [1], [0, 0, 1, 1], [], []>} : vector<32x32xbf16>, vector<32x32xbf16>, vector<32x32xf32> -> vector<32x32xf32>
    %c0_113 = arith.constant 0 : index
    %c0_114 = arith.constant 0 : index
    %366 = vector.load %arg6[%c0_113, %c0_114] : memref<1x32xf32, #tpu.memory_space<vmem>>, vector<1x32xf32>
    %367 = vector.shape_cast %366 : vector<1x32xf32> to vector<32xf32>
    %368 = vector.shape_cast %367 : vector<32xf32> to vector<1x32xf32>
    %369 = vector.broadcast %368 : vector<1x32xf32> to vector<32x32xf32>
    %370 = arith.addf %365, %369 : vector<32x32xf32>
    %371 = arith.addf %370, %1 : vector<32x32xf32>
    %cst_115 = arith.constant dense<0.000000e+00> : vector<32xf32>
    %372 = vector.multi_reduction <add>, %371, %cst_115 [1] : vector<32x32xf32> to vector<32xf32>
    %373 = vector.shape_cast %372 : vector<32xf32> to vector<32x1xf32>
    %cst_116 = arith.constant 3.200000e+01 : f32
    %374 = vector.broadcast %cst_116 : f32 to vector<32x1xf32>
    %375 = arith.divf %373, %374 : vector<32x1xf32>
    %376 = vector.broadcast %375 : vector<32x1xf32> to vector<32x32xf32>
    %377 = arith.subf %371, %376 : vector<32x32xf32>
    %378 = arith.mulf %377, %377 : vector<32x32xf32>
    %cst_117 = arith.constant dense<0.000000e+00> : vector<32xf32>
    %379 = vector.multi_reduction <add>, %378, %cst_117 [1] : vector<32x32xf32> to vector<32xf32>
    %380 = vector.shape_cast %379 : vector<32xf32> to vector<32x1xf32>
    %cst_118 = arith.constant 3.200000e+01 : f32
    %381 = vector.broadcast %cst_118 : f32 to vector<32x1xf32>
    %382 = arith.divf %380, %381 : vector<32x1xf32>
    %cst_119 = arith.constant 9.99999996E-13 : f32
    %383 = vector.broadcast %cst_119 : f32 to vector<32x1xf32>
    %384 = arith.addf %382, %383 : vector<32x1xf32>
    %385 = math.rsqrt %384 : vector<32x1xf32>
    %386 = vector.broadcast %385 : vector<32x1xf32> to vector<32x32xf32>
    %387 = arith.mulf %377, %386 : vector<32x32xf32>
    %c0_120 = arith.constant 0 : index
    %c0_121 = arith.constant 0 : index
    %388 = vector.load %arg7[%c0_120, %c0_121] : memref<1x32xf32, #tpu.memory_space<vmem>>, vector<1x32xf32>
    %389 = vector.shape_cast %388 : vector<1x32xf32> to vector<32xf32>
    %390 = vector.shape_cast %389 : vector<32xf32> to vector<1x32xf32>
    %391 = vector.broadcast %390 : vector<1x32xf32> to vector<32x32xf32>
    %392 = arith.mulf %391, %387 : vector<32x32xf32>
    %c0_122 = arith.constant 0 : index
    %c0_123 = arith.constant 0 : index
    %393 = vector.load %arg8[%c0_122, %c0_123] : memref<1x32xf32, #tpu.memory_space<vmem>>, vector<1x32xf32>
    %394 = vector.shape_cast %393 : vector<1x32xf32> to vector<32xf32>
    %395 = vector.shape_cast %394 : vector<32xf32> to vector<1x32xf32>
    %396 = vector.broadcast %395 : vector<1x32xf32> to vector<32x32xf32>
    %397 = arith.addf %392, %396 : vector<32x32xf32>
    %398 = vector.shape_cast %397 : vector<32x32xf32> to vector<4x8x32xf32>
    %c0_124 = arith.constant 0 : index
    %c0_125 = arith.constant 0 : index
    %c0_126 = arith.constant 0 : index
    %399 = vector.load %arg9[%c0_124, %c0_125, %c0_126] : memref<4x8x32xf32, #tpu.memory_space<vmem>>, vector<4x8x32xf32>
    tpu.vector_store %arg9[%c0_124, %c0_125, %c0_126], %398 {strides = array<i32>} : memref<4x8x32xf32, #tpu.memory_space<vmem>>, vector<4x8x32xf32>,
    return
  }
  func.func @transform_0(%arg0: i32) -> (i32, i32, i32) {
    %c0_i32 = arith.constant 0 : i32
    %c0_i32_0 = arith.constant 0 : i32
    %c0_i32_1 = arith.constant 0 : i32
    return %arg0, %c0_i32, %c0_i32_0 : i32, i32, i32
  }
  func.func @transform_1(%arg0: i32) -> (i32, i32, i32) {
    %c0_i32 = arith.constant 0 : i32
    %c0_i32_0 = arith.constant 0 : i32
    %c0_i32_1 = arith.constant 0 : i32
    return %arg0, %c0_i32, %c0_i32_0 : i32, i32, i32
  }
  func.func @transform_2(%arg0: i32) -> (i32, i32) {
    %c0_i32 = arith.constant 0 : i32
    %c0_i32_0 = arith.constant 0 : i32
    %c0_i32_1 = arith.constant 0 : i32
    return %c0_i32, %c0_i32_0 : i32, i32
  }
  func.func @transform_3(%arg0: i32) -> (i32, i32) {
    %c0_i32 = arith.constant 0 : i32
    %c0_i32_0 = arith.constant 0 : i32
    %c0_i32_1 = arith.constant 0 : i32
    return %c0_i32, %c0_i32_0 : i32, i32
  }
  func.func @transform_4(%arg0: i32) -> (i32, i32) {
    %c0_i32 = arith.constant 0 : i32
    %c0_i32_0 = arith.constant 0 : i32
    %c0_i32_1 = arith.constant 0 : i32
    return %c0_i32, %c0_i32_0 : i32, i32
  }
  func.func @transform_5(%arg0: i32) -> (i32, i32) {
    %c0_i32 = arith.constant 0 : i32
    %c0_i32_0 = arith.constant 0 : i32
    %c0_i32_1 = arith.constant 0 : i32
    return %c0_i32, %c0_i32_0 : i32, i32
  }
  func.func @transform_6(%arg0: i32) -> (i32, i32) {
    %c0_i32 = arith.constant 0 : i32
    %c0_i32_0 = arith.constant 0 : i32
    %c0_i32_1 = arith.constant 0 : i32
    return %c0_i32, %c0_i32_0 : i32, i32
  }
  func.func @transform_7(%arg0: i32) -> (i32, i32) {
    %c0_i32 = arith.constant 0 : i32
    %c0_i32_0 = arith.constant 0 : i32
    %c0_i32_1 = arith.constant 0 : i32
    return %c0_i32, %c0_i32_0 : i32, i32
  }
  func.func @transform_8(%arg0: i32) -> (i32, i32, i32) {
    %c0_i32 = arith.constant 0 : i32
    %c0_i32_0 = arith.constant 0 : i32
    %c0_i32_1 = arith.constant 0 : i32
    return %arg0, %c0_i32, %c0_i32_0 : i32, i32, i32
  }
}

</mosaic_0001>

<llo_original>
// kernel: tpu_custom_call.1
$region0: #{tpu_custom_call.1}
  #allocation0 [shape = 'u32[]', space=smem, size = 0x4, offset = 0x4, fixed_abs, tag = 'smem constant byte address 0x4 - core index']
  #allocation1 [shape = 'u32[144,128]{1,0:T(1,128)}', space=vmem, size = 0x12000, scoped, tag = 'internal scratch']
  #allocation2 [shape = 'f32[32,32]{1,0:T(8,128)}', space=vmem, size = 0x4000, scoped, tag = 'scratch operand']
  %s0 = inlined_call_operand.hbm [shape: f32[4,8,32], index: 0, kind: input, shape index: {}]
  %s1 = inlined_call_operand.hbm [shape: f32[4,1,8], index: 1, kind: input, shape index: {}]
  %s2 = inlined_call_operand.hbm [shape: bf16[32,96], index: 2, kind: input, shape index: {}]
  %s3 = inlined_call_operand.vmem [shape: f32[1,96], index: 3, kind: input, shape index: {}]
  %s4 = inlined_call_operand.hbm [shape: bf16[32,32], index: 4, kind: input, shape index: {}]
  %s5 = inlined_call_operand.vmem [shape: f32[1,32], index: 5, kind: input, shape index: {}]
  %s6 = inlined_call_operand.vmem [shape: f32[1,32], index: 6, kind: input, shape index: {}]
  %s7 = inlined_call_operand.vmem [shape: f32[1,32], index: 7, kind: input, shape index: {}]
  %s8 = inlined_call_operand.hbm [shape: f32[4,8,32], index: 8, kind: output, shape index: {}]
  %s9 = sld [smem:[#allocation0]]
  $region58: #{tpu_custom_call.1} parent=0
    _
  %s11 = ssub.s32 1, %s9
  %s12 = scalar_select 0, %s11, %s9
  $region1: #{tpu_custom_call.1} parent=0
    #allocation3 [shape = 'u8[16384]{0}', space=vmem, size = 0x4000, scoped, tag = 'input window, operand 0, single buffered']
    #allocation4 [shape = 's32[1]{0}', space=sflag, size = 0x4, scoped, tag = 'scoped memory for tpu_custom_call.1']
    #allocation5 [shape = 's32[1]{0}', space=sflag, size = 0x4, scoped, tag = 'scoped memory for tpu_custom_call.1']
    #allocation6 [shape = 'u8[2048]{0}', space=vmem, size = 0x800, scoped, tag = 'input window, operand 1, single buffered']
    #allocation7 [shape = 's32[1]{0}', space=sflag, size = 0x4, scoped, tag = 'scoped memory for tpu_custom_call.1']
    #allocation8 [shape = 'u8[8192]{0}', space=vmem, size = 0x2000, scoped, tag = 'input window, operand 2, single buffered']
    #allocation9 [shape = 'u8[8192]{0}', space=vmem, size = 0x2000, scoped, tag = 'input window, operand 4, single buffered']
    #allocation10 [shape = 's32[1]{0}', space=sflag, size = 0x4, scoped, tag = 'scoped memory for tpu_custom_call.1']
    #allocation11 [shape = 'u8[16384]{0}', space=vmem, size = 0x4000, scoped, tag = 'output window, operand 0, single buffered']
    %13 = vsyncpa [#allocation4], 0
    %14 = vsyncpa [#allocation7], 0
    %15 = vsyncpa [#allocation10], 0
    %16 = vsyncpa [#allocation5], 0
    // Predicated region
    $region2: #{tpu_custom_call.1} parent=1 // pred_check
      _
    $region3: #{tpu_custom_call.1} parent=1 // pred_check_branch
      %18 = sbr.rel (0) target = $region5
    $region4: #{tpu_custom_call.1} parent=1 // pred_region
      %s20 = ssub.s32 512, 512
      %21 = vsyncadd [#allocation4], %s20
      %s22 = sshll.u32 [#allocation3], 4
      %s23 = int_to_ptr.vmem [resolvable:$true] %s22
      %28 = dma.hbm_to_vmem [thread:$0]  %s0, 512, %s23, [#allocation4], 128, 128, 8
    $region5: #{tpu_custom_call.1} parent=1 // pred_fallthru
      _
    // Predicated region
    $region6: #{tpu_custom_call.1} parent=1 // pred_check
      _
    $region7: #{tpu_custom_call.1} parent=1 // pred_check_branch
      %30 = sbr.rel (0) target = $region9
    $region8: #{tpu_custom_call.1} parent=1 // pred_region
      %s32 = ssub.s32 64, 64
      %33 = vsyncadd [#allocation7], %s32
      %s34 = sshll.u32 [#allocation6], 4
      %s35 = int_to_ptr.vmem [resolvable:$true] %s34
      %40 = dma.hbm_to_vmem [thread:$0]  %s1, 64, %s35, [#allocation7], 16, 16, 1
    $region9: #{tpu_custom_call.1} parent=1 // pred_fallthru
      _
    // Predicated region
    $region10: #{tpu_custom_call.1} parent=1 // pred_check
      _
    $region11: #{tpu_custom_call.1} parent=1 // pred_check_branch
      %42 = sbr.rel (0) target = $region13
    $region12: #{tpu_custom_call.1} parent=1 // pred_region
      %s44 = ssub.s32 256, 256
      %45 = vsyncadd [#allocation7], %s44
      %s46 = sshll.u32 [#allocation8], 4
      %s47 = int_to_ptr.vmem [resolvable:$true] %s46
      %52 = dma.hbm_to_vmem [thread:$0]  %s2, 256, %s47, [#allocation7], 64, 64, 4
    $region13: #{tpu_custom_call.1} parent=1 // pred_fallthru
      _
    // Predicated region
    $region14: #{tpu_custom_call.1} parent=1 // pred_check
      _
    $region15: #{tpu_custom_call.1} parent=1 // pred_check_branch
      %54 = sbr.rel (0) target = $region17
    $region16: #{tpu_custom_call.1} parent=1 // pred_region
      _
    $region17: #{tpu_custom_call.1} parent=1 // pred_fallthru
      _
    // Predicated region
    $region18: #{tpu_custom_call.1} parent=1 // pred_check
      _
    $region19: #{tpu_custom_call.1} parent=1 // pred_check_branch
      %56 = sbr.rel (0) target = $region21
    $region20: #{tpu_custom_call.1} parent=1 // pred_region
      %s58 = ssub.s32 256, 256
      %59 = vsyncadd [#allocation10], %s58
      %s60 = sshll.u32 [#allocation9], 4
      %s61 = int_to_ptr.vmem [resolvable:$true] %s60
      %66 = dma.hbm_to_vmem [thread:$0]  %s4, 256, %s61, [#allocation10], 64, 64, 4
    $region21: #{tpu_custom_call.1} parent=1 // pred_fallthru
      _
    // Predicated region
    $region22: #{tpu_custom_call.1} parent=1 // pred_check
      _
    $region23: #{tpu_custom_call.1} parent=1 // pred_check_branch
      %68 = sbr.rel (0) target = $region25
    $region24: #{tpu_custom_call.1} parent=1 // pred_region
      _
    $region25: #{tpu_custom_call.1} parent=1 // pred_fallthru
      _
    // Predicated region
    $region26: #{tpu_custom_call.1} parent=1 // pred_check
      _
    $region27: #{tpu_custom_call.1} parent=1 // pred_check_branch
      %70 = sbr.rel (0) target = $region29
    $region28: #{tpu_custom_call.1} parent=1 // pred_region
      _
    $region29: #{tpu_custom_call.1} parent=1 // pred_fallthru
      _
    // Predicated region
    $region30: #{tpu_custom_call.1} parent=1 // pred_check
      _
    $region31: #{tpu_custom_call.1} parent=1 // pred_check_branch
      %72 = sbr.rel (0) target = $region33
    $region32: #{tpu_custom_call.1} parent=1 // pred_region
      _
    $region33: #{tpu_custom_call.1} parent=1 // pred_fallthru
      _
    // Predicated region
    $region34: #{tpu_custom_call.1} parent=1 // pred_check
      _
    $region35: #{tpu_custom_call.1} parent=1 // pred_check_branch
      %74 = sbr.rel (0) target = $region37
    $region36: #{tpu_custom_call.1} parent=1 // pred_region
      %75 = dma.done [#allocation4], 512
    $region37: #{tpu_custom_call.1} parent=1 // pred_fallthru
      _
    // Predicated region
    $region38: #{tpu_custom_call.1} parent=1 // pred_check
      _
    $region39: #{tpu_custom_call.1} parent=1 // pred_check_branch
      %77 = sbr.rel (0) target = $region41
    $region40: #{tpu_custom_call.1} parent=1 // pred_region
      %78 = dma.done [#allocation7], 64
    $region41: #{tpu_custom_call.1} parent=1 // pred_fallthru
      _
    // Predicated region
    $region42: #{tpu_custom_call.1} parent=1 // pred_check
      _
    $region43: #{tpu_custom_call.1} parent=1 // pred_check_branch
      %80 = sbr.rel (0) target = $region45
    $region44: #{tpu_custom_call.1} parent=1 // pred_region
      %81 = dma.done [#allocation7], 256
    $region45: #{tpu_custom_call.1} parent=1 // pred_fallthru
      _
    // Predicated region
    $region46: #{tpu_custom_call.1} parent=1 // pred_check
      _
    $region47: #{tpu_custom_call.1} parent=1 // pred_check_branch
      %83 = sbr.rel (0) target = $region49
    $region48: #{tpu_custom_call.1} parent=1 // pred_region
      %84 = dma.done [#allocation10], 256
    $region49: #{tpu_custom_call.1} parent=1 // pred_fallthru
      _
    %v86 = vld [vmem:[#allocation3] sm:$0xff]
    %v87 = vld [vmem:[#allocation3 + $0x8] sm:$0xff]
    %v88 = vld [vmem:[#allocation3 + $0x10] sm:$0xff]
    %v89 = vld [vmem:[#allocation3 + $0x18] sm:$0xff]
    %v90 = vpack.c.bf16 %v87, %v86
    %v91 = vpack.c.bf16 %v89, %v88
    %v92 = vld [vmem:[#allocation8] sm:$0xf]
    %v93 = vld [vmem:[#allocation8 + $0x4] sm:$0xf]
    %v94 = vld [vmem:[#allocation8 + $0x8] sm:$0xf]
    %v95 = vld [vmem:[#allocation8 + $0xc] sm:$0xf]
    %v96 = vld [vmem:[%s3] sm:$0x1]
    %v98 = vlaneseq
    %v99 = vshrl.u32 %v98, 7
    %v100 = vsub.s32 0, %v99
    %v101 = vrot.slane %v96, %v100
    %v107 = vunpack.c.l.b16 %v92
    %v108 = vunpack.c.l.b16 %v93
    %v109 = vunpack.c.l.b16 %v94
    %v110 = vunpack.c.l.b16 %v95
    %v111 = vpack.c.b16 %v108, %v107
    %v112 = vpack.c.b16 %v110, %v109
    %vm115 = vcmask 261120
    %v117 = vsel %vm115, %v90, 0
    %v120 = vsel %vm115, %v91, 0
    %122 = vmatprep.subr.bf16.mxu0 0
    %123 = vmatpush1.bf16.msra.mxu0 0
    %124 = vmatprep.subr.bf16.mxu0 0
    %125 = vmatpush1.bf16.msra.mxu0 0
    %126 = vmatprep.subr.bf16.mxu0 0
    %127 = vmatpush1.bf16.msra.mxu0 0
    %128 = vmatprep.subr.bf16.mxu0 0
    %129 = vmatpush1.bf16.msra.mxu0 0
    %130 = vmatprep.subr.bf16.mxu0 0
    %131 = vmatpush1.bf16.msra.mxu0 0
    %132 = vmatprep.subr.bf16.mxu0 0
    %133 = vmatpush1.bf16.msra.mxu0 0
    %134 = vmatprep.subr.bf16.mxu0 0
    %135 = vmatpush1.bf16.msra.mxu0 %v112
    %136 = vmatprep.subr.bf16.mxu0 0
    %137 = vmatpush1.bf16.msra.mxu0 %v111
    %138 = vmatprep.subr.bf16.mxu0 0
    %139 = vmatpush2.bf16.msra.mxu0 0
    %140 = vmatprep.subr.bf16.mxu0 0
    %141 = vmatpush2.bf16.msra.mxu0 0
    %142 = vmatprep.subr.bf16.mxu0 0
    %143 = vmatpush2.bf16.msra.mxu0 0
    %144 = vmatprep.subr.bf16.mxu0 0
    %145 = vmatpush2.bf16.msra.mxu0 0
    %146 = vmatprep.subr.bf16.mxu0 0
    %147 = vmatpush2.bf16.msra.mxu0 0
    %148 = vmatprep.subr.bf16.mxu0 0
    %149 = vmatpush2.bf16.msra.mxu0 0
    %150 = vmatprep.subr.bf16.mxu0 0
    %151 = vmatpush2.bf16.msra.mxu0 0
    %152 = vmatprep.subr.bf16.mxu0 0
    %153 = vmatpush2.bf16.msra.mxu0 0
    %154 = vmatprep.mubr.bf16.mxu0 0
    %155 = vmatmul.mubr.bf16.gmra.mxu0 %v117
    %v156 = vpop.f32.mrf.mxu0
    %v157 = vadd.f32 %v101, %v156
    %v158 = vpop.f32.mrf.mxu0
    %v159 = vpop.f32.mrf.mxu0
    %v160 = vadd.f32 %v101, %v159
    %v161 = vpop.f32.mrf.mxu0
    %162 = vmatprep.mubr.bf16.mxu0 0
    %163 = vmatmul.mubr.bf16.gmra.mxu0 %v120
    %v164 = vpop.f32.mrf.mxu0
    %v165 = vadd.f32 %v101, %v164
    %v166 = vpop.f32.mrf.mxu0
    %v167 = vpop.f32.mrf.mxu0
    %v168 = vadd.f32 %v101, %v167
    %v169 = vpop.f32.mrf.mxu0
    %170 = vdwg.mxu0
    %v171 = vld [vmem:[#allocation6] sm:$0x1]
    %v173 = vlaneseq
    %v174 = vshrl.u32 %v173, 7
    %v175 = vsub.s32 0, %v174
    %v176 = vrot.slane %v171, %v175
    %v178 = vpack.c.bf16 %v157, %v157
    %180 = vrot.lane.b32.xlu0 %v178, 96
    %v181 = vpop.permute.xlu0 %180
    %vm182 = vcmask 64512
    %v184 = vsel %vm182, %v178, 0
    %v187 = vsel %vm182, %v181, 0
    %189 = vmatprep.subr.bf16.mxu0 0
    %190 = vmatpush1.bf16.xpose.msra.mxu0 0
    %191 = vmatprep.subr.bf16.mxu0 0
    %192 = vmatpush1.bf16.xpose.msra.mxu0 0
    %193 = vmatprep.subr.bf16.mxu0 0
    %194 = vmatpush1.bf16.xpose.msra.mxu0 0
    %195 = vmatprep.subr.bf16.mxu0 0
    %196 = vmatpush1.bf16.xpose.msra.mxu0 0
    %197 = vmatprep.subr.bf16.mxu0 0
    %198 = vmatpush1.bf16.xpose.msra.mxu0 0
    %199 = vmatprep.subr.bf16.mxu0 0
    %200 = vmatpush1.bf16.xpose.msra.mxu0 0
    %201 = vmatprep.subr.bf16.mxu0 0
    %202 = vmatpush1.bf16.xpose.msra.mxu0 0
    %203 = vmatprep.subr.bf16.mxu0 0
    %204 = vmatpush1.bf16.xpose.msra.mxu0 %v187
    %205 = vmatprep.subr.bf16.mxu0 0
    %206 = vmatpush2.bf16.xpose.msra.mxu0 0
    %207 = vmatprep.subr.bf16.mxu0 0
    %208 = vmatpush2.bf16.xpose.msra.mxu0 0
    %209 = vmatprep.subr.bf16.mxu0 0
    %210 = vmatpush2.bf16.xpose.msra.mxu0 0
    %211 = vmatprep.subr.bf16.mxu0 0
    %212 = vmatpush2.bf16.xpose.msra.mxu0 0
    %213 = vmatprep.subr.bf16.mxu0 0
    %214 = vmatpush2.bf16.xpose.msra.mxu0 0
    %215 = vmatprep.subr.bf16.mxu0 0
    %216 = vmatpush2.bf16.xpose.msra.mxu0 0
    %217 = vmatprep.subr.bf16.mxu0 0
    %218 = vmatpush2.bf16.xpose.msra.mxu0 0
    %219 = vmatprep.subr.bf16.mxu0 0
    %220 = vmatpush2.bf16.xpose.msra.mxu0 0
    %221 = vmatprep.mubr.bf16.mxu0 0
    %222 = vmatmul.mubr.bf16.gmra.mxu0 %v184
    %v223 = vpop.f32.mrf.mxu0
    %v224 = vadd.f32 %v176, %v223
    %v225 = vpop.f32.mrf.mxu0
    %v226 = vpop.f32.mrf.mxu0
    %v227 = vpop.f32.mrf.mxu0
    %228 = vdwg.mxu0
    %v229 = vsel %vm182, %v224, -inf
    %230 = vmax.xlane.f32.xlu0 %v229
    %v231 = vpop.xlane.xlu0 %230
    %v232 = vsub.f32 %v224, %v231
    %v233 = vmul.f32 %v232, 1.442695
    %v234 = vpow.pop %v233
    %v235 = vsel %vm182, %v234, 0.0
    %236 = vadd.xlane.f32.xlu0 %v235
    %v237 = vpop.xlane.xlu0 %236
    %v238 = vpack.c.bf16 %v234, %v234
    %239 = vrot.lane.b32.xlu0 %v178, 64
    %v240 = vpop.permute.xlu0 %239
    %v242 = vsel %vm182, %v238, 0
    %vm244 = vcmask 1043456
    %v246 = vsel %vm244, %v240, 0
    %248 = vmatprep.subr.bf16.mxu0 0
    %249 = vmatpush1.bf16.msra.mxu0 0
    %250 = vmatprep.subr.bf16.mxu0 0
    %251 = vmatpush1.bf16.msra.mxu0 0
    %252 = vmatprep.subr.bf16.mxu0 0
    %253 = vmatpush1.bf16.msra.mxu0 0
    %254 = vmatprep.subr.bf16.mxu0 0
    %255 = vmatpush1.bf16.msra.mxu0 0
    %256 = vmatprep.subr.bf16.mxu0 0
    %257 = vmatpush1.bf16.msra.mxu0 0
    %258 = vmatprep.subr.bf16.mxu0 0
    %259 = vmatpush1.bf16.msra.mxu0 0
    %260 = vmatprep.subr.bf16.mxu0 0
    %261 = vmatpush1.bf16.msra.mxu0 0
    %262 = vmatprep.subr.bf16.mxu0 0
    %263 = vmatpush1.bf16.msra.mxu0 %v246
    %264 = vmatprep.subr.bf16.mxu0 0
    %265 = vmatpush2.bf16.msra.mxu0 0
    %266 = vmatprep.subr.bf16.mxu0 0
    %267 = vmatpush2.bf16.msra.mxu0 0
    %268 = vmatprep.subr.bf16.mxu0 0
    %269 = vmatpush2.bf16.msra.mxu0 0
    %270 = vmatprep.subr.bf16.mxu0 0
    %271 = vmatpush2.bf16.msra.mxu0 0
    %272 = vmatprep.subr.bf16.mxu0 0
    %273 = vmatpush2.bf16.msra.mxu0 0
    %274 = vmatprep.subr.bf16.mxu0 0
    %275 = vmatpush2.bf16.msra.mxu0 0
    %276 = vmatprep.subr.bf16.mxu0 0
    %277 = vmatpush2.bf16.msra.mxu0 0
    %278 = vmatprep.subr.bf16.mxu0 0
    %279 = vmatpush2.bf16.msra.mxu0 0
    %280 = vmatprep.mubr.bf16.mxu0 0
    %281 = vmatmul.mubr.bf16.gmra.mxu0 %v242
    %v282 = vpop.f32.mrf.mxu0
    %v283 = vadd.f32 0.0, %v282
    %v284 = vpop.f32.mrf.mxu0
    %v285 = vpop.f32.mrf.mxu0
    %v286 = vpop.f32.mrf.mxu0
    %287 = vdwg.mxu0
    %v288 = vrcp.pop %v237
    %v289 = vmul.f32 %v283, %v288
    %290 = vst.msk [vmem:[#allocation2] sm:$0xff] %vm182, %v289
    %291 = vrot.lane.b32.xlu0 %v178, 120
    %v292 = vpop.permute.xlu0 %291
    %293 = vrot.lane.b32.xlu0 %v178, 88
    %v294 = vpop.permute.xlu0 %293
    %v296 = vsel %vm182, %v292, 0
    %v299 = vsel %vm182, %v294, 0
    %301 = vmatprep.subr.bf16.mxu0 0
    %302 = vmatpush1.bf16.xpose.msra.mxu0 0
    %303 = vmatprep.subr.bf16.mxu0 0
    %304 = vmatpush1.bf16.xpose.msra.mxu0 0
    %305 = vmatprep.subr.bf16.mxu0 0
    %306 = vmatpush1.bf16.xpose.msra.mxu0 0
    %307 = vmatprep.subr.bf16.mxu0 0
    %308 = vmatpush1.bf16.xpose.msra.mxu0 0
    %309 = vmatprep.subr.bf16.mxu0 0
    %310 = vmatpush1.bf16.xpose.msra.mxu0 0
    %311 = vmatprep.subr.bf16.mxu0 0
    %312 = vmatpush1.bf16.xpose.msra.mxu0 0
    %313 = vmatprep.subr.bf16.mxu0 0
    %314 = vmatpush1.bf16.xpose.msra.mxu0 0
    %315 = vmatprep.subr.bf16.mxu0 0
    %316 = vmatpush1.bf16.xpose.msra.mxu0 %v299
    %317 = vmatprep.subr.bf16.mxu0 0
    %318 = vmatpush2.bf16.xpose.msra.mxu0 0
    %319 = vmatprep.subr.bf16.mxu0 0
    %320 = vmatpush2.bf16.xpose.msra.mxu0 0
    %321 = vmatprep.subr.bf16.mxu0 0
    %322 = vmatpush2.bf16.xpose.msra.mxu0 0
    %323 = vmatprep.subr.bf16.mxu0 0
    %324 = vmatpush2.bf16.xpose.msra.mxu0 0
    %325 = vmatprep.subr.bf16.mxu0 0
    %326 = vmatpush2.bf16.xpose.msra.mxu0 0
    %327 = vmatprep.subr.bf16.mxu0 0
    %328 = vmatpush2.bf16.xpose.msra.mxu0 0
    %329 = vmatprep.subr.bf16.mxu0 0
    %330 = vmatpush2.bf16.xpose.msra.mxu0 0
    %331 = vmatprep.subr.bf16.mxu0 0
    %332 = vmatpush2.bf16.xpose.msra.mxu0 0
    %333 = vmatprep.mubr.bf16.mxu0 0
    %334 = vmatmul.mubr.bf16.gmra.mxu0 %v296
    %v335 = vpop.f32.mrf.mxu0
    %v336 = vadd.f32 %v176, %v335
    %v337 = vpop.f32.mrf.mxu0
    %v338 = vpop.f32.mrf.mxu0
    %v339 = vpop.f32.mrf.mxu0
    %340 = vdwg.mxu0
    %v341 = vsel %vm182, %v336, -inf
    %342 = vmax.xlane.f32.xlu0 %v341
    %v343 = vpop.xlane.xlu0 %342
    %v344 = vsub.f32 %v336, %v343
    %v345 = vmul.f32 %v344, 1.442695
    %v346 = vpow.pop %v345
    %v347 = vsel %vm182, %v346, 0.0
    %348 = vadd.xlane.f32.xlu0 %v347
    %v349 = vpop.xlane.xlu0 %348
    %v350 = vpack.c.bf16 %v346, %v346
    %351 = vrot.lane.b32.xlu0 %v178, 56
    %v352 = vpop.permute.xlu0 %351
    %v354 = vsel %vm182, %v350, 0
    %v357 = vsel %vm244, %v352, 0
    %359 = vmatprep.subr.bf16.mxu0 0
    %360 = vmatpush1.bf16.msra.mxu0 0
    %361 = vmatprep.subr.bf16.mxu0 0
    %362 = vmatpush1.bf16.msra.mxu0 0
    %363 = vmatprep.subr.bf16.mxu0 0
    %364 = vmatpush1.bf16.msra.mxu0 0
    %365 = vmatprep.subr.bf16.mxu0 0
    %366 = vmatpush1.bf16.msra.mxu0 0
    %367 = vmatprep.subr.bf16.mxu0 0
    %368 = vmatpush1.bf16.msra.mxu0 0
    %369 = vmatprep.subr.bf16.mxu0 0
    %370 = vmatpush1.bf16.msra.mxu0 0
    %371 = vmatprep.subr.bf16.mxu0 0
    %372 = vmatpush1.bf16.msra.mxu0 0
    %373 = vmatprep.subr.bf16.mxu0 0
    %374 = vmatpush1.bf16.msra.mxu0 %v357
    %375 = vmatprep.subr.bf16.mxu0 0
    %376 = vmatpush2.bf16.msra.mxu0 0
    %377 = vmatprep.subr.bf16.mxu0 0
    %378 = vmatpush2.bf16.msra.mxu0 0
    %379 = vmatprep.subr.bf16.mxu0 0
    %380 = vmatpush2.bf16.msra.mxu0 0
    %381 = vmatprep.subr.bf16.mxu0 0
    %382 = vmatpush2.bf16.msra.mxu0 0
    %383 = vmatprep.subr.bf16.mxu0 0
    %384 = vmatpush2.bf16.msra.mxu0 0
    %385 = vmatprep.subr.bf16.mxu0 0
    %386 = vmatpush2.bf16.msra.mxu0 0
    %387 = vmatprep.subr.bf16.mxu0 0
    %388 = vmatpush2.bf16.msra.mxu0 0
    %389 = vmatprep.subr.bf16.mxu0 0
    %390 = vmatpush2.bf16.msra.mxu0 0
    %391 = vmatprep.mubr.bf16.mxu0 0
    %392 = vmatmul.mubr.bf16.gmra.mxu0 %v354
    %v393 = vpop.f32.mrf.mxu0
    %v394 = vadd.f32 0.0, %v393
    %v395 = vpop.f32.mrf.mxu0
    %v396 = vpop.f32.mrf.mxu0
    %v397 = vpop.f32.mrf.mxu0
    %398 = vdwg.mxu0
    %v399 = vrcp.pop %v349
    %v400 = vmul.f32 %v394, %v399
    %402 = vrot.lane.b32.xlu0 %v400, 8
    %v403 = vpop.permute.xlu0 %402
    %vm405 = vcmask 130112
    %406 = vst.msk [vmem:[#allocation2] sm:$0xff] %vm405, %v403
    %407 = vrot.lane.b32.xlu0 %v178, 112
    %v408 = vpop.permute.xlu0 %407
    %409 = vrot.lane.b32.xlu0 %v178, 80
    %v410 = vpop.permute.xlu0 %409
    %v412 = vsel %vm182, %v408, 0
    %v415 = vsel %vm182, %v410, 0
    %417 = vmatprep.subr.bf16.mxu0 0
    %418 = vmatpush1.bf16.xpose.msra.mxu0 0
    %419 = vmatprep.subr.bf16.mxu0 0
    %420 = vmatpush1.bf16.xpose.msra.mxu0 0
    %421 = vmatprep.subr.bf16.mxu0 0
    %422 = vmatpush1.bf16.xpose.msra.mxu0 0
    %423 = vmatprep.subr.bf16.mxu0 0
    %424 = vmatpush1.bf16.xpose.msra.mxu0 0
    %425 = vmatprep.subr.bf16.mxu0 0
    %426 = vmatpush1.bf16.xpose.msra.mxu0 0
    %427 = vmatprep.subr.bf16.mxu0 0
    %428 = vmatpush1.bf16.xpose.msra.mxu0 0
    %429 = vmatprep.subr.bf16.mxu0 0
    %430 = vmatpush1.bf16.xpose.msra.mxu0 0
    %431 = vmatprep.subr.bf16.mxu0 0
    %432 = vmatpush1.bf16.xpose.msra.mxu0 %v415
    %433 = vmatprep.subr.bf16.mxu0 0
    %434 = vmatpush2.bf16.xpose.msra.mxu0 0
    %435 = vmatprep.subr.bf16.mxu0 0
    %436 = vmatpush2.bf16.xpose.msra.mxu0 0
    %437 = vmatprep.subr.bf16.mxu0 0
    %438 = vmatpush2.bf16.xpose.msra.mxu0 0
    %439 = vmatprep.subr.bf16.mxu0 0
    %440 = vmatpush2.bf16.xpose.msra.mxu0 0
    %441 = vmatprep.subr.bf16.mxu0 0
    %442 = vmatpush2.bf16.xpose.msra.mxu0 0
    %443 = vmatprep.subr.bf16.mxu0 0
    %444 = vmatpush2.bf16.xpose.msra.mxu0 0
    %445 = vmatprep.subr.bf16.mxu0 0
    %446 = vmatpush2.bf16.xpose.msra.mxu0 0
    %447 = vmatprep.subr.bf16.mxu0 0
    %448 = vmatpush2.bf16.xpose.msra.mxu0 0
    %449 = vmatprep.mubr.bf16.mxu0 0
    %450 = vmatmul.mubr.bf16.gmra.mxu0 %v412
    %v451 = vpop.f32.mrf.mxu0
    %v452 = vadd.f32 %v176, %v451
    %v453 = vpop.f32.mrf.mxu0
    %v454 = vpop.f32.mrf.mxu0
    %v455 = vpop.f32.mrf.mxu0
    %456 = vdwg.mxu0
    %v457 = vsel %vm182, %v452, -inf
    %458 = vmax.xlane.f32.xlu0 %v457
    %v459 = vpop.xlane.xlu0 %458
    %v460 = vsub.f32 %v452, %v459
    %v461 = vmul.f32 %v460, 1.442695
    %v462 = vpow.pop %v461
    %v463 = vsel %vm182, %v462, 0.0
    %464 = vadd.xlane.f32.xlu0 %v463
    %v465 = vpop.xlane.xlu0 %464
    %v466 = vpack.c.bf16 %v462, %v462
    %467 = vrot.lane.b32.xlu0 %v178, 48
    %v468 = vpop.permute.xlu0 %467
    %v470 = vsel %vm182, %v466, 0
    %v473 = vsel %vm244, %v468, 0
    %475 = vmatprep.subr.bf16.mxu0 0
    %476 = vmatpush1.bf16.msra.mxu0 0
    %477 = vmatprep.subr.bf16.mxu0 0
    %478 = vmatpush1.bf16.msra.mxu0 0
    %479 = vmatprep.subr.bf16.mxu0 0
    %480 = vmatpush1.bf16.msra.mxu0 0
    %481 = vmatprep.subr.bf16.mxu0 0
    %482 = vmatpush1.bf16.msra.mxu0 0
    %483 = vmatprep.subr.bf16.mxu0 0
    %484 = vmatpush1.bf16.msra.mxu0 0
    %485 = vmatprep.subr.bf16.mxu0 0
    %486 = vmatpush1.bf16.msra.mxu0 0
    %487 = vmatprep.subr.bf16.mxu0 0
    %488 = vmatpush1.bf16.msra.mxu0 0
    %489 = vmatprep.subr.bf16.mxu0 0
    %490 = vmatpush1.bf16.msra.mxu0 %v473
    %491 = vmatprep.subr.bf16.mxu0 0
    %492 = vmatpush2.bf16.msra.mxu0 0
    %493 = vmatprep.subr.bf16.mxu0 0
    %494 = vmatpush2.bf16.msra.mxu0 0
    %495 = vmatprep.subr.bf16.mxu0 0
    %496 = vmatpush2.bf16.msra.mxu0 0
    %497 = vmatprep.subr.bf16.mxu0 0
    %498 = vmatpush2.bf16.msra.mxu0 0
    %499 = vmatprep.subr.bf16.mxu0 0
    %500 = vmatpush2.bf16.msra.mxu0 0
    %501 = vmatprep.subr.bf16.mxu0 0
    %502 = vmatpush2.bf16.msra.mxu0 0
    %503 = vmatprep.subr.bf16.mxu0 0
    %504 = vmatpush2.bf16.msra.mxu0 0
    %505 = vmatprep.subr.bf16.mxu0 0
    %506 = vmatpush2.bf16.msra.mxu0 0
    %507 = vmatprep.mubr.bf16.mxu0 0
    %508 = vmatmul.mubr.bf16.gmra.mxu0 %v470
    %v509 = vpop.f32.mrf.mxu0
    %v510 = vadd.f32 0.0, %v509
    %v511 = vpop.f32.mrf.mxu0
    %v512 = vpop.f32.mrf.mxu0
    %v513 = vpop.f32.mrf.mxu0
    %514 = vdwg.mxu0
    %v515 = vrcp.pop %v465
    %v516 = vmul.f32 %v510, %v515
    %518 = vrot.lane.b32.xlu0 %v516, 16
    %v519 = vpop.permute.xlu0 %518
    %vm521 = vcmask 195712
    %522 = vst.msk [vmem:[#allocation2] sm:$0xff] %vm521, %v519
    %523 = vrot.lane.b32.xlu0 %v178, 104
    %v524 = vpop.permute.xlu0 %523
    %525 = vrot.lane.b32.xlu0 %v178, 72
    %v526 = vpop.permute.xlu0 %525
    %v528 = vsel %vm182, %v524, 0
    %v531 = vsel %vm182, %v526, 0
    %533 = vmatprep.subr.bf16.mxu0 0
    %534 = vmatpush1.bf16.xpose.msra.mxu0 0
    %535 = vmatprep.subr.bf16.mxu0 0
    %536 = vmatpush1.bf16.xpose.msra.mxu0 0
    %537 = vmatprep.subr.bf16.mxu0 0
    %538 = vmatpush1.bf16.xpose.msra.mxu0 0
    %539 = vmatprep.subr.bf16.mxu0 0
    %540 = vmatpush1.bf16.xpose.msra.mxu0 0
    %541 = vmatprep.subr.bf16.mxu0 0
    %542 = vmatpush1.bf16.xpose.msra.mxu0 0
    %543 = vmatprep.subr.bf16.mxu0 0
    %544 = vmatpush1.bf16.xpose.msra.mxu0 0
    %545 = vmatprep.subr.bf16.mxu0 0
    %546 = vmatpush1.bf16.xpose.msra.mxu0 0
    %547 = vmatprep.subr.bf16.mxu0 0
    %548 = vmatpush1.bf16.xpose.msra.mxu0 %v531
    %549 = vmatprep.subr.bf16.mxu0 0
    %550 = vmatpush2.bf16.xpose.msra.mxu0 0
    %551 = vmatprep.subr.bf16.mxu0 0
    %552 = vmatpush2.bf16.xpose.msra.mxu0 0
    %553 = vmatprep.subr.bf16.mxu0 0
    %554 = vmatpush2.bf16.xpose.msra.mxu0 0
    %555 = vmatprep.subr.bf16.mxu0 0
    %556 = vmatpush2.bf16.xpose.msra.mxu0 0
    %557 = vmatprep.subr.bf16.mxu0 0
    %558 = vmatpush2.bf16.xpose.msra.mxu0 0
    %559 = vmatprep.subr.bf16.mxu0 0
    %560 = vmatpush2.bf16.xpose.msra.mxu0 0
    %561 = vmatprep.subr.bf16.mxu0 0
    %562 = vmatpush2.bf16.xpose.msra.mxu0 0
    %563 = vmatprep.subr.bf16.mxu0 0
    %564 = vmatpush2.bf16.xpose.msra.mxu0 0
    %565 = vmatprep.mubr.bf16.mxu0 0
    %566 = vmatmul.mubr.bf16.gmra.mxu0 %v528
    %v567 = vpop.f32.mrf.mxu0
    %v568 = vadd.f32 %v176, %v567
    %v569 = vpop.f32.mrf.mxu0
    %v570 = vpop.f32.mrf.mxu0
    %v571 = vpop.f32.mrf.mxu0
    %572 = vdwg.mxu0
    %v573 = vsel %vm182, %v568, -inf
    %574 = vmax.xlane.f32.xlu0 %v573
    %v575 = vpop.xlane.xlu0 %574
    %v576 = vsub.f32 %v568, %v575
    %v577 = vmul.f32 %v576, 1.442695
    %v578 = vpow.pop %v577
    %v579 = vsel %vm182, %v578, 0.0
    %580 = vadd.xlane.f32.xlu0 %v579
    %v581 = vpop.xlane.xlu0 %580
    %v582 = vpack.c.bf16 %v578, %v578
    %583 = vrot.lane.b32.xlu0 %v178, 40
    %v584 = vpop.permute.xlu0 %583
    %v586 = vsel %vm182, %v582, 0
    %v589 = vsel %vm244, %v584, 0
    %591 = vmatprep.subr.bf16.mxu0 0
    %592 = vmatpush1.bf16.msra.mxu0 0
    %593 = vmatprep.subr.bf16.mxu0 0
    %594 = vmatpush1.bf16.msra.mxu0 0
    %595 = vmatprep.subr.bf16.mxu0 0
    %596 = vmatpush1.bf16.msra.mxu0 0
    %597 = vmatprep.subr.bf16.mxu0 0
    %598 = vmatpush1.bf16.msra.mxu0 0
    %599 = vmatprep.subr.bf16.mxu0 0
    %600 = vmatpush1.bf16.msra.mxu0 0
    %601 = vmatprep.subr.bf16.mxu0 0
    %602 = vmatpush1.bf16.msra.mxu0 0
    %603 = vmatprep.subr.bf16.mxu0 0
    %604 = vmatpush1.bf16.msra.mxu0 0
    %605 = vmatprep.subr.bf16.mxu0 0
    %606 = vmatpush1.bf16.msra.mxu0 %v589
    %607 = vmatprep.subr.bf16.mxu0 0
    %608 = vmatpush2.bf16.msra.mxu0 0
    %609 = vmatprep.subr.bf16.mxu0 0
    %610 = vmatpush2.bf16.msra.mxu0 0
    %611 = vmatprep.subr.bf16.mxu0 0
    %612 = vmatpush2.bf16.msra.mxu0 0
    %613 = vmatprep.subr.bf16.mxu0 0
    %614 = vmatpush2.bf16.msra.mxu0 0
    %615 = vmatprep.subr.bf16.mxu0 0
    %616 = vmatpush2.bf16.msra.mxu0 0
    %617 = vmatprep.subr.bf16.mxu0 0
    %618 = vmatpush2.bf16.msra.mxu0 0
    %619 = vmatprep.subr.bf16.mxu0 0
    %620 = vmatpush2.bf16.msra.mxu0 0
    %621 = vmatprep.subr.bf16.mxu0 0
    %622 = vmatpush2.bf16.msra.mxu0 0
    %623 = vmatprep.mubr.bf16.mxu0 0
    %624 = vmatmul.mubr.bf16.gmra.mxu0 %v586
    %v625 = vpop.f32.mrf.mxu0
    %v626 = vadd.f32 0.0, %v625
    %v627 = vpop.f32.mrf.mxu0
    %v628 = vpop.f32.mrf.mxu0
    %v629 = vpop.f32.mrf.mxu0
    %630 = vdwg.mxu0
    %v631 = vrcp.pop %v581
    %v632 = vmul.f32 %v626, %v631
    %634 = vrot.lane.b32.xlu0 %v632, 24
    %v635 = vpop.permute.xlu0 %634
    %vm637 = vcmask 261312
    %638 = vst.msk [vmem:[#allocation2] sm:$0xff] %vm637, %v635
    %s639 = scalar_lea.vmem [#allocation6], 1
    %v640 = vld [vmem:[%s639] sm:$0x1]
    %v642 = vlaneseq
    %v643 = vshrl.u32 %v642, 7
    %v644 = vsub.s32 0, %v643
    %v645 = vrot.slane %v640, %v644
    %v647 = vpack.c.bf16 %v160, %v160
    %649 = vrot.lane.b32.xlu0 %v647, 96
    %v650 = vpop.permute.xlu0 %649
    %v652 = vsel %vm182, %v647, 0
    %v655 = vsel %vm182, %v650, 0
    %657 = vmatprep.subr.bf16.mxu0 0
    %658 = vmatpush1.bf16.xpose.msra.mxu0 0
    %659 = vmatprep.subr.bf16.mxu0 0
    %660 = vmatpush1.bf16.xpose.msra.mxu0 0
    %661 = vmatprep.subr.bf16.mxu0 0
    %662 = vmatpush1.bf16.xpose.msra.mxu0 0
    %663 = vmatprep.subr.bf16.mxu0 0
    %664 = vmatpush1.bf16.xpose.msra.mxu0 0
    %665 = vmatprep.subr.bf16.mxu0 0
    %666 = vmatpush1.bf16.xpose.msra.mxu0 0
    %667 = vmatprep.subr.bf16.mxu0 0
    %668 = vmatpush1.bf16.xpose.msra.mxu0 0
    %669 = vmatprep.subr.bf16.mxu0 0
    %670 = vmatpush1.bf16.xpose.msra.mxu0 0
    %671 = vmatprep.subr.bf16.mxu0 0
    %672 = vmatpush1.bf16.xpose.msra.mxu0 %v655
    %673 = vmatprep.subr.bf16.mxu0 0
    %674 = vmatpush2.bf16.xpose.msra.mxu0 0
    %675 = vmatprep.subr.bf16.mxu0 0
    %676 = vmatpush2.bf16.xpose.msra.mxu0 0
    %677 = vmatprep.subr.bf16.mxu0 0
    %678 = vmatpush2.bf16.xpose.msra.mxu0 0
    %679 = vmatprep.subr.bf16.mxu0 0
    %680 = vmatpush2.bf16.xpose.msra.mxu0 0
    %681 = vmatprep.subr.bf16.mxu0 0
    %682 = vmatpush2.bf16.xpose.msra.mxu0 0
    %683 = vmatprep.subr.bf16.mxu0 0
    %684 = vmatpush2.bf16.xpose.msra.mxu0 0
    %685 = vmatprep.subr.bf16.mxu0 0
    %686 = vmatpush2.bf16.xpose.msra.mxu0 0
    %687 = vmatprep.subr.bf16.mxu0 0
    %688 = vmatpush2.bf16.xpose.msra.mxu0 0
    %689 = vmatprep.mubr.bf16.mxu0 0
    %690 = vmatmul.mubr.bf16.gmra.mxu0 %v652
    %v691 = vpop.f32.mrf.mxu0
    %v692 = vadd.f32 %v645, %v691
    %v693 = vpop.f32.mrf.mxu0
    %v694 = vpop.f32.mrf.mxu0
    %v695 = vpop.f32.mrf.mxu0
    %696 = vdwg.mxu0
    %v697 = vsel %vm182, %v692, -inf
    %698 = vmax.xlane.f32.xlu0 %v697
    %v699 = vpop.xlane.xlu0 %698
    %v700 = vsub.f32 %v692, %v699
    %v701 = vmul.f32 %v700, 1.442695
    %v702 = vpow.pop %v701
    %v703 = vsel %vm182, %v702, 0.0
    %704 = vadd.xlane.f32.xlu0 %v703
    %v705 = vpop.xlane.xlu0 %704
    %v706 = vpack.c.bf16 %v702, %v702
    %707 = vrot.lane.b32.xlu0 %v647, 64
    %v708 = vpop.permute.xlu0 %707
    %v710 = vsel %vm182, %v706, 0
    %v713 = vsel %vm244, %v708, 0
    %715 = vmatprep.subr.bf16.mxu0 0
    %716 = vmatpush1.bf16.msra.mxu0 0
    %717 = vmatprep.subr.bf16.mxu0 0
    %718 = vmatpush1.bf16.msra.mxu0 0
    %719 = vmatprep.subr.bf16.mxu0 0
    %720 = vmatpush1.bf16.msra.mxu0 0
    %721 = vmatprep.subr.bf16.mxu0 0
    %722 = vmatpush1.bf16.msra.mxu0 0
    %723 = vmatprep.subr.bf16.mxu0 0
    %724 = vmatpush1.bf16.msra.mxu0 0
    %725 = vmatprep.subr.bf16.mxu0 0
    %726 = vmatpush1.bf16.msra.mxu0 0
    %727 = vmatprep.subr.bf16.mxu0 0
    %728 = vmatpush1.bf16.msra.mxu0 0
    %729 = vmatprep.subr.bf16.mxu0 0
    %730 = vmatpush1.bf16.msra.mxu0 %v713
    %731 = vmatprep.subr.bf16.mxu0 0
    %732 = vmatpush2.bf16.msra.mxu0 0
    %733 = vmatprep.subr.bf16.mxu0 0
    %734 = vmatpush2.bf16.msra.mxu0 0
    %735 = vmatprep.subr.bf16.mxu0 0
    %736 = vmatpush2.bf16.msra.mxu0 0
    %737 = vmatprep.subr.bf16.mxu0 0
    %738 = vmatpush2.bf16.msra.mxu0 0
    %739 = vmatprep.subr.bf16.mxu0 0
    %740 = vmatpush2.bf16.msra.mxu0 0
    %741 = vmatprep.subr.bf16.mxu0 0
    %742 = vmatpush2.bf16.msra.mxu0 0
    %743 = vmatprep.subr.bf16.mxu0 0
    %744 = vmatpush2.bf16.msra.mxu0 0
    %745 = vmatprep.subr.bf16.mxu0 0
    %746 = vmatpush2.bf16.msra.mxu0 0
    %747 = vmatprep.mubr.bf16.mxu0 0
    %748 = vmatmul.mubr.bf16.gmra.mxu0 %v710
    %v749 = vpop.f32.mrf.mxu0
    %v750 = vadd.f32 0.0, %v749
    %v751 = vpop.f32.mrf.mxu0
    %v752 = vpop.f32.mrf.mxu0
    %v753 = vpop.f32.mrf.mxu0
    %754 = vdwg.mxu0
    %v755 = vrcp.pop %v705
    %v756 = vmul.f32 %v750, %v755
    %757 = vst.msk [vmem:[#allocation2 + $0x8] sm:$0xff] %vm182, %v756
    %758 = vrot.lane.b32.xlu0 %v647, 120
    %v759 = vpop.permute.xlu0 %758
    %760 = vrot.lane.b32.xlu0 %v647, 88
    %v761 = vpop.permute.xlu0 %760
    %v763 = vsel %vm182, %v759, 0
    %v766 = vsel %vm182, %v761, 0
    %768 = vmatprep.subr.bf16.mxu0 0
    %769 = vmatpush1.bf16.xpose.msra.mxu0 0
    %770 = vmatprep.subr.bf16.mxu0 0
    %771 = vmatpush1.bf16.xpose.msra.mxu0 0
    %772 = vmatprep.subr.bf16.mxu0 0
    %773 = vmatpush1.bf16.xpose.msra.mxu0 0
    %774 = vmatprep.subr.bf16.mxu0 0
    %775 = vmatpush1.bf16.xpose.msra.mxu0 0
    %776 = vmatprep.subr.bf16.mxu0 0
    %777 = vmatpush1.bf16.xpose.msra.mxu0 0
    %778 = vmatprep.subr.bf16.mxu0 0
    %779 = vmatpush1.bf16.xpose.msra.mxu0 0
    %780 = vmatprep.subr.bf16.mxu0 0
    %781 = vmatpush1.bf16.xpose.msra.mxu0 0
    %782 = vmatprep.subr.bf16.mxu0 0
    %783 = vmatpush1.bf16.xpose.msra.mxu0 %v766
    %784 = vmatprep.subr.bf16.mxu0 0
    %785 = vmatpush2.bf16.xpose.msra.mxu0 0
    %786 = vmatprep.subr.bf16.mxu0 0
    %787 = vmatpush2.bf16.xpose.msra.mxu0 0
    %788 = vmatprep.subr.bf16.mxu0 0
    %789 = vmatpush2.bf16.xpose.msra.mxu0 0
    %790 = vmatprep.subr.bf16.mxu0 0
    %791 = vmatpush2.bf16.xpose.msra.mxu0 0
    %792 = vmatprep.subr.bf16.mxu0 0
    %793 = vmatpush2.bf16.xpose.msra.mxu0 0
    %794 = vmatprep.subr.bf16.mxu0 0
    %795 = vmatpush2.bf16.xpose.msra.mxu0 0
    %796 = vmatprep.subr.bf16.mxu0 0
    %797 = vmatpush2.bf16.xpose.msra.mxu0 0
    %798 = vmatprep.subr.bf16.mxu0 0
    %799 = vmatpush2.bf16.xpose.msra.mxu0 0
    %800 = vmatprep.mubr.bf16.mxu0 0
    %801 = vmatmul.mubr.bf16.gmra.mxu0 %v763
    %v802 = vpop.f32.mrf.mxu0
    %v803 = vadd.f32 %v645, %v802
    %v804 = vpop.f32.mrf.mxu0
    %v805 = vpop.f32.mrf.mxu0
    %v806 = vpop.f32.mrf.mxu0
    %807 = vdwg.mxu0
    %v808 = vsel %vm182, %v803, -inf
    %809 = vmax.xlane.f32.xlu0 %v808
    %v810 = vpop.xlane.xlu0 %809
    %v811 = vsub.f32 %v803, %v810
    %v812 = vmul.f32 %v811, 1.442695
    %v813 = vpow.pop %v812
    %v814 = vsel %vm182, %v813, 0.0
    %815 = vadd.xlane.f32.xlu0 %v814
    %v816 = vpop.xlane.xlu0 %815
    %v817 = vpack.c.bf16 %v813, %v813
    %818 = vrot.lane.b32.xlu0 %v647, 56
    %v819 = vpop.permute.xlu0 %818
    %v821 = vsel %vm182, %v817, 0
    %v824 = vsel %vm244, %v819, 0
    %826 = vmatprep.subr.bf16.mxu0 0
    %827 = vmatpush1.bf16.msra.mxu0 0
    %828 = vmatprep.subr.bf16.mxu0 0
    %829 = vmatpush1.bf16.msra.mxu0 0
    %830 = vmatprep.subr.bf16.mxu0 0
    %831 = vmatpush1.bf16.msra.mxu0 0
    %832 = vmatprep.subr.bf16.mxu0 0
    %833 = vmatpush1.bf16.msra.mxu0 0
    %834 = vmatprep.subr.bf16.mxu0 0
    %835 = vmatpush1.bf16.msra.mxu0 0
    %836 = vmatprep.subr.bf16.mxu0 0
    %837 = vmatpush1.bf16.msra.mxu0 0
    %838 = vmatprep.subr.bf16.mxu0 0
    %839 = vmatpush1.bf16.msra.mxu0 0
    %840 = vmatprep.subr.bf16.mxu0 0
    %841 = vmatpush1.bf16.msra.mxu0 %v824
    %842 = vmatprep.subr.bf16.mxu0 0
    %843 = vmatpush2.bf16.msra.mxu0 0
    %844 = vmatprep.subr.bf16.mxu0 0
    %845 = vmatpush2.bf16.msra.mxu0 0
    %846 = vmatprep.subr.bf16.mxu0 0
    %847 = vmatpush2.bf16.msra.mxu0 0
    %848 = vmatprep.subr.bf16.mxu0 0
    %849 = vmatpush2.bf16.msra.mxu0 0
    %850 = vmatprep.subr.bf16.mxu0 0
    %851 = vmatpush2.bf16.msra.mxu0 0
    %852 = vmatprep.subr.bf16.mxu0 0
    %853 = vmatpush2.bf16.msra.mxu0 0
    %854 = vmatprep.subr.bf16.mxu0 0
    %855 = vmatpush2.bf16.msra.mxu0 0
    %856 = vmatprep.subr.bf16.mxu0 0
    %857 = vmatpush2.bf16.msra.mxu0 0
    %858 = vmatprep.mubr.bf16.mxu0 0
    %859 = vmatmul.mubr.bf16.gmra.mxu0 %v821
    %v860 = vpop.f32.mrf.mxu0
    %v861 = vadd.f32 0.0, %v860
    %v862 = vpop.f32.mrf.mxu0
    %v863 = vpop.f32.mrf.mxu0
    %v864 = vpop.f32.mrf.mxu0
    %865 = vdwg.mxu0
    %v866 = vrcp.pop %v816
    %v867 = vmul.f32 %v861, %v866
    %869 = vrot.lane.b32.xlu0 %v867, 8
    %v870 = vpop.permute.xlu0 %869
    %872 = vst.msk [vmem:[#allocation2 + $0x8] sm:$0xff] %vm405, %v870
    %873 = vrot.lane.b32.xlu0 %v647, 112
    %v874 = vpop.permute.xlu0 %873
    %875 = vrot.lane.b32.xlu0 %v647, 80
    %v876 = vpop.permute.xlu0 %875
    %v878 = vsel %vm182, %v874, 0
    %v881 = vsel %vm182, %v876, 0
    %883 = vmatprep.subr.bf16.mxu0 0
    %884 = vmatpush1.bf16.xpose.msra.mxu0 0
    %885 = vmatprep.subr.bf16.mxu0 0
    %886 = vmatpush1.bf16.xpose.msra.mxu0 0
    %887 = vmatprep.subr.bf16.mxu0 0
    %888 = vmatpush1.bf16.xpose.msra.mxu0 0
    %889 = vmatprep.subr.bf16.mxu0 0
    %890 = vmatpush1.bf16.xpose.msra.mxu0 0
    %891 = vmatprep.subr.bf16.mxu0 0
    %892 = vmatpush1.bf16.xpose.msra.mxu0 0
    %893 = vmatprep.subr.bf16.mxu0 0
    %894 = vmatpush1.bf16.xpose.msra.mxu0 0
    %895 = vmatprep.subr.bf16.mxu0 0
    %896 = vmatpush1.bf16.xpose.msra.mxu0 0
    %897 = vmatprep.subr.bf16.mxu0 0
    %898 = vmatpush1.bf16.xpose.msra.mxu0 %v881
    %899 = vmatprep.subr.bf16.mxu0 0
    %900 = vmatpush2.bf16.xpose.msra.mxu0 0
    %901 = vmatprep.subr.bf16.mxu0 0
    %902 = vmatpush2.bf16.xpose.msra.mxu0 0
    %903 = vmatprep.subr.bf16.mxu0 0
    %904 = vmatpush2.bf16.xpose.msra.mxu0 0
    %905 = vmatprep.subr.bf16.mxu0 0
    %906 = vmatpush2.bf16.xpose.msra.mxu0 0
    %907 = vmatprep.subr.bf16.mxu0 0
    %908 = vmatpush2.bf16.xpose.msra.mxu0 0
    %909 = vmatprep.subr.bf16.mxu0 0
    %910 = vmatpush2.bf16.xpose.msra.mxu0 0
    %911 = vmatprep.subr.bf16.mxu0 0
    %912 = vmatpush2.bf16.xpose.msra.mxu0 0
    %913 = vmatprep.subr.bf16.mxu0 0
    %914 = vmatpush2.bf16.xpose.msra.mxu0 0
    %915 = vmatprep.mubr.bf16.mxu0 0
    %916 = vmatmul.mubr.bf16.gmra.mxu0 %v878
    %v917 = vpop.f32.mrf.mxu0
    %v918 = vadd.f32 %v645, %v917
    %v919 = vpop.f32.mrf.mxu0
    %v920 = vpop.f32.mrf.mxu0
    %v921 = vpop.f32.mrf.mxu0
    %922 = vdwg.mxu0
    %v923 = vsel %vm182, %v918, -inf
    %924 = vmax.xlane.f32.xlu0 %v923
    %v925 = vpop.xlane.xlu0 %924
    %v926 = vsub.f32 %v918, %v925
    %v927 = vmul.f32 %v926, 1.442695
    %v928 = vpow.pop %v927
    %v929 = vsel %vm182, %v928, 0.0
    %930 = vadd.xlane.f32.xlu0 %v929
    %v931 = vpop.xlane.xlu0 %930
    %v932 = vpack.c.bf16 %v928, %v928
    %933 = vrot.lane.b32.xlu0 %v647, 48
    %v934 = vpop.permute.xlu0 %933
    %v936 = vsel %vm182, %v932, 0
    %v939 = vsel %vm244, %v934, 0
    %941 = vmatprep.subr.bf16.mxu0 0
    %942 = vmatpush1.bf16.msra.mxu0 0
    %943 = vmatprep.subr.bf16.mxu0 0
    %944 = vmatpush1.bf16.msra.mxu0 0
    %945 = vmatprep.subr.bf16.mxu0 0
    %946 = vmatpush1.bf16.msra.mxu0 0
    %947 = vmatprep.subr.bf16.mxu0 0
    %948 = vmatpush1.bf16.msra.mxu0 0
    %949 = vmatprep.subr.bf16.mxu0 0
    %950 = vmatpush1.bf16.msra.mxu0 0
    %951 = vmatprep.subr.bf16.mxu0 0
    %952 = vmatpush1.bf16.msra.mxu0 0
    %953 = vmatprep.subr.bf16.mxu0 0
    %954 = vmatpush1.bf16.msra.mxu0 0
    %955 = vmatprep.subr.bf16.mxu0 0
    %956 = vmatpush1.bf16.msra.mxu0 %v939
    %957 = vmatprep.subr.bf16.mxu0 0
    %958 = vmatpush2.bf16.msra.mxu0 0
    %959 = vmatprep.subr.bf16.mxu0 0
    %960 = vmatpush2.bf16.msra.mxu0 0
    %961 = vmatprep.subr.bf16.mxu0 0
    %962 = vmatpush2.bf16.msra.mxu0 0
    %963 = vmatprep.subr.bf16.mxu0 0
    %964 = vmatpush2.bf16.msra.mxu0 0
    %965 = vmatprep.subr.bf16.mxu0 0
    %966 = vmatpush2.bf16.msra.mxu0 0
    %967 = vmatprep.subr.bf16.mxu0 0
    %968 = vmatpush2.bf16.msra.mxu0 0
    %969 = vmatprep.subr.bf16.mxu0 0
    %970 = vmatpush2.bf16.msra.mxu0 0
    %971 = vmatprep.subr.bf16.mxu0 0
    %972 = vmatpush2.bf16.msra.mxu0 0
    %973 = vmatprep.mubr.bf16.mxu0 0
    %974 = vmatmul.mubr.bf16.gmra.mxu0 %v936
    %v975 = vpop.f32.mrf.mxu0
    %v976 = vadd.f32 0.0, %v975
    %v977 = vpop.f32.mrf.mxu0
    %v978 = vpop.f32.mrf.mxu0
    %v979 = vpop.f32.mrf.mxu0
    %980 = vdwg.mxu0
    %v981 = vrcp.pop %v931
    %v982 = vmul.f32 %v976, %v981
    %984 = vrot.lane.b32.xlu0 %v982, 16
    %v985 = vpop.permute.xlu0 %984
    %987 = vst.msk [vmem:[#allocation2 + $0x8] sm:$0xff] %vm521, %v985
    %988 = vrot.lane.b32.xlu0 %v647, 104
    %v989 = vpop.permute.xlu0 %988
    %990 = vrot.lane.b32.xlu0 %v647, 72
    %v991 = vpop.permute.xlu0 %990
    %v993 = vsel %vm182, %v989, 0
    %v996 = vsel %vm182, %v991, 0
    %998 = vmatprep.subr.bf16.mxu0 0
    %999 = vmatpush1.bf16.xpose.msra.mxu0 0
    %1000 = vmatprep.subr.bf16.mxu0 0
    %1001 = vmatpush1.bf16.xpose.msra.mxu0 0
    %1002 = vmatprep.subr.bf16.mxu0 0
    %1003 = vmatpush1.bf16.xpose.msra.mxu0 0
    %1004 = vmatprep.subr.bf16.mxu0 0
    %1005 = vmatpush1.bf16.xpose.msra.mxu0 0
    %1006 = vmatprep.subr.bf16.mxu0 0
    %1007 = vmatpush1.bf16.xpose.msra.mxu0 0
    %1008 = vmatprep.subr.bf16.mxu0 0
    %1009 = vmatpush1.bf16.xpose.msra.mxu0 0
    %1010 = vmatprep.subr.bf16.mxu0 0
    %1011 = vmatpush1.bf16.xpose.msra.mxu0 0
    %1012 = vmatprep.subr.bf16.mxu0 0
    %1013 = vmatpush1.bf16.xpose.msra.mxu0 %v996
    %1014 = vmatprep.subr.bf16.mxu0 0
    %1015 = vmatpush2.bf16.xpose.msra.mxu0 0
    %1016 = vmatprep.subr.bf16.mxu0 0
    %1017 = vmatpush2.bf16.xpose.msra.mxu0 0
    %1018 = vmatprep.subr.bf16.mxu0 0
    %1019 = vmatpush2.bf16.xpose.msra.mxu0 0
    %1020 = vmatprep.subr.bf16.mxu0 0
    %1021 = vmatpush2.bf16.xpose.msra.mxu0 0
    %1022 = vmatprep.subr.bf16.mxu0 0
    %1023 = vmatpush2.bf16.xpose.msra.mxu0 0
    %1024 = vmatprep.subr.bf16.mxu0 0
    %1025 = vmatpush2.bf16.xpose.msra.mxu0 0
    %1026 = vmatprep.subr.bf16.mxu0 0
    %1027 = vmatpush2.bf16.xpose.msra.mxu0 0
    %1028 = vmatprep.subr.bf16.mxu0 0
    %1029 = vmatpush2.bf16.xpose.msra.mxu0 0
    %1030 = vmatprep.mubr.bf16.mxu0 0
    %1031 = vmatmul.mubr.bf16.gmra.mxu0 %v993
    %v1032 = vpop.f32.mrf.mxu0
    %v1033 = vadd.f32 %v645, %v1032
    %v1034 = vpop.f32.mrf.mxu0
    %v1035 = vpop.f32.mrf.mxu0
    %v1036 = vpop.f32.mrf.mxu0
    %1037 = vdwg.mxu0
    %v1038 = vsel %vm182, %v1033, -inf
    %1039 = vmax.xlane.f32.xlu0 %v1038
    %v1040 = vpop.xlane.xlu0 %1039
    %v1041 = vsub.f32 %v1033, %v1040
    %v1042 = vmul.f32 %v1041, 1.442695
    %v1043 = vpow.pop %v1042
    %v1044 = vsel %vm182, %v1043, 0.0
    %1045 = vadd.xlane.f32.xlu0 %v1044
    %v1046 = vpop.xlane.xlu0 %1045
    %v1047 = vpack.c.bf16 %v1043, %v1043
    %1048 = vrot.lane.b32.xlu0 %v647, 40
    %v1049 = vpop.permute.xlu0 %1048
    %v1051 = vsel %vm182, %v1047, 0
    %v1054 = vsel %vm244, %v1049, 0
    %1056 = vmatprep.subr.bf16.mxu0 0
    %1057 = vmatpush1.bf16.msra.mxu0 0
    %1058 = vmatprep.subr.bf16.mxu0 0
    %1059 = vmatpush1.bf16.msra.mxu0 0
    %1060 = vmatprep.subr.bf16.mxu0 0
    %1061 = vmatpush1.bf16.msra.mxu0 0
    %1062 = vmatprep.subr.bf16.mxu0 0
    %1063 = vmatpush1.bf16.msra.mxu0 0
    %1064 = vmatprep.subr.bf16.mxu0 0
    %1065 = vmatpush1.bf16.msra.mxu0 0
    %1066 = vmatprep.subr.bf16.mxu0 0
    %1067 = vmatpush1.bf16.msra.mxu0 0
    %1068 = vmatprep.subr.bf16.mxu0 0
    %1069 = vmatpush1.bf16.msra.mxu0 0
    %1070 = vmatprep.subr.bf16.mxu0 0
    %1071 = vmatpush1.bf16.msra.mxu0 %v1054
    %1072 = vmatprep.subr.bf16.mxu0 0
    %1073 = vmatpush2.bf16.msra.mxu0 0
    %1074 = vmatprep.subr.bf16.mxu0 0
    %1075 = vmatpush2.bf16.msra.mxu0 0
    %1076 = vmatprep.subr.bf16.mxu0 0
    %1077 = vmatpush2.bf16.msra.mxu0 0
    %1078 = vmatprep.subr.bf16.mxu0 0
    %1079 = vmatpush2.bf16.msra.mxu0 0
    %1080 = vmatprep.subr.bf16.mxu0 0
    %1081 = vmatpush2.bf16.msra.mxu0 0
    %1082 = vmatprep.subr.bf16.mxu0 0
    %1083 = vmatpush2.bf16.msra.mxu0 0
    %1084 = vmatprep.subr.bf16.mxu0 0
    %1085 = vmatpush2.bf16.msra.mxu0 0
    %1086 = vmatprep.subr.bf16.mxu0 0
    %1087 = vmatpush2.bf16.msra.mxu0 0
    %1088 = vmatprep.mubr.bf16.mxu0 0
    %1089 = vmatmul.mubr.bf16.gmra.mxu0 %v1051
    %v1090 = vpop.f32.mrf.mxu0
    %v1091 = vadd.f32 0.0, %v1090
    %v1092 = vpop.f32.mrf.mxu0
    %v1093 = vpop.f32.mrf.mxu0
    %v1094 = vpop.f32.mrf.mxu0
    %1095 = vdwg.mxu0
    %v1096 = vrcp.pop %v1046
    %v1097 = vmul.f32 %v1091, %v1096
    %1099 = vrot.lane.b32.xlu0 %v1097, 24
    %v1100 = vpop.permute.xlu0 %1099
    %1102 = vst.msk [vmem:[#allocation2 + $0x8] sm:$0xff] %vm637, %v1100
    %s1103 = scalar_lea.vmem [#allocation6], 2
    %v1104 = vld [vmem:[%s1103] sm:$0x1]
    %v1106 = vlaneseq
    %v1107 = vshrl.u32 %v1106, 7
    %v1108 = vsub.s32 0, %v1107
    %v1109 = vrot.slane %v1104, %v1108
    %v1111 = vpack.c.bf16 %v165, %v165
    %1113 = vrot.lane.b32.xlu0 %v1111, 96
    %v1114 = vpop.permute.xlu0 %1113
    %v1116 = vsel %vm182, %v1111, 0
    %v1119 = vsel %vm182, %v1114, 0
    %1121 = vmatprep.subr.bf16.mxu0 0
    %1122 = vmatpush1.bf16.xpose.msra.mxu0 0
    %1123 = vmatprep.subr.bf16.mxu0 0
    %1124 = vmatpush1.bf16.xpose.msra.mxu0 0
    %1125 = vmatprep.subr.bf16.mxu0 0
    %1126 = vmatpush1.bf16.xpose.msra.mxu0 0
    %1127 = vmatprep.subr.bf16.mxu0 0
    %1128 = vmatpush1.bf16.xpose.msra.mxu0 0
    %1129 = vmatprep.subr.bf16.mxu0 0
    %1130 = vmatpush1.bf16.xpose.msra.mxu0 0
    %1131 = vmatprep.subr.bf16.mxu0 0
    %1132 = vmatpush1.bf16.xpose.msra.mxu0 0
    %1133 = vmatprep.subr.bf16.mxu0 0
    %1134 = vmatpush1.bf16.xpose.msra.mxu0 0
    %1135 = vmatprep.subr.bf16.mxu0 0
    %1136 = vmatpush1.bf16.xpose.msra.mxu0 %v1119
    %1137 = vmatprep.subr.bf16.mxu0 0
    %1138 = vmatpush2.bf16.xpose.msra.mxu0 0
    %1139 = vmatprep.subr.bf16.mxu0 0
    %1140 = vmatpush2.bf16.xpose.msra.mxu0 0
    %1141 = vmatprep.subr.bf16.mxu0 0
    %1142 = vmatpush2.bf16.xpose.msra.mxu0 0
    %1143 = vmatprep.subr.bf16.mxu0 0
    %1144 = vmatpush2.bf16.xpose.msra.mxu0 0
    %1145 = vmatprep.subr.bf16.mxu0 0
    %1146 = vmatpush2.bf16.xpose.msra.mxu0 0
    %1147 = vmatprep.subr.bf16.mxu0 0
    %1148 = vmatpush2.bf16.xpose.msra.mxu0 0
    %1149 = vmatprep.subr.bf16.mxu0 0
    %1150 = vmatpush2.bf16.xpose.msra.mxu0 0
    %1151 = vmatprep.subr.bf16.mxu0 0
    %1152 = vmatpush2.bf16.xpose.msra.mxu0 0
    %1153 = vmatprep.mubr.bf16.mxu0 0
    %1154 = vmatmul.mubr.bf16.gmra.mxu0 %v1116
    %v1155 = vpop.f32.mrf.mxu0
    %v1156 = vadd.f32 %v1109, %v1155
    %v1157 = vpop.f32.mrf.mxu0
    %v1158 = vpop.f32.mrf.mxu0
    %v1159 = vpop.f32.mrf.mxu0
    %1160 = vdwg.mxu0
    %v1161 = vsel %vm182, %v1156, -inf
    %1162 = vmax.xlane.f32.xlu0 %v1161
    %v1163 = vpop.xlane.xlu0 %1162
    %v1164 = vsub.f32 %v1156, %v1163
    %v1165 = vmul.f32 %v1164, 1.442695
    %v1166 = vpow.pop %v1165
    %v1167 = vsel %vm182, %v1166, 0.0
    %1168 = vadd.xlane.f32.xlu0 %v1167
    %v1169 = vpop.xlane.xlu0 %1168
    %v1170 = vpack.c.bf16 %v1166, %v1166
    %1171 = vrot.lane.b32.xlu0 %v1111, 64
    %v1172 = vpop.permute.xlu0 %1171
    %v1174 = vsel %vm182, %v1170, 0
    %v1177 = vsel %vm244, %v1172, 0
    %1179 = vmatprep.subr.bf16.mxu0 0
    %1180 = vmatpush1.bf16.msra.mxu0 0
    %1181 = vmatprep.subr.bf16.mxu0 0
    %1182 = vmatpush1.bf16.msra.mxu0 0
    %1183 = vmatprep.subr.bf16.mxu0 0
    %1184 = vmatpush1.bf16.msra.mxu0 0
    %1185 = vmatprep.subr.bf16.mxu0 0
    %1186 = vmatpush1.bf16.msra.mxu0 0
    %1187 = vmatprep.subr.bf16.mxu0 0
    %1188 = vmatpush1.bf16.msra.mxu0 0
    %1189 = vmatprep.subr.bf16.mxu0 0
    %1190 = vmatpush1.bf16.msra.mxu0 0
    %1191 = vmatprep.subr.bf16.mxu0 0
    %1192 = vmatpush1.bf16.msra.mxu0 0
    %1193 = vmatprep.subr.bf16.mxu0 0
    %1194 = vmatpush1.bf16.msra.mxu0 %v1177
    %1195 = vmatprep.subr.bf16.mxu0 0
    %1196 = vmatpush2.bf16.msra.mxu0 0
    %1197 = vmatprep.subr.bf16.mxu0 0
    %1198 = vmatpush2.bf16.msra.mxu0 0
    %1199 = vmatprep.subr.bf16.mxu0 0
    %1200 = vmatpush2.bf16.msra.mxu0 0
    %1201 = vmatprep.subr.bf16.mxu0 0
    %1202 = vmatpush2.bf16.msra.mxu0 0
    %1203 = vmatprep.subr.bf16.mxu0 0
    %1204 = vmatpush2.bf16.msra.mxu0 0
    %1205 = vmatprep.subr.bf16.mxu0 0
    %1206 = vmatpush2.bf16.msra.mxu0 0
    %1207 = vmatprep.subr.bf16.mxu0 0
    %1208 = vmatpush2.bf16.msra.mxu0 0
    %1209 = vmatprep.subr.bf16.mxu0 0
    %1210 = vmatpush2.bf16.msra.mxu0 0
    %1211 = vmatprep.mubr.bf16.mxu0 0
    %1212 = vmatmul.mubr.bf16.gmra.mxu0 %v1174
    %v1213 = vpop.f32.mrf.mxu0
    %v1214 = vadd.f32 0.0, %v1213
    %v1215 = vpop.f32.mrf.mxu0
    %v1216 = vpop.f32.mrf.mxu0
    %v1217 = vpop.f32.mrf.mxu0
    %1218 = vdwg.mxu0
    %v1219 = vrcp.pop %v1169
    %v1220 = vmul.f32 %v1214, %v1219
    %1221 = vst.msk [vmem:[#allocation2 + $0x10] sm:$0xff] %vm182, %v1220
    %1222 = vrot.lane.b32.xlu0 %v1111, 120
    %v1223 = vpop.permute.xlu0 %1222
    %1224 = vrot.lane.b32.xlu0 %v1111, 88
    %v1225 = vpop.permute.xlu0 %1224
    %v1227 = vsel %vm182, %v1223, 0
    %v1230 = vsel %vm182, %v1225, 0
    %1232 = vmatprep.subr.bf16.mxu0 0
    %1233 = vmatpush1.bf16.xpose.msra.mxu0 0
    %1234 = vmatprep.subr.bf16.mxu0 0
    %1235 = vmatpush1.bf16.xpose.msra.mxu0 0
    %1236 = vmatprep.subr.bf16.mxu0 0
    %1237 = vmatpush1.bf16.xpose.msra.mxu0 0
    %1238 = vmatprep.subr.bf16.mxu0 0
    %1239 = vmatpush1.bf16.xpose.msra.mxu0 0
    %1240 = vmatprep.subr.bf16.mxu0 0
    %1241 = vmatpush1.bf16.xpose.msra.mxu0 0
    %1242 = vmatprep.subr.bf16.mxu0 0
    %1243 = vmatpush1.bf16.xpose.msra.mxu0 0
    %1244 = vmatprep.subr.bf16.mxu0 0
    %1245 = vmatpush1.bf16.xpose.msra.mxu0 0
    %1246 = vmatprep.subr.bf16.mxu0 0
    %1247 = vmatpush1.bf16.xpose.msra.mxu0 %v1230
    %1248 = vmatprep.subr.bf16.mxu0 0
    %1249 = vmatpush2.bf16.xpose.msra.mxu0 0
    %1250 = vmatprep.subr.bf16.mxu0 0
    %1251 = vmatpush2.bf16.xpose.msra.mxu0 0
    %1252 = vmatprep.subr.bf16.mxu0 0
    %1253 = vmatpush2.bf16.xpose.msra.mxu0 0
    %1254 = vmatprep.subr.bf16.mxu0 0
    %1255 = vmatpush2.bf16.xpose.msra.mxu0 0
    %1256 = vmatprep.subr.bf16.mxu0 0
    %1257 = vmatpush2.bf16.xpose.msra.mxu0 0
    %1258 = vmatprep.subr.bf16.mxu0 0
    %1259 = vmatpush2.bf16.xpose.msra.mxu0 0
    %1260 = vmatprep.subr.bf16.mxu0 0
    %1261 = vmatpush2.bf16.xpose.msra.mxu0 0
    %1262 = vmatprep.subr.bf16.mxu0 0
    %1263 = vmatpush2.bf16.xpose.msra.mxu0 0
    %1264 = vmatprep.mubr.bf16.mxu0 0
    %1265 = vmatmul.mubr.bf16.gmra.mxu0 %v1227
    %v1266 = vpop.f32.mrf.mxu0
    %v1267 = vadd.f32 %v1109, %v1266
    %v1268 = vpop.f32.mrf.mxu0
    %v1269 = vpop.f32.mrf.mxu0
    %v1270 = vpop.f32.mrf.mxu0
    %1271 = vdwg.mxu0
    %v1272 = vsel %vm182, %v1267, -inf
    %1273 = vmax.xlane.f32.xlu0 %v1272
    %v1274 = vpop.xlane.xlu0 %1273
    %v1275 = vsub.f32 %v1267, %v1274
    %v1276 = vmul.f32 %v1275, 1.442695
    %v1277 = vpow.pop %v1276
    %v1278 = vsel %vm182, %v1277, 0.0
    %1279 = vadd.xlane.f32.xlu0 %v1278
    %v1280 = vpop.xlane.xlu0 %1279
    %v1281 = vpack.c.bf16 %v1277, %v1277
    %1282 = vrot.lane.b32.xlu0 %v1111, 56
    %v1283 = vpop.permute.xlu0 %1282
    %v1285 = vsel %vm182, %v1281, 0
    %v1288 = vsel %vm244, %v1283, 0
    %1290 = vmatprep.subr.bf16.mxu0 0
    %1291 = vmatpush1.bf16.msra.mxu0 0
    %1292 = vmatprep.subr.bf16.mxu0 0
    %1293 = vmatpush1.bf16.msra.mxu0 0
    %1294 = vmatprep.subr.bf16.mxu0 0
    %1295 = vmatpush1.bf16.msra.mxu0 0
    %1296 = vmatprep.subr.bf16.mxu0 0
    %1297 = vmatpush1.bf16.msra.mxu0 0
    %1298 = vmatprep.subr.bf16.mxu0 0
    %1299 = vmatpush1.bf16.msra.mxu0 0
    %1300 = vmatprep.subr.bf16.mxu0 0
    %1301 = vmatpush1.bf16.msra.mxu0 0
    %1302 = vmatprep.subr.bf16.mxu0 0
    %1303 = vmatpush1.bf16.msra.mxu0 0
    %1304 = vmatprep.subr.bf16.mxu0 0
    %1305 = vmatpush1.bf16.msra.mxu0 %v1288
    %1306 = vmatprep.subr.bf16.mxu0 0
    %1307 = vmatpush2.bf16.msra.mxu0 0
    %1308 = vmatprep.subr.bf16.mxu0 0
    %1309 = vmatpush2.bf16.msra.mxu0 0
    %1310 = vmatprep.subr.bf16.mxu0 0
    %1311 = vmatpush2.bf16.msra.mxu0 0
    %1312 = vmatprep.subr.bf16.mxu0 0
    %1313 = vmatpush2.bf16.msra.mxu0 0
    %1314 = vmatprep.subr.bf16.mxu0 0
    %1315 = vmatpush2.bf16.msra.mxu0 0
    %1316 = vmatprep.subr.bf16.mxu0 0
    %1317 = vmatpush2.bf16.msra.mxu0 0
    %1318 = vmatprep.subr.bf16.mxu0 0
    %1319 = vmatpush2.bf16.msra.mxu0 0
    %1320 = vmatprep.subr.bf16.mxu0 0
    %1321 = vmatpush2.bf16.msra.mxu0 0
    %1322 = vmatprep.mubr.bf16.mxu0 0
    %1323 = vmatmul.mubr.bf16.gmra.mxu0 %v1285
    %v1324 = vpop.f32.mrf.mxu0
    %v1325 = vadd.f32 0.0, %v1324
    %v1326 = vpop.f32.mrf.mxu0
    %v1327 = vpop.f32.mrf.mxu0
    %v1328 = vpop.f32.mrf.mxu0
    %1329 = vdwg.mxu0
    %v1330 = vrcp.pop %v1280
    %v1331 = vmul.f32 %v1325, %v1330
    %1333 = vrot.lane.b32.xlu0 %v1331, 8
    %v1334 = vpop.permute.xlu0 %1333
    %1336 = vst.msk [vmem:[#allocation2 + $0x10] sm:$0xff] %vm405, %v1334
    %1337 = vrot.lane.b32.xlu0 %v1111, 112
    %v1338 = vpop.permute.xlu0 %1337
    %1339 = vrot.lane.b32.xlu0 %v1111, 80
    %v1340 = vpop.permute.xlu0 %1339
    %v1342 = vsel %vm182, %v1338, 0
    %v1345 = vsel %vm182, %v1340, 0
    %1347 = vmatprep.subr.bf16.mxu0 0
    %1348 = vmatpush1.bf16.xpose.msra.mxu0 0
    %1349 = vmatprep.subr.bf16.mxu0 0
    %1350 = vmatpush1.bf16.xpose.msra.mxu0 0
    %1351 = vmatprep.subr.bf16.mxu0 0
    %1352 = vmatpush1.bf16.xpose.msra.mxu0 0
    %1353 = vmatprep.subr.bf16.mxu0 0
    %1354 = vmatpush1.bf16.xpose.msra.mxu0 0
    %1355 = vmatprep.subr.bf16.mxu0 0
    %1356 = vmatpush1.bf16.xpose.msra.mxu0 0
    %1357 = vmatprep.subr.bf16.mxu0 0
    %1358 = vmatpush1.bf16.xpose.msra.mxu0 0
    %1359 = vmatprep.subr.bf16.mxu0 0
    %1360 = vmatpush1.bf16.xpose.msra.mxu0 0
    %1361 = vmatprep.subr.bf16.mxu0 0
    %1362 = vmatpush1.bf16.xpose.msra.mxu0 %v1345
    %1363 = vmatprep.subr.bf16.mxu0 0
    %1364 = vmatpush2.bf16.xpose.msra.mxu0 0
    %1365 = vmatprep.subr.bf16.mxu0 0
    %1366 = vmatpush2.bf16.xpose.msra.mxu0 0
    %1367 = vmatprep.subr.bf16.mxu0 0
    %1368 = vmatpush2.bf16.xpose.msra.mxu0 0
    %1369 = vmatprep.subr.bf16.mxu0 0
    %1370 = vmatpush2.bf16.xpose.msra.mxu0 0
    %1371 = vmatprep.subr.bf16.mxu0 0
    %1372 = vmatpush2.bf16.xpose.msra.mxu0 0
    %1373 = vmatprep.subr.bf16.mxu0 0
    %1374 = vmatpush2.bf16.xpose.msra.mxu0 0
    %1375 = vmatprep.subr.bf16.mxu0 0
    %1376 = vmatpush2.bf16.xpose.msra.mxu0 0
    %1377 = vmatprep.subr.bf16.mxu0 0
    %1378 = vmatpush2.bf16.xpose.msra.mxu0 0
    %1379 = vmatprep.mubr.bf16.mxu0 0
    %1380 = vmatmul.mubr.bf16.gmra.mxu0 %v1342
    %v1381 = vpop.f32.mrf.mxu0
    %v1382 = vadd.f32 %v1109, %v1381
    %v1383 = vpop.f32.mrf.mxu0
    %v1384 = vpop.f32.mrf.mxu0
    %v1385 = vpop.f32.mrf.mxu0
    %1386 = vdwg.mxu0
    %v1387 = vsel %vm182, %v1382, -inf
    %1388 = vmax.xlane.f32.xlu0 %v1387
    %v1389 = vpop.xlane.xlu0 %1388
    %v1390 = vsub.f32 %v1382, %v1389
    %v1391 = vmul.f32 %v1390, 1.442695
    %v1392 = vpow.pop %v1391
    %v1393 = vsel %vm182, %v1392, 0.0
    %1394 = vadd.xlane.f32.xlu0 %v1393
    %v1395 = vpop.xlane.xlu0 %1394
    %v1396 = vpack.c.bf16 %v1392, %v1392
    %1397 = vrot.lane.b32.xlu0 %v1111, 48
    %v1398 = vpop.permute.xlu0 %1397
    %v1400 = vsel %vm182, %v1396, 0
    %v1403 = vsel %vm244, %v1398, 0
    %1405 = vmatprep.subr.bf16.mxu0 0
    %1406 = vmatpush1.bf16.msra.mxu0 0
    %1407 = vmatprep.subr.bf16.mxu0 0
    %1408 = vmatpush1.bf16.msra.mxu0 0
    %1409 = vmatprep.subr.bf16.mxu0 0
    %1410 = vmatpush1.bf16.msra.mxu0 0
    %1411 = vmatprep.subr.bf16.mxu0 0
    %1412 = vmatpush1.bf16.msra.mxu0 0
    %1413 = vmatprep.subr.bf16.mxu0 0
    %1414 = vmatpush1.bf16.msra.mxu0 0
    %1415 = vmatprep.subr.bf16.mxu0 0
    %1416 = vmatpush1.bf16.msra.mxu0 0
    %1417 = vmatprep.subr.bf16.mxu0 0
    %1418 = vmatpush1.bf16.msra.mxu0 0
    %1419 = vmatprep.subr.bf16.mxu0 0
    %1420 = vmatpush1.bf16.msra.mxu0 %v1403
    %1421 = vmatprep.subr.bf16.mxu0 0
    %1422 = vmatpush2.bf16.msra.mxu0 0
    %1423 = vmatprep.subr.bf16.mxu0 0
    %1424 = vmatpush2.bf16.msra.mxu0 0
    %1425 = vmatprep.subr.bf16.mxu0 0
    %1426 = vmatpush2.bf16.msra.mxu0 0
    %1427 = vmatprep.subr.bf16.mxu0 0
    %1428 = vmatpush2.bf16.msra.mxu0 0
    %1429 = vmatprep.subr.bf16.mxu0 0
    %1430 = vmatpush2.bf16.msra.mxu0 0
    %1431 = vmatprep.subr.bf16.mxu0 0
    %1432 = vmatpush2.bf16.msra.mxu0 0
    %1433 = vmatprep.subr.bf16.mxu0 0
    %1434 = vmatpush2.bf16.msra.mxu0 0
    %1435 = vmatprep.subr.bf16.mxu0 0
    %1436 = vmatpush2.bf16.msra.mxu0 0
    %1437 = vmatprep.mubr.bf16.mxu0 0
    %1438 = vmatmul.mubr.bf16.gmra.mxu0 %v1400
    %v1439 = vpop.f32.mrf.mxu0
    %v1440 = vadd.f32 0.0, %v1439
    %v1441 = vpop.f32.mrf.mxu0
    %v1442 = vpop.f32.mrf.mxu0
    %v1443 = vpop.f32.mrf.mxu0
    %1444 = vdwg.mxu0
    %v1445 = vrcp.pop %v1395
    %v1446 = vmul.f32 %v1440, %v1445
    %1448 = vrot.lane.b32.xlu0 %v1446, 16
    %v1449 = vpop.permute.xlu0 %1448
    %1451 = vst.msk [vmem:[#allocation2 + $0x10] sm:$0xff] %vm521, %v1449
    %1452 = vrot.lane.b32.xlu0 %v1111, 104
    %v1453 = vpop.permute.xlu0 %1452
    %1454 = vrot.lane.b32.xlu0 %v1111, 72
    %v1455 = vpop.permute.xlu0 %1454
    %v1457 = vsel %vm182, %v1453, 0
    %v1460 = vsel %vm182, %v1455, 0
    %1462 = vmatprep.subr.bf16.mxu0 0
    %1463 = vmatpush1.bf16.xpose.msra.mxu0 0
    %1464 = vmatprep.subr.bf16.mxu0 0
    %1465 = vmatpush1.bf16.xpose.msra.mxu0 0
    %1466 = vmatprep.subr.bf16.mxu0 0
    %1467 = vmatpush1.bf16.xpose.msra.mxu0 0
    %1468 = vmatprep.subr.bf16.mxu0 0
    %1469 = vmatpush1.bf16.xpose.msra.mxu0 0
    %1470 = vmatprep.subr.bf16.mxu0 0
    %1471 = vmatpush1.bf16.xpose.msra.mxu0 0
    %1472 = vmatprep.subr.bf16.mxu0 0
    %1473 = vmatpush1.bf16.xpose.msra.mxu0 0
    %1474 = vmatprep.subr.bf16.mxu0 0
    %1475 = vmatpush1.bf16.xpose.msra.mxu0 0
    %1476 = vmatprep.subr.bf16.mxu0 0
    %1477 = vmatpush1.bf16.xpose.msra.mxu0 %v1460
    %1478 = vmatprep.subr.bf16.mxu0 0
    %1479 = vmatpush2.bf16.xpose.msra.mxu0 0
    %1480 = vmatprep.subr.bf16.mxu0 0
    %1481 = vmatpush2.bf16.xpose.msra.mxu0 0
    %1482 = vmatprep.subr.bf16.mxu0 0
    %1483 = vmatpush2.bf16.xpose.msra.mxu0 0
    %1484 = vmatprep.subr.bf16.mxu0 0
    %1485 = vmatpush2.bf16.xpose.msra.mxu0 0
    %1486 = vmatprep.subr.bf16.mxu0 0
    %1487 = vmatpush2.bf16.xpose.msra.mxu0 0
    %1488 = vmatprep.subr.bf16.mxu0 0
    %1489 = vmatpush2.bf16.xpose.msra.mxu0 0
    %1490 = vmatprep.subr.bf16.mxu0 0
    %1491 = vmatpush2.bf16.xpose.msra.mxu0 0
    %1492 = vmatprep.subr.bf16.mxu0 0
    %1493 = vmatpush2.bf16.xpose.msra.mxu0 0
    %1494 = vmatprep.mubr.bf16.mxu0 0
    %1495 = vmatmul.mubr.bf16.gmra.mxu0 %v1457
    %v1496 = vpop.f32.mrf.mxu0
    %v1497 = vadd.f32 %v1109, %v1496
    %v1498 = vpop.f32.mrf.mxu0
    %v1499 = vpop.f32.mrf.mxu0
    %v1500 = vpop.f32.mrf.mxu0
    %1501 = vdwg.mxu0
    %v1502 = vsel %vm182, %v1497, -inf
    %1503 = vmax.xlane.f32.xlu0 %v1502
    %v1504 = vpop.xlane.xlu0 %1503
    %v1505 = vsub.f32 %v1497, %v1504
    %v1506 = vmul.f32 %v1505, 1.442695
    %v1507 = vpow.pop %v1506
    %v1508 = vsel %vm182, %v1507, 0.0
    %1509 = vadd.xlane.f32.xlu0 %v1508
    %v1510 = vpop.xlane.xlu0 %1509
    %v1511 = vpack.c.bf16 %v1507, %v1507
    %1512 = vrot.lane.b32.xlu0 %v1111, 40
    %v1513 = vpop.permute.xlu0 %1512
    %v1515 = vsel %vm182, %v1511, 0
    %v1518 = vsel %vm244, %v1513, 0
    %1520 = vmatprep.subr.bf16.mxu0 0
    %1521 = vmatpush1.bf16.msra.mxu0 0
    %1522 = vmatprep.subr.bf16.mxu0 0
    %1523 = vmatpush1.bf16.msra.mxu0 0
    %1524 = vmatprep.subr.bf16.mxu0 0
    %1525 = vmatpush1.bf16.msra.mxu0 0
    %1526 = vmatprep.subr.bf16.mxu0 0
    %1527 = vmatpush1.bf16.msra.mxu0 0
    %1528 = vmatprep.subr.bf16.mxu0 0
    %1529 = vmatpush1.bf16.msra.mxu0 0
    %1530 = vmatprep.subr.bf16.mxu0 0
    %1531 = vmatpush1.bf16.msra.mxu0 0
    %1532 = vmatprep.subr.bf16.mxu0 0
    %1533 = vmatpush1.bf16.msra.mxu0 0
    %1534 = vmatprep.subr.bf16.mxu0 0
    %1535 = vmatpush1.bf16.msra.mxu0 %v1518
    %1536 = vmatprep.subr.bf16.mxu0 0
    %1537 = vmatpush2.bf16.msra.mxu0 0
    %1538 = vmatprep.subr.bf16.mxu0 0
    %1539 = vmatpush2.bf16.msra.mxu0 0
    %1540 = vmatprep.subr.bf16.mxu0 0
    %1541 = vmatpush2.bf16.msra.mxu0 0
    %1542 = vmatprep.subr.bf16.mxu0 0
    %1543 = vmatpush2.bf16.msra.mxu0 0
    %1544 = vmatprep.subr.bf16.mxu0 0
    %1545 = vmatpush2.bf16.msra.mxu0 0
    %1546 = vmatprep.subr.bf16.mxu0 0
    %1547 = vmatpush2.bf16.msra.mxu0 0
    %1548 = vmatprep.subr.bf16.mxu0 0
    %1549 = vmatpush2.bf16.msra.mxu0 0
    %1550 = vmatprep.subr.bf16.mxu0 0
    %1551 = vmatpush2.bf16.msra.mxu0 0
    %1552 = vmatprep.mubr.bf16.mxu0 0
    %1553 = vmatmul.mubr.bf16.gmra.mxu0 %v1515
    %v1554 = vpop.f32.mrf.mxu0
    %v1555 = vadd.f32 0.0, %v1554
    %v1556 = vpop.f32.mrf.mxu0
    %v1557 = vpop.f32.mrf.mxu0
    %v1558 = vpop.f32.mrf.mxu0
    %1559 = vdwg.mxu0
    %v1560 = vrcp.pop %v1510
    %v1561 = vmul.f32 %v1555, %v1560
    %1563 = vrot.lane.b32.xlu0 %v1561, 24
    %v1564 = vpop.permute.xlu0 %1563
    %1566 = vst.msk [vmem:[#allocation2 + $0x10] sm:$0xff] %vm637, %v1564
    %s1567 = scalar_lea.vmem [#allocation6], 3
    %v1568 = vld [vmem:[%s1567] sm:$0x1]
    %v1570 = vlaneseq
    %v1571 = vshrl.u32 %v1570, 7
    %v1572 = vsub.s32 0, %v1571
    %v1573 = vrot.slane %v1568, %v1572
    %v1575 = vpack.c.bf16 %v168, %v168
    %1577 = vrot.lane.b32.xlu0 %v1575, 96
    %v1578 = vpop.permute.xlu0 %1577
    %v1580 = vsel %vm182, %v1575, 0
    %v1583 = vsel %vm182, %v1578, 0
    %1585 = vmatprep.subr.bf16.mxu0 0
    %1586 = vmatpush1.bf16.xpose.msra.mxu0 0
    %1587 = vmatprep.subr.bf16.mxu0 0
    %1588 = vmatpush1.bf16.xpose.msra.mxu0 0
    %1589 = vmatprep.subr.bf16.mxu0 0
    %1590 = vmatpush1.bf16.xpose.msra.mxu0 0
    %1591 = vmatprep.subr.bf16.mxu0 0
    %1592 = vmatpush1.bf16.xpose.msra.mxu0 0
    %1593 = vmatprep.subr.bf16.mxu0 0
    %1594 = vmatpush1.bf16.xpose.msra.mxu0 0
    %1595 = vmatprep.subr.bf16.mxu0 0
    %1596 = vmatpush1.bf16.xpose.msra.mxu0 0
    %1597 = vmatprep.subr.bf16.mxu0 0
    %1598 = vmatpush1.bf16.xpose.msra.mxu0 0
    %1599 = vmatprep.subr.bf16.mxu0 0
    %1600 = vmatpush1.bf16.xpose.msra.mxu0 %v1583
    %1601 = vmatprep.subr.bf16.mxu0 0
    %1602 = vmatpush2.bf16.xpose.msra.mxu0 0
    %1603 = vmatprep.subr.bf16.mxu0 0
    %1604 = vmatpush2.bf16.xpose.msra.mxu0 0
    %1605 = vmatprep.subr.bf16.mxu0 0
    %1606 = vmatpush2.bf16.xpose.msra.mxu0 0
    %1607 = vmatprep.subr.bf16.mxu0 0
    %1608 = vmatpush2.bf16.xpose.msra.mxu0 0
    %1609 = vmatprep.subr.bf16.mxu0 0
    %1610 = vmatpush2.bf16.xpose.msra.mxu0 0
    %1611 = vmatprep.subr.bf16.mxu0 0
    %1612 = vmatpush2.bf16.xpose.msra.mxu0 0
    %1613 = vmatprep.subr.bf16.mxu0 0
    %1614 = vmatpush2.bf16.xpose.msra.mxu0 0
    %1615 = vmatprep.subr.bf16.mxu0 0
    %1616 = vmatpush2.bf16.xpose.msra.mxu0 0
    %1617 = vmatprep.mubr.bf16.mxu0 0
    %1618 = vmatmul.mubr.bf16.gmra.mxu0 %v1580
    %v1619 = vpop.f32.mrf.mxu0
    %v1620 = vadd.f32 %v1573, %v1619
    %v1621 = vpop.f32.mrf.mxu0
    %v1622 = vpop.f32.mrf.mxu0
    %v1623 = vpop.f32.mrf.mxu0
    %1624 = vdwg.mxu0
    %v1625 = vsel %vm182, %v1620, -inf
    %1626 = vmax.xlane.f32.xlu0 %v1625
    %v1627 = vpop.xlane.xlu0 %1626
    %v1628 = vsub.f32 %v1620, %v1627
    %v1629 = vmul.f32 %v1628, 1.442695
    %v1630 = vpow.pop %v1629
    %v1631 = vsel %vm182, %v1630, 0.0
    %1632 = vadd.xlane.f32.xlu0 %v1631
    %v1633 = vpop.xlane.xlu0 %1632
    %v1634 = vpack.c.bf16 %v1630, %v1630
    %1635 = vrot.lane.b32.xlu0 %v1575, 64
    %v1636 = vpop.permute.xlu0 %1635
    %v1638 = vsel %vm182, %v1634, 0
    %v1641 = vsel %vm244, %v1636, 0
    %1643 = vmatprep.subr.bf16.mxu0 0
    %1644 = vmatpush1.bf16.msra.mxu0 0
    %1645 = vmatprep.subr.bf16.mxu0 0
    %1646 = vmatpush1.bf16.msra.mxu0 0
    %1647 = vmatprep.subr.bf16.mxu0 0
    %1648 = vmatpush1.bf16.msra.mxu0 0
    %1649 = vmatprep.subr.bf16.mxu0 0
    %1650 = vmatpush1.bf16.msra.mxu0 0
    %1651 = vmatprep.subr.bf16.mxu0 0
    %1652 = vmatpush1.bf16.msra.mxu0 0
    %1653 = vmatprep.subr.bf16.mxu0 0
    %1654 = vmatpush1.bf16.msra.mxu0 0
    %1655 = vmatprep.subr.bf16.mxu0 0
    %1656 = vmatpush1.bf16.msra.mxu0 0
    %1657 = vmatprep.subr.bf16.mxu0 0
    %1658 = vmatpush1.bf16.msra.mxu0 %v1641
    %1659 = vmatprep.subr.bf16.mxu0 0
    %1660 = vmatpush2.bf16.msra.mxu0 0
    %1661 = vmatprep.subr.bf16.mxu0 0
    %1662 = vmatpush2.bf16.msra.mxu0 0
    %1663 = vmatprep.subr.bf16.mxu0 0
    %1664 = vmatpush2.bf16.msra.mxu0 0
    %1665 = vmatprep.subr.bf16.mxu0 0
    %1666 = vmatpush2.bf16.msra.mxu0 0
    %1667 = vmatprep.subr.bf16.mxu0 0
    %1668 = vmatpush2.bf16.msra.mxu0 0
    %1669 = vmatprep.subr.bf16.mxu0 0
    %1670 = vmatpush2.bf16.msra.mxu0 0
    %1671 = vmatprep.subr.bf16.mxu0 0
    %1672 = vmatpush2.bf16.msra.mxu0 0
    %1673 = vmatprep.subr.bf16.mxu0 0
    %1674 = vmatpush2.bf16.msra.mxu0 0
    %1675 = vmatprep.mubr.bf16.mxu0 0
    %1676 = vmatmul.mubr.bf16.gmra.mxu0 %v1638
    %v1677 = vpop.f32.mrf.mxu0
    %v1678 = vadd.f32 0.0, %v1677
    %v1679 = vpop.f32.mrf.mxu0
    %v1680 = vpop.f32.mrf.mxu0
    %v1681 = vpop.f32.mrf.mxu0
    %1682 = vdwg.mxu0
    %v1683 = vrcp.pop %v1633
    %v1684 = vmul.f32 %v1678, %v1683
    %1685 = vst.msk [vmem:[#allocation2 + $0x18] sm:$0xff] %vm182, %v1684
    %1686 = vrot.lane.b32.xlu0 %v1575, 120
    %v1687 = vpop.permute.xlu0 %1686
    %1688 = vrot.lane.b32.xlu0 %v1575, 88
    %v1689 = vpop.permute.xlu0 %1688
    %v1691 = vsel %vm182, %v1687, 0
    %v1694 = vsel %vm182, %v1689, 0
    %1696 = vmatprep.subr.bf16.mxu0 0
    %1697 = vmatpush1.bf16.xpose.msra.mxu0 0
    %1698 = vmatprep.subr.bf16.mxu0 0
    %1699 = vmatpush1.bf16.xpose.msra.mxu0 0
    %1700 = vmatprep.subr.bf16.mxu0 0
    %1701 = vmatpush1.bf16.xpose.msra.mxu0 0
    %1702 = vmatprep.subr.bf16.mxu0 0
    %1703 = vmatpush1.bf16.xpose.msra.mxu0 0
    %1704 = vmatprep.subr.bf16.mxu0 0
    %1705 = vmatpush1.bf16.xpose.msra.mxu0 0
    %1706 = vmatprep.subr.bf16.mxu0 0
    %1707 = vmatpush1.bf16.xpose.msra.mxu0 0
    %1708 = vmatprep.subr.bf16.mxu0 0
    %1709 = vmatpush1.bf16.xpose.msra.mxu0 0
    %1710 = vmatprep.subr.bf16.mxu0 0
    %1711 = vmatpush1.bf16.xpose.msra.mxu0 %v1694
    %1712 = vmatprep.subr.bf16.mxu0 0
    %1713 = vmatpush2.bf16.xpose.msra.mxu0 0
    %1714 = vmatprep.subr.bf16.mxu0 0
    %1715 = vmatpush2.bf16.xpose.msra.mxu0 0
    %1716 = vmatprep.subr.bf16.mxu0 0
    %1717 = vmatpush2.bf16.xpose.msra.mxu0 0
    %1718 = vmatprep.subr.bf16.mxu0 0
    %1719 = vmatpush2.bf16.xpose.msra.mxu0 0
    %1720 = vmatprep.subr.bf16.mxu0 0
    %1721 = vmatpush2.bf16.xpose.msra.mxu0 0
    %1722 = vmatprep.subr.bf16.mxu0 0
    %1723 = vmatpush2.bf16.xpose.msra.mxu0 0
    %1724 = vmatprep.subr.bf16.mxu0 0
    %1725 = vmatpush2.bf16.xpose.msra.mxu0 0
    %1726 = vmatprep.subr.bf16.mxu0 0
    %1727 = vmatpush2.bf16.xpose.msra.mxu0 0
    %1728 = vmatprep.mubr.bf16.mxu0 0
    %1729 = vmatmul.mubr.bf16.gmra.mxu0 %v1691
    %v1730 = vpop.f32.mrf.mxu0
    %v1731 = vadd.f32 %v1573, %v1730
    %v1732 = vpop.f32.mrf.mxu0
    %v1733 = vpop.f32.mrf.mxu0
    %v1734 = vpop.f32.mrf.mxu0
    %1735 = vdwg.mxu0
    %v1736 = vsel %vm182, %v1731, -inf
    %1737 = vmax.xlane.f32.xlu0 %v1736
    %v1738 = vpop.xlane.xlu0 %1737
    %v1739 = vsub.f32 %v1731, %v1738
    %v1740 = vmul.f32 %v1739, 1.442695
    %v1741 = vpow.pop %v1740
    %v1742 = vsel %vm182, %v1741, 0.0
    %1743 = vadd.xlane.f32.xlu0 %v1742
    %v1744 = vpop.xlane.xlu0 %1743
    %v1745 = vpack.c.bf16 %v1741, %v1741
    %1746 = vrot.lane.b32.xlu0 %v1575, 56
    %v1747 = vpop.permute.xlu0 %1746
    %v1749 = vsel %vm182, %v1745, 0
    %v1752 = vsel %vm244, %v1747, 0
    %1754 = vmatprep.subr.bf16.mxu0 0
    %1755 = vmatpush1.bf16.msra.mxu0 0
    %1756 = vmatprep.subr.bf16.mxu0 0
    %1757 = vmatpush1.bf16.msra.mxu0 0
    %1758 = vmatprep.subr.bf16.mxu0 0
    %1759 = vmatpush1.bf16.msra.mxu0 0
    %1760 = vmatprep.subr.bf16.mxu0 0
    %1761 = vmatpush1.bf16.msra.mxu0 0
    %1762 = vmatprep.subr.bf16.mxu0 0
    %1763 = vmatpush1.bf16.msra.mxu0 0
    %1764 = vmatprep.subr.bf16.mxu0 0
    %1765 = vmatpush1.bf16.msra.mxu0 0
    %1766 = vmatprep.subr.bf16.mxu0 0
    %1767 = vmatpush1.bf16.msra.mxu0 0
    %1768 = vmatprep.subr.bf16.mxu0 0
    %1769 = vmatpush1.bf16.msra.mxu0 %v1752
    %1770 = vmatprep.subr.bf16.mxu0 0
    %1771 = vmatpush2.bf16.msra.mxu0 0
    %1772 = vmatprep.subr.bf16.mxu0 0
    %1773 = vmatpush2.bf16.msra.mxu0 0
    %1774 = vmatprep.subr.bf16.mxu0 0
    %1775 = vmatpush2.bf16.msra.mxu0 0
    %1776 = vmatprep.subr.bf16.mxu0 0
    %1777 = vmatpush2.bf16.msra.mxu0 0
    %1778 = vmatprep.subr.bf16.mxu0 0
    %1779 = vmatpush2.bf16.msra.mxu0 0
    %1780 = vmatprep.subr.bf16.mxu0 0
    %1781 = vmatpush2.bf16.msra.mxu0 0
    %1782 = vmatprep.subr.bf16.mxu0 0
    %1783 = vmatpush2.bf16.msra.mxu0 0
    %1784 = vmatprep.subr.bf16.mxu0 0
    %1785 = vmatpush2.bf16.msra.mxu0 0
    %1786 = vmatprep.mubr.bf16.mxu0 0
    %1787 = vmatmul.mubr.bf16.gmra.mxu0 %v1749
    %v1788 = vpop.f32.mrf.mxu0
    %v1789 = vadd.f32 0.0, %v1788
    %v1790 = vpop.f32.mrf.mxu0
    %v1791 = vpop.f32.mrf.mxu0
    %v1792 = vpop.f32.mrf.mxu0
    %1793 = vdwg.mxu0
    %v1794 = vrcp.pop %v1744
    %v1795 = vmul.f32 %v1789, %v1794
    %1797 = vrot.lane.b32.xlu0 %v1795, 8
    %v1798 = vpop.permute.xlu0 %1797
    %1800 = vst.msk [vmem:[#allocation2 + $0x18] sm:$0xff] %vm405, %v1798
    %1801 = vrot.lane.b32.xlu0 %v1575, 112
    %v1802 = vpop.permute.xlu0 %1801
    %1803 = vrot.lane.b32.xlu0 %v1575, 80
    %v1804 = vpop.permute.xlu0 %1803
    %v1806 = vsel %vm182, %v1802, 0
    %v1809 = vsel %vm182, %v1804, 0
    %1811 = vmatprep.subr.bf16.mxu0 0
    %1812 = vmatpush1.bf16.xpose.msra.mxu0 0
    %1813 = vmatprep.subr.bf16.mxu0 0
    %1814 = vmatpush1.bf16.xpose.msra.mxu0 0
    %1815 = vmatprep.subr.bf16.mxu0 0
    %1816 = vmatpush1.bf16.xpose.msra.mxu0 0
    %1817 = vmatprep.subr.bf16.mxu0 0
    %1818 = vmatpush1.bf16.xpose.msra.mxu0 0
    %1819 = vmatprep.subr.bf16.mxu0 0
    %1820 = vmatpush1.bf16.xpose.msra.mxu0 0
    %1821 = vmatprep.subr.bf16.mxu0 0
    %1822 = vmatpush1.bf16.xpose.msra.mxu0 0
    %1823 = vmatprep.subr.bf16.mxu0 0
    %1824 = vmatpush1.bf16.xpose.msra.mxu0 0
    %1825 = vmatprep.subr.bf16.mxu0 0
    %1826 = vmatpush1.bf16.xpose.msra.mxu0 %v1809
    %1827 = vmatprep.subr.bf16.mxu0 0
    %1828 = vmatpush2.bf16.xpose.msra.mxu0 0
    %1829 = vmatprep.subr.bf16.mxu0 0
    %1830 = vmatpush2.bf16.xpose.msra.mxu0 0
    %1831 = vmatprep.subr.bf16.mxu0 0
    %1832 = vmatpush2.bf16.xpose.msra.mxu0 0
    %1833 = vmatprep.subr.bf16.mxu0 0
    %1834 = vmatpush2.bf16.xpose.msra.mxu0 0
    %1835 = vmatprep.subr.bf16.mxu0 0
    %1836 = vmatpush2.bf16.xpose.msra.mxu0 0
    %1837 = vmatprep.subr.bf16.mxu0 0
    %1838 = vmatpush2.bf16.xpose.msra.mxu0 0
    %1839 = vmatprep.subr.bf16.mxu0 0
    %1840 = vmatpush2.bf16.xpose.msra.mxu0 0
    %1841 = vmatprep.subr.bf16.mxu0 0
    %1842 = vmatpush2.bf16.xpose.msra.mxu0 0
    %1843 = vmatprep.mubr.bf16.mxu0 0
    %1844 = vmatmul.mubr.bf16.gmra.mxu0 %v1806
    %v1845 = vpop.f32.mrf.mxu0
    %v1846 = vadd.f32 %v1573, %v1845
    %v1847 = vpop.f32.mrf.mxu0
    %v1848 = vpop.f32.mrf.mxu0
    %v1849 = vpop.f32.mrf.mxu0
    %1850 = vdwg.mxu0
    %v1851 = vsel %vm182, %v1846, -inf
    %1852 = vmax.xlane.f32.xlu0 %v1851
    %v1853 = vpop.xlane.xlu0 %1852
    %v1854 = vsub.f32 %v1846, %v1853
    %v1855 = vmul.f32 %v1854, 1.442695
    %v1856 = vpow.pop %v1855
    %v1857 = vsel %vm182, %v1856, 0.0
    %1858 = vadd.xlane.f32.xlu0 %v1857
    %v1859 = vpop.xlane.xlu0 %1858
    %v1860 = vpack.c.bf16 %v1856, %v1856
    %1861 = vrot.lane.b32.xlu0 %v1575, 48
    %v1862 = vpop.permute.xlu0 %1861
    %v1864 = vsel %vm182, %v1860, 0
    %v1867 = vsel %vm244, %v1862, 0
    %1869 = vmatprep.subr.bf16.mxu0 0
    %1870 = vmatpush1.bf16.msra.mxu0 0
    %1871 = vmatprep.subr.bf16.mxu0 0
    %1872 = vmatpush1.bf16.msra.mxu0 0
    %1873 = vmatprep.subr.bf16.mxu0 0
    %1874 = vmatpush1.bf16.msra.mxu0 0
    %1875 = vmatprep.subr.bf16.mxu0 0
    %1876 = vmatpush1.bf16.msra.mxu0 0
    %1877 = vmatprep.subr.bf16.mxu0 0
    %1878 = vmatpush1.bf16.msra.mxu0 0
    %1879 = vmatprep.subr.bf16.mxu0 0
    %1880 = vmatpush1.bf16.msra.mxu0 0
    %1881 = vmatprep.subr.bf16.mxu0 0
    %1882 = vmatpush1.bf16.msra.mxu0 0
    %1883 = vmatprep.subr.bf16.mxu0 0
    %1884 = vmatpush1.bf16.msra.mxu0 %v1867
    %1885 = vmatprep.subr.bf16.mxu0 0
    %1886 = vmatpush2.bf16.msra.mxu0 0
    %1887 = vmatprep.subr.bf16.mxu0 0
    %1888 = vmatpush2.bf16.msra.mxu0 0
    %1889 = vmatprep.subr.bf16.mxu0 0
    %1890 = vmatpush2.bf16.msra.mxu0 0
    %1891 = vmatprep.subr.bf16.mxu0 0
    %1892 = vmatpush2.bf16.msra.mxu0 0
    %1893 = vmatprep.subr.bf16.mxu0 0
    %1894 = vmatpush2.bf16.msra.mxu0 0
    %1895 = vmatprep.subr.bf16.mxu0 0
    %1896 = vmatpush2.bf16.msra.mxu0 0
    %1897 = vmatprep.subr.bf16.mxu0 0
    %1898 = vmatpush2.bf16.msra.mxu0 0
    %1899 = vmatprep.subr.bf16.mxu0 0
    %1900 = vmatpush2.bf16.msra.mxu0 0
    %1901 = vmatprep.mubr.bf16.mxu0 0
    %1902 = vmatmul.mubr.bf16.gmra.mxu0 %v1864
    %v1903 = vpop.f32.mrf.mxu0
    %v1904 = vadd.f32 0.0, %v1903
    %v1905 = vpop.f32.mrf.mxu0
    %v1906 = vpop.f32.mrf.mxu0
    %v1907 = vpop.f32.mrf.mxu0
    %1908 = vdwg.mxu0
    %v1909 = vrcp.pop %v1859
    %v1910 = vmul.f32 %v1904, %v1909
    %1912 = vrot.lane.b32.xlu0 %v1910, 16
    %v1913 = vpop.permute.xlu0 %1912
    %1915 = vst.msk [vmem:[#allocation2 + $0x18] sm:$0xff] %vm521, %v1913
    %1916 = vrot.lane.b32.xlu0 %v1575, 104
    %v1917 = vpop.permute.xlu0 %1916
    %1918 = vrot.lane.b32.xlu0 %v1575, 72
    %v1919 = vpop.permute.xlu0 %1918
    %v1921 = vsel %vm182, %v1917, 0
    %v1924 = vsel %vm182, %v1919, 0
    %1926 = vmatprep.subr.bf16.mxu0 0
    %1927 = vmatpush1.bf16.xpose.msra.mxu0 0
    %1928 = vmatprep.subr.bf16.mxu0 0
    %1929 = vmatpush1.bf16.xpose.msra.mxu0 0
    %1930 = vmatprep.subr.bf16.mxu0 0
    %1931 = vmatpush1.bf16.xpose.msra.mxu0 0
    %1932 = vmatprep.subr.bf16.mxu0 0
    %1933 = vmatpush1.bf16.xpose.msra.mxu0 0
    %1934 = vmatprep.subr.bf16.mxu0 0
    %1935 = vmatpush1.bf16.xpose.msra.mxu0 0
    %1936 = vmatprep.subr.bf16.mxu0 0
    %1937 = vmatpush1.bf16.xpose.msra.mxu0 0
    %1938 = vmatprep.subr.bf16.mxu0 0
    %1939 = vmatpush1.bf16.xpose.msra.mxu0 0
    %1940 = vmatprep.subr.bf16.mxu0 0
    %1941 = vmatpush1.bf16.xpose.msra.mxu0 %v1924
    %1942 = vmatprep.subr.bf16.mxu0 0
    %1943 = vmatpush2.bf16.xpose.msra.mxu0 0
    %1944 = vmatprep.subr.bf16.mxu0 0
    %1945 = vmatpush2.bf16.xpose.msra.mxu0 0
    %1946 = vmatprep.subr.bf16.mxu0 0
    %1947 = vmatpush2.bf16.xpose.msra.mxu0 0
    %1948 = vmatprep.subr.bf16.mxu0 0
    %1949 = vmatpush2.bf16.xpose.msra.mxu0 0
    %1950 = vmatprep.subr.bf16.mxu0 0
    %1951 = vmatpush2.bf16.xpose.msra.mxu0 0
    %1952 = vmatprep.subr.bf16.mxu0 0
    %1953 = vmatpush2.bf16.xpose.msra.mxu0 0
    %1954 = vmatprep.subr.bf16.mxu0 0
    %1955 = vmatpush2.bf16.xpose.msra.mxu0 0
    %1956 = vmatprep.subr.bf16.mxu0 0
    %1957 = vmatpush2.bf16.xpose.msra.mxu0 0
    %1958 = vmatprep.mubr.bf16.mxu0 0
    %1959 = vmatmul.mubr.bf16.gmra.mxu0 %v1921
    %v1960 = vpop.f32.mrf.mxu0
    %v1961 = vadd.f32 %v1573, %v1960
    %v1962 = vpop.f32.mrf.mxu0
    %v1963 = vpop.f32.mrf.mxu0
    %v1964 = vpop.f32.mrf.mxu0
    %1965 = vdwg.mxu0
    %v1966 = vsel %vm182, %v1961, -inf
    %1967 = vmax.xlane.f32.xlu0 %v1966
    %v1968 = vpop.xlane.xlu0 %1967
    %v1969 = vsub.f32 %v1961, %v1968
    %v1970 = vmul.f32 %v1969, 1.442695
    %v1971 = vpow.pop %v1970
    %v1972 = vsel %vm182, %v1971, 0.0
    %1973 = vadd.xlane.f32.xlu0 %v1972
    %v1974 = vpop.xlane.xlu0 %1973
    %v1975 = vpack.c.bf16 %v1971, %v1971
    %1976 = vrot.lane.b32.xlu0 %v1575, 40
    %v1977 = vpop.permute.xlu0 %1976
    %v1979 = vsel %vm182, %v1975, 0
    %v1982 = vsel %vm244, %v1977, 0
    %1984 = vmatprep.subr.bf16.mxu0 0
    %1985 = vmatpush1.bf16.msra.mxu0 0
    %1986 = vmatprep.subr.bf16.mxu0 0
    %1987 = vmatpush1.bf16.msra.mxu0 0
    %1988 = vmatprep.subr.bf16.mxu0 0
    %1989 = vmatpush1.bf16.msra.mxu0 0
    %1990 = vmatprep.subr.bf16.mxu0 0
    %1991 = vmatpush1.bf16.msra.mxu0 0
    %1992 = vmatprep.subr.bf16.mxu0 0
    %1993 = vmatpush1.bf16.msra.mxu0 0
    %1994 = vmatprep.subr.bf16.mxu0 0
    %1995 = vmatpush1.bf16.msra.mxu0 0
    %1996 = vmatprep.subr.bf16.mxu0 0
    %1997 = vmatpush1.bf16.msra.mxu0 0
    %1998 = vmatprep.subr.bf16.mxu0 0
    %1999 = vmatpush1.bf16.msra.mxu0 %v1982
    %2000 = vmatprep.subr.bf16.mxu0 0
    %2001 = vmatpush2.bf16.msra.mxu0 0
    %2002 = vmatprep.subr.bf16.mxu0 0
    %2003 = vmatpush2.bf16.msra.mxu0 0
    %2004 = vmatprep.subr.bf16.mxu0 0
    %2005 = vmatpush2.bf16.msra.mxu0 0
    %2006 = vmatprep.subr.bf16.mxu0 0
    %2007 = vmatpush2.bf16.msra.mxu0 0
    %2008 = vmatprep.subr.bf16.mxu0 0
    %2009 = vmatpush2.bf16.msra.mxu0 0
    %2010 = vmatprep.subr.bf16.mxu0 0
    %2011 = vmatpush2.bf16.msra.mxu0 0
    %2012 = vmatprep.subr.bf16.mxu0 0
    %2013 = vmatpush2.bf16.msra.mxu0 0
    %2014 = vmatprep.subr.bf16.mxu0 0
    %2015 = vmatpush2.bf16.msra.mxu0 0
    %2016 = vmatprep.mubr.bf16.mxu0 0
    %2017 = vmatmul.mubr.bf16.gmra.mxu0 %v1979
    %v2018 = vpop.f32.mrf.mxu0
    %v2019 = vadd.f32 0.0, %v2018
    %v2020 = vpop.f32.mrf.mxu0
    %v2021 = vpop.f32.mrf.mxu0
    %v2022 = vpop.f32.mrf.mxu0
    %2023 = vdwg.mxu0
    %v2024 = vrcp.pop %v1974
    %v2025 = vmul.f32 %v2019, %v2024
    %2027 = vrot.lane.b32.xlu0 %v2025, 24
    %v2028 = vpop.permute.xlu0 %2027
    %2030 = vst.msk [vmem:[#allocation2 + $0x18] sm:$0xff] %vm637, %v2028
    %v2031 = vld [vmem:[#allocation2] sm:$0xff]
    %v2032 = vld [vmem:[#allocation2 + $0x8] sm:$0xff]
    %v2033 = vld [vmem:[#allocation2 + $0x10] sm:$0xff]
    %v2034 = vld [vmem:[#allocation2 + $0x18] sm:$0xff]
    %v2035 = vpack.c.bf16 %v2032, %v2031
    %v2036 = vpack.c.bf16 %v2034, %v2033
    %v2037 = vld [vmem:[#allocation9] sm:$0xf]
    %v2038 = vld [vmem:[#allocation9 + $0x4] sm:$0xf]
    %v2039 = vld [vmem:[#allocation9 + $0x8] sm:$0xf]
    %v2040 = vld [vmem:[#allocation9 + $0xc] sm:$0xf]
    %v2041 = vld [vmem:[%s5] sm:$0x1]
    %v2043 = vlaneseq
    %v2044 = vshrl.u32 %v2043, 7
    %v2045 = vsub.s32 0, %v2044
    %v2046 = vrot.slane %v2041, %v2045
    %v2052 = vunpack.c.l.b16 %v2037
    %v2053 = vunpack.c.l.b16 %v2038
    %v2054 = vunpack.c.l.b16 %v2039
    %v2055 = vunpack.c.l.b16 %v2040
    %v2056 = vpack.c.b16 %v2053, %v2052
    %v2057 = vpack.c.b16 %v2055, %v2054
    %v2061 = vsel %vm115, %v2035, 0
    %v2064 = vsel %vm115, %v2036, 0
    %2066 = vmatprep.subr.bf16.mxu0 0
    %2067 = vmatpush1.bf16.msra.mxu0 0
    %2068 = vmatprep.subr.bf16.mxu0 0
    %2069 = vmatpush1.bf16.msra.mxu0 0
    %2070 = vmatprep.subr.bf16.mxu0 0
    %2071 = vmatpush1.bf16.msra.mxu0 0
    %2072 = vmatprep.subr.bf16.mxu0 0
    %2073 = vmatpush1.bf16.msra.mxu0 0
    %2074 = vmatprep.subr.bf16.mxu0 0
    %2075 = vmatpush1.bf16.msra.mxu0 0
    %2076 = vmatprep.subr.bf16.mxu0 0
    %2077 = vmatpush1.bf16.msra.mxu0 0
    %2078 = vmatprep.subr.bf16.mxu0 0
    %2079 = vmatpush1.bf16.msra.mxu0 %v2057
    %2080 = vmatprep.subr.bf16.mxu0 0
    %2081 = vmatpush1.bf16.msra.mxu0 %v2056
    %2082 = vmatprep.subr.bf16.mxu0 0
    %2083 = vmatpush2.bf16.msra.mxu0 0
    %2084 = vmatprep.subr.bf16.mxu0 0
    %2085 = vmatpush2.bf16.msra.mxu0 0
    %2086 = vmatprep.subr.bf16.mxu0 0
    %2087 = vmatpush2.bf16.msra.mxu0 0
    %2088 = vmatprep.subr.bf16.mxu0 0
    %2089 = vmatpush2.bf16.msra.mxu0 0
    %2090 = vmatprep.subr.bf16.mxu0 0
    %2091 = vmatpush2.bf16.msra.mxu0 0
    %2092 = vmatprep.subr.bf16.mxu0 0
    %2093 = vmatpush2.bf16.msra.mxu0 0
    %2094 = vmatprep.subr.bf16.mxu0 0
    %2095 = vmatpush2.bf16.msra.mxu0 0
    %2096 = vmatprep.subr.bf16.mxu0 0
    %2097 = vmatpush2.bf16.msra.mxu0 0
    %2098 = vmatprep.mubr.bf16.mxu0 0
    %2099 = vmatmul.mubr.bf16.gmra.mxu0 %v2061
    %v2100 = vpop.f32.mrf.mxu0
    %v2101 = vadd.f32 %v2046, %v2100
    %v2102 = vpop.f32.mrf.mxu0
    %v2103 = vpop.f32.mrf.mxu0
    %v2104 = vadd.f32 %v2046, %v2103
    %v2105 = vpop.f32.mrf.mxu0
    %2106 = vmatprep.mubr.bf16.mxu0 0
    %2107 = vmatmul.mubr.bf16.gmra.mxu0 %v2064
    %v2108 = vpop.f32.mrf.mxu0
    %v2109 = vadd.f32 %v2046, %v2108
    %v2110 = vpop.f32.mrf.mxu0
    %v2111 = vpop.f32.mrf.mxu0
    %v2112 = vadd.f32 %v2046, %v2111
    %v2113 = vpop.f32.mrf.mxu0
    %2114 = vdwg.mxu0
    %v2115 = vadd.f32 %v2101, %v86
    %v2116 = vadd.f32 %v2104, %v87
    %v2117 = vadd.f32 %v2109, %v88
    %v2118 = vadd.f32 %v2112, %v89
    %v2119 = vsel %vm115, %v2115, 0.0
    %2120 = vadd.xlane.f32.xlu0 %v2119
    %v2121 = vpop.xlane.xlu0 %2120
    %v2122 = vsel %vm115, %v2116, 0.0
    %2123 = vadd.xlane.f32.xlu0 %v2122
    %v2124 = vpop.xlane.xlu0 %2123
    %v2125 = vsel %vm115, %v2117, 0.0
    %2126 = vadd.xlane.f32.xlu0 %v2125
    %v2127 = vpop.xlane.xlu0 %2126
    %v2128 = vsel %vm115, %v2118, 0.0
    %2129 = vadd.xlane.f32.xlu0 %v2128
    %v2130 = vpop.xlane.xlu0 %2129
    %v2131 = vrcp.pop 32.0
    %v2132 = vmul.f32 %v2121, %v2131
    %v2133 = vmul.f32 %v2124, %v2131
    %v2134 = vmul.f32 %v2127, %v2131
    %v2135 = vmul.f32 %v2130, %v2131
    %v2136 = vsub.f32 %v2115, %v2132
    %v2137 = vsub.f32 %v2116, %v2133
    %v2138 = vsub.f32 %v2117, %v2134
    %v2139 = vsub.f32 %v2118, %v2135
    %v2140 = vmul.f32 %v2136, %v2136
    %v2141 = vmul.f32 %v2137, %v2137
    %v2142 = vmul.f32 %v2138, %v2138
    %v2143 = vmul.f32 %v2139, %v2139
    %v2144 = vsel %vm115, %v2140, 0.0
    %2145 = vadd.xlane.f32.xlu0 %v2144
    %v2146 = vpop.xlane.xlu0 %2145
    %v2147 = vsel %vm115, %v2141, 0.0
    %2148 = vadd.xlane.f32.xlu0 %v2147
    %v2149 = vpop.xlane.xlu0 %2148
    %v2150 = vsel %vm115, %v2142, 0.0
    %2151 = vadd.xlane.f32.xlu0 %v2150
    %v2152 = vpop.xlane.xlu0 %2151
    %v2153 = vsel %vm115, %v2143, 0.0
    %2154 = vadd.xlane.f32.xlu0 %v2153
    %v2155 = vpop.xlane.xlu0 %2154
    %v2156 = vmul.f32 %v2146, %v2131
    %v2157 = vmul.f32 %v2149, %v2131
    %v2158 = vmul.f32 %v2152, %v2131
    %v2159 = vmul.f32 %v2155, %v2131
    %v2160 = vadd.f32 %v2156, 1e-12
    %v2161 = vadd.f32 %v2157, 1e-12
    %v2162 = vadd.f32 %v2158, 1e-12
    %v2163 = vadd.f32 %v2159, 1e-12
    %v2164 = vrsqrt.pop %v2160
    %v2165 = vrsqrt.pop %v2161
    %v2166 = vrsqrt.pop %v2162
    %v2167 = vrsqrt.pop %v2163
    %v2168 = vmul.f32 %v2136, %v2164
    %v2169 = vmul.f32 %v2137, %v2165
    %v2170 = vmul.f32 %v2138, %v2166
    %v2171 = vmul.f32 %v2139, %v2167
    %v2172 = vld [vmem:[%s6] sm:$0x1]
    %v2174 = vlaneseq
    %v2175 = vshrl.u32 %v2174, 7
    %v2176 = vsub.s32 0, %v2175
    %v2177 = vrot.slane %v2172, %v2176
    %v2179 = vmul.f32 %v2177, %v2168
    %v2180 = vmul.f32 %v2177, %v2169
    %v2181 = vmul.f32 %v2177, %v2170
    %v2182 = vmul.f32 %v2177, %v2171
    %v2183 = vld [vmem:[%s7] sm:$0x1]
    %v2185 = vlaneseq
    %v2186 = vshrl.u32 %v2185, 7
    %v2187 = vsub.s32 0, %v2186
    %v2188 = vrot.slane %v2183, %v2187
    %v2190 = vadd.f32 %v2179, %v2188
    %v2191 = vadd.f32 %v2180, %v2188
    %v2192 = vadd.f32 %v2181, %v2188
    %v2193 = vadd.f32 %v2182, %v2188
    %2194 = vst.msk [vmem:[#allocation11] sm:$0xff] %vm115, %v2190
    %2195 = vst.msk [vmem:[#allocation11 + $0x8] sm:$0xff] %vm115, %v2191
    %2196 = vst.msk [vmem:[#allocation11 + $0x10] sm:$0xff] %vm115, %v2192
    %2197 = vst.msk [vmem:[#allocation11 + $0x18] sm:$0xff] %vm115, %v2193
    // Predicated region
    $region50: #{tpu_custom_call.1} parent=1 // pred_check
      _
    $region51: #{tpu_custom_call.1} parent=1 // pred_check_branch
      %2199 = sbr.rel (0) target = $region53
    $region52: #{tpu_custom_call.1} parent=1 // pred_region
      %s2201 = ssub.s32 512, 512
      %2202 = vsyncadd [#allocation5], %s2201
      %s2203 = sshll.u32 [#allocation11], 4
      %s2204 = int_to_ptr.vmem [resolvable:$true] %s2203
      %2209 = dma.vmem_to_hbm [thread:$0]  %s2204, 512, %s8, [#allocation5], 128, 128, 8
    $region53: #{tpu_custom_call.1} parent=1 // pred_fallthru
      _
    // Predicated region
    $region54: #{tpu_custom_call.1} parent=1 // pred_check
      _
    $region55: #{tpu_custom_call.1} parent=1 // pred_check_branch
      %2211 = sbr.rel (0) target = $region57
    $region56: #{tpu_custom_call.1} parent=1 // pred_region
      %2212 = dma.done [#allocation5], 512
    $region57: #{tpu_custom_call.1} parent=1 // pred_fallthru
      _
    %2213 = vsyncpa [#allocation4], 1
    %2214 = vsyncpa [#allocation7], 1
    %2215 = vsyncpa [#allocation10], 1
    %2216 = vsyncpa [#allocation5], 1

</llo_original>
